<compile_context>
chip_gen: v7x
topology: tpu7x:2x2x1
jax: 0.10.0
libtpu: 0.0.40
codegen_flags: <defaults>
</compile_context>

<pallas_src>
import jax
import jax.numpy as jnp
from jax.experimental import pallas as pl
from jax.experimental.pallas import tpu as pltpu


def _round_up(x, m):
    return ((x + m - 1) // m) * m


_IN_PER_DEG = 9  # x, projK, gather, expand, w1h, w1n, b1, w2, b2


# ----------------------------------------------------------------------------
# Kernel builder (one fused kernel over all degrees)
# ----------------------------------------------------------------------------
def _build_eqff_kernel(num_degrees, d, matmul_dtype):
    def mm(a, b):
        # Activations cast to the MXU dtype here; weights are pre-cast in the
        # wrapper so resident blocks are not re-cast every grid step.
        if matmul_dtype is not None and a.dtype != matmul_dtype:
            a = a.astype(matmul_dtype)
        return jnp.dot(a, b, preferred_element_type=jnp.float32)

    def kernel(*refs):
        h_ref = refs[0]
        hres_ref = refs[1 + num_degrees * _IN_PER_DEG]
        xres_refs = refs[2 + num_degrees * _IN_PER_DEG:]

        h = h_ref[...]                                   # (T, D)
        h_mm = h if matmul_dtype is None else h.astype(matmul_dtype)
        h_acc = jnp.zeros((h.shape[0], d), jnp.float32)

        for l in range(num_degrees):
            base = 1 + l * _IN_PER_DEG
            (x_ref, projk_ref, gather_ref, expand_ref,
             w1h_ref, w1n_ref, b1_ref, w2_ref, b2_ref) = refs[base:base + _IN_PER_DEG]

            x = x_ref[...]                               # (T, D*M), (d,m) flat
            # p[n, e*M+m] = sum_d x[n, d*M+m] * proj[d, e]   via kron(proj, I_M)
            p = mm(x, projk_ref[...])                    # (T, D*M) f32

            # invariant norm over m: (p*p) @ kron(I_D, 1_{Mx1})  (0/1 matrix)
            norm = jnp.sqrt(mm(p * p, gather_ref[...]))  # (T, D) f32

            # Linear(2D->MLP) on concat(h, norm) as two split matmuls + SiLU
            pre = mm(h_mm, w1h_ref[...]) + mm(norm, w1n_ref[...]) + b1_ref[...]
            hid = pre * jax.nn.sigmoid(pre)              # f32 VPU/EUP

            # fused Linear(MLP -> 2D); m1/m2 are lane slices of the output
            out2 = mm(hid, w2_ref[...]) + b2_ref[...]    # (T, 2D) f32
            m1 = out2[:, :d]
            m2 = out2[:, d:]

            h_acc = h_acc + m1

            # broadcast m2 over m: m2 @ kron(I_D, 1_{1xM})  (0/1 matrix)
            m2e = mm(m2, expand_ref[...])                # (T, D*M) f32
            xres_refs[l][...] = (p * m2e).astype(xres_refs[l].dtype)

        hres_ref[...] = h_acc.astype(hres_ref.dtype)

    return kernel


# ----------------------------------------------------------------------------
# VMEM budgeting / tile sizing
# ----------------------------------------------------------------------------
def _default_vmem_limit_bytes():
    cap = 64 * 1024 * 1024
    try:
        info = pltpu.get_tpu_info()
        cap = int(getattr(info, "vmem_capacity_bytes", cap))
    except Exception:
        pass
    return (3 * cap) // 4   # ~96 MiB on v5e/v6e (128 MiB VMEM), ~48 MiB on v7x


def _pick_tile_n(N, d, mults, mlp_dim, io_itemsize, w_itemsize,
                 requested, vmem_limit_bytes):
    align = max(8, 32 // max(int(io_itemsize), 1))        # 8 for f32, 16 for bf16
    dm_sum = sum(d * m for m in mults)
    dm_max = max(d * m for m in mults)
    # Streamed row blocks (in + out), double-buffered by the pipeline.
    stream = 2 * 2 * (d + dm_sum) * io_itemsize
    # f32 per-row temporaries for the widest degree (scratch is reused across
    # the unrolled degree loop).
    temps = 4 * (3 * dm_max + 3 * mlp_dim + 4 * d)
    # Resident weights (worst case: double-buffered if Buffered(1) falls back).
    w_elems = sum((d * m) * (d * m) + 2 * (d * m) * d
                  + 2 * d * mlp_dim + mlp_dim * 2 * d for m in mults)
    b_elems = len(mults) * (mlp_dim + 2 * d)
    w_bytes = 2 * (w_elems * w_itemsize + b_elems * 4)
    budget = max(vmem_limit_bytes - w_bytes - (4 << 20), 1 << 20)
    t = min(int(requested), budget // max(stream + temps, 1))
    # >= 2 grid steps when N allows, so both v7x TensorCores get work.
    t = min(t, _round_up(-(-N // 2), align))
    t = min(t, _round_up(N, align))
    return max(align, (t // align) * align)


# ----------------------------------------------------------------------------
# Forward wrapper
# ----------------------------------------------------------------------------
def equivariant_feed_forward(h, xs, params, *, tile_n=1024,
                             matmul_dtype=jnp.bfloat16, io_dtype=None,
                             vmem_limit_bytes=None, single_buffer_weights=True):
    """h: (b, n, d); xs: list of (b, n, d, m_l) per degree l."""
    assert len(xs) == len(params)
    b, n, d = h.shape
    N = b * n
    num_degrees = len(xs)
    mults = [int(x.shape[-1]) for x in xs]
    mlp_dim = int(params[0]['w1'].shape[1])

    io_dtype = jnp.dtype(h.dtype if io_dtype is None else io_dtype)
    w_dtype = jnp.dtype(jnp.float32 if matmul_dtype is None else matmul_dtype)
    if vmem_limit_bytes is None:
        vmem_limit_bytes = _default_vmem_limit_bytes()

    t = _pick_tile_n(N, d, mults, mlp_dim, io_dtype.itemsize, w_dtype.itemsize,
                     tile_n, vmem_limit_bytes)
    grid = (pl.cdiv(N, t),)

    # Native flattened layouts — pure (free) reshapes, no padding, no HBM
    # transposes.  Ragged last block is handled by Pallas (all ops row-local).
    h2 = h.reshape(N, d).astype(io_dtype)
    xf = [x.reshape(N, d * m).astype(io_dtype) for x, m in zip(xs, mults)]

    row_map = lambda i: (i, 0)
    const_map = lambda i: (0, 0)

    inputs = [h2]
    eye_d = jnp.eye(d, dtype=jnp.float32)
    for x_l, m, p_l in zip(xf, mults, params):
        proj = p_l['proj'].astype(jnp.float32)
        projK = jnp.kron(proj, jnp.eye(m, dtype=jnp.float32)).astype(w_dtype)
        gather = jnp.kron(eye_d, jnp.ones((m, 1), jnp.float32)).astype(w_dtype)
        expand = jnp.kron(eye_d, jnp.ones((1, m), jnp.float32)).astype(w_dtype)
        w1 = p_l['w1'].astype(w_dtype)                         # (2D, MLP)
        inputs += [x_l, projK, gather, expand, w1[:d], w1[d:],
                   p_l['b1'].astype(jnp.float32),              # biases stay f32:
                   p_l['w2'].astype(w_dtype),                  # added to f32 acc,
                   p_l['b2'].astype(jnp.float32)]              # negligible bytes

    def _in_specs(weight_mode):
        def wspec(shape):
            if weight_mode is None:
                return pl.BlockSpec(shape, const_map)
            return pl.BlockSpec(shape, const_map, pipeline_mode=weight_mode)
        specs = [pl.BlockSpec((t, d), row_map)]
        for m in mults:
            dm = d * m
            specs += [
                pl.BlockSpec((t, dm), row_map),     # x_l
                wspec((dm, dm)),                    # kron(proj, I_M)
                wspec((dm, d)),                     # m-sum matrix
                wspec((d, dm)),                     # m-broadcast matrix
                wspec((d, mlp_dim)),                # W1[:D]
                wspec((d, mlp_dim)),                # W1[D:]
                wspec((1, mlp_dim)),                # b1
                wspec((mlp_dim, 2 * d)),            # W2 (fused)
                wspec((1, 2 * d)),                  # b2 (fused)
            ]
        return specs

    out_shape = tuple([jax.ShapeDtypeStruct((N, d), io_dtype)]
                      + [jax.ShapeDtypeStruct((N, d * m), io_dtype) for m in mults])
    out_specs = tuple([pl.BlockSpec((t, d), row_map)]
                      + [pl.BlockSpec((t, d * m), row_map) for m in mults])

    kernel = _build_eqff_kernel(num_degrees, d, matmul_dtype)

    def _call(weight_mode):
        return pl.pallas_call(
            kernel,
            out_shape=out_shape,
            grid=grid,
            in_specs=_in_specs(weight_mode),
            out_specs=out_specs,
            compiler_params=pltpu.CompilerParams(
                dimension_semantics=("parallel",),
                vmem_limit_bytes=int(vmem_limit_bytes)),
        )(*inputs)

    if single_buffer_weights:
        try:
            outs = _call(pl.Buffered(1))
        except Exception:
            # Compiler rejected single-buffered constant blocks; default buffering.
            outs = _call(None)
    else:
        outs = _call(None)

    h_res = outs[0].reshape(b, n, d)
    x_res = [o.reshape(b, n, d, m) for o, m in zip(outs[1:], mults)]
    return h_res, x_res


# ----------------------------------------------------------------------------
# Parameters (deterministic, synthetic)
# ----------------------------------------------------------------------------
def init_params(key, dim, max_degree, mlp_expansion_factor=2.0):
    assert max_degree > 1
    mlp_dim = int(mlp_expansion_factor * dim * 2)
    params = []
    for _ in range(max_degree):
        key, k0, k1, k2, k3, k4 = jax.random.split(key, 6)
        params.append(dict(
            proj=jax.random.normal(k0, (dim, dim), jnp.float32),
            # Linear(2*dim -> mlp_dim), stored as (in, out): y = x @ W + b
            w1=jax.random.normal(k1, (2 * dim, mlp_dim), jnp.float32) / jnp.sqrt(2.0 * dim),
            b1=jax.random.normal(k2, (1, mlp_dim), jnp.float32) * 0.01,
            # Linear(mlp_dim -> 2*dim)
            w2=jax.random.normal(k3, (mlp_dim, 2 * dim), jnp.float32) / jnp.sqrt(float(mlp_dim)),
            b2=jax.random.normal(k4, (1, 2 * dim), jnp.float32) * 0.01,
        ))
    return params


# Pure-JAX reference (mirrors the PyTorch forward) for correctness check.
def reference(h, xs, params):
    d = h.shape[-1]
    h_res = 0.0
    x_res = []
    for x_l, p in zip(xs, params):
        proj_one = jnp.einsum('bndm,de->bnem', x_l, p['proj'])
        norm = jnp.sqrt(jnp.sum(proj_one * proj_one, axis=-1))
        inp = jnp.concatenate([h, norm], axis=-1)
        pre = inp @ p['w1'] + p['b1'][0]
        hid = pre * jax.nn.sigmoid(pre)
        out = hid @ p['w2'] + p['b2'][0]
        m1, m2 = out[..., :d], out[..., d:]
        h_res = h_res + m1
        x_res.append(proj_one * m2[..., None])
    return h_res, x_res


if __name__ == "__main__":
    # n=9 makes N=18 non-divisible by the 16-row tile, exercising the ragged
    # (no-pad) last block path.
    b, n, dim, max_degree = 2, 9, 32, 2
    multiplicities = [2 * l + 1 for l in range(1, max_degree + 1)]  # [3, 5]

    key = jax.random.PRNGKey(0)
    key, kh = jax.random.split(key)
    h = jax.random.normal(kh, (b, n, dim), jnp.float32)
    xs = []
    for m in multiplicities:
        key, kx = jax.random.split(key)
        xs.append(jax.random.normal(kx, (b, n, dim, m), jnp.float32))

    key, kp = jax.random.split(key)
    params = init_params(kp, dim, max_degree)

    h_ref, x_ref = reference(h, xs, params)

    # Exact f32 path (tight check).
    h32, x32 = equivariant_feed_forward(h, xs, params, matmul_dtype=None)
    h32 = jax.block_until_ready(h32)
    x32 = [jax.block_until_ready(xr) for xr in x32]
    assert jnp.allclose(h32, h_ref, atol=2e-4, rtol=2e-4)
    for xr, xrf in zip(x32, x_ref):
        assert xr.shape == xrf.shape
        assert jnp.allclose(xr, xrf, atol=2e-4, rtol=2e-4)

    # Fast path: bf16 MXU operands + bf16 I/O streaming (v6e/v7x default);
    # loose tolerance appropriate for bf16 operands with f32 accumulation.
    hbf, xbf = equivariant_feed_forward(h, xs, params,
                                        matmul_dtype=jnp.bfloat16,
                                        io_dtype=jnp.bfloat16)
    hbf = jax.block_until_ready(hbf)
    xbf = [jax.block_until_ready(xr) for xr in xbf]
    assert jnp.allclose(hbf.astype(jnp.float32), h_ref, atol=1.0, rtol=1e-1)
    for xr, xrf in zip(xbf, x_ref):
        assert xr.shape == xrf.shape
        assert jnp.allclose(xr.astype(jnp.float32), xrf, atol=1.0, rtol=1e-1)

    print("KERNEL_OK")
</pallas_src>

<mosaic_0001>
module attributes {stable_mosaic.version = 11 : i64} {
  func.func @kernel(%arg0: i32, %arg1: memref<16x32xf32, #tpu.memory_space<vmem>>, %arg2: memref<16x96xf32, #tpu.memory_space<vmem>>, %arg3: memref<96x96xf32, #tpu.memory_space<vmem>>, %arg4: memref<96x32xf32, #tpu.memory_space<vmem>>, %arg5: memref<32x96xf32, #tpu.memory_space<vmem>>, %arg6: memref<32x128xf32, #tpu.memory_space<vmem>>, %arg7: memref<32x128xf32, #tpu.memory_space<vmem>>, %arg8: memref<1x128xf32, #tpu.memory_space<vmem>>, %arg9: memref<128x64xf32, #tpu.memory_space<vmem>>, %arg10: memref<1x64xf32, #tpu.memory_space<vmem>>, %arg11: memref<16x160xf32, #tpu.memory_space<vmem>>, %arg12: memref<160x160xf32, #tpu.memory_space<vmem>>, %arg13: memref<160x32xf32, #tpu.memory_space<vmem>>, %arg14: memref<32x160xf32, #tpu.memory_space<vmem>>, %arg15: memref<32x128xf32, #tpu.memory_space<vmem>>, %arg16: memref<32x128xf32, #tpu.memory_space<vmem>>, %arg17: memref<1x128xf32, #tpu.memory_space<vmem>>, %arg18: memref<128x64xf32, #tpu.memory_space<vmem>>, %arg19: memref<1x64xf32, #tpu.memory_space<vmem>>, %arg20: memref<16x32xf32, #tpu.memory_space<vmem>>, %arg21: memref<16x96xf32, #tpu.memory_space<vmem>>, %arg22: memref<16x160xf32, #tpu.memory_space<vmem>>) attributes {dimension_semantics = [#tpu.dimension_semantics<parallel>], iteration_bounds = array<i64: 2>, scalar_prefetch = 0 : i64, scratch_operands = 0 : i64, tpu.core_type = #tpu.core_type<tc>, window_params = [{transform_indices = @transform_0, window_bounds = array<i64: 16, 32>}, {transform_indices = @transform_1, window_bounds = array<i64: 16, 96>}, {pipeline_mode = #tpu.pipeline_mode<synchronous>, transform_indices = @transform_2, window_bounds = array<i64: 96, 96>}, {pipeline_mode = #tpu.pipeline_mode<synchronous>, transform_indices = @transform_3, window_bounds = array<i64: 96, 32>}, {pipeline_mode = #tpu.pipeline_mode<synchronous>, transform_indices = @transform_4, window_bounds = array<i64: 32, 96>}, {pipeline_mode = #tpu.pipeline_mode<synchronous>, transform_indices = @transform_5, window_bounds = array<i64: 32, 128>}, {pipeline_mode = #tpu.pipeline_mode<synchronous>, transform_indices = @transform_6, window_bounds = array<i64: 32, 128>}, {pipeline_mode = #tpu.pipeline_mode<synchronous>, transform_indices = @transform_7, window_bounds = array<i64: 1, 128>}, {pipeline_mode = #tpu.pipeline_mode<synchronous>, transform_indices = @transform_8, window_bounds = array<i64: 128, 64>}, {pipeline_mode = #tpu.pipeline_mode<synchronous>, transform_indices = @transform_9, window_bounds = array<i64: 1, 64>}, {transform_indices = @transform_10, window_bounds = array<i64: 16, 160>}, {pipeline_mode = #tpu.pipeline_mode<synchronous>, transform_indices = @transform_11, window_bounds = array<i64: 160, 160>}, {pipeline_mode = #tpu.pipeline_mode<synchronous>, transform_indices = @transform_12, window_bounds = array<i64: 160, 32>}, {pipeline_mode = #tpu.pipeline_mode<synchronous>, transform_indices = @transform_13, window_bounds = array<i64: 32, 160>}, {pipeline_mode = #tpu.pipeline_mode<synchronous>, transform_indices = @transform_14, window_bounds = array<i64: 32, 128>}, {pipeline_mode = #tpu.pipeline_mode<synchronous>, transform_indices = @transform_15, window_bounds = array<i64: 32, 128>}, {pipeline_mode = #tpu.pipeline_mode<synchronous>, transform_indices = @transform_16, window_bounds = array<i64: 1, 128>}, {pipeline_mode = #tpu.pipeline_mode<synchronous>, transform_indices = @transform_17, window_bounds = array<i64: 128, 64>}, {pipeline_mode = #tpu.pipeline_mode<synchronous>, transform_indices = @transform_18, window_bounds = array<i64: 1, 64>}, {transform_indices = @transform_19, window_bounds = array<i64: 16, 32>}, {transform_indices = @transform_20, window_bounds = array<i64: 16, 96>}, {transform_indices = @transform_21, window_bounds = array<i64: 16, 160>}]} {
    %c0 = arith.constant 0 : index
    %c0_0 = arith.constant 0 : index
    %0 = vector.load %arg1[%c0, %c0_0] : memref<16x32xf32, #tpu.memory_space<vmem>>, vector<16x32xf32>
    %cst = arith.constant 0.000000e+00 : f32
    %1 = vector.broadcast %cst : f32 to vector<16x32xf32>
    %c0_1 = arith.constant 0 : index
    %c0_2 = arith.constant 0 : index
    %2 = vector.load %arg2[%c0_1, %c0_2] : memref<16x96xf32, #tpu.memory_space<vmem>>, vector<16x96xf32>
    %c0_3 = arith.constant 0 : index
    %c0_4 = arith.constant 0 : index
    %3 = vector.load %arg3[%c0_3, %c0_4] : memref<96x96xf32, #tpu.memory_space<vmem>>, vector<96x96xf32>
    %cst_5 = arith.constant dense<0.000000e+00> : vector<16x96xf32>
    %4 = tpu.matmul %2, %3, %cst_5 {dimension_numbers = #tpu.dot_dimension_numbers<[1], [0], [0], [1], [0, 0, 1, 1], [], []>} : vector<16x96xf32>, vector<96x96xf32>, vector<16x96xf32> -> vector<16x96xf32>
    %5 = arith.mulf %4, %4 : vector<16x96xf32>
    %c0_6 = arith.constant 0 : index
    %c0_7 = arith.constant 0 : index
    %6 = vector.load %arg4[%c0_6, %c0_7] : memref<96x32xf32, #tpu.memory_space<vmem>>, vector<96x32xf32>
    %cst_8 = arith.constant dense<0.000000e+00> : vector<16x32xf32>
    %7 = tpu.matmul %5, %6, %cst_8 {dimension_numbers = #tpu.dot_dimension_numbers<[1], [0], [0], [1], [0, 0, 1, 1], [], []>} : vector<16x96xf32>, vector<96x32xf32>, vector<16x32xf32> -> vector<16x32xf32>
    %8 = math.sqrt %7 : vector<16x32xf32>
    %c0_9 = arith.constant 0 : index
    %c0_10 = arith.constant 0 : index
    %9 = vector.load %arg6[%c0_9, %c0_10] : memref<32x128xf32, #tpu.memory_space<vmem>>, vector<32x128xf32>
    %cst_11 = arith.constant dense<0.000000e+00> : vector<16x128xf32>
    %10 = tpu.matmul %0, %9, %cst_11 {dimension_numbers = #tpu.dot_dimension_numbers<[1], [0], [0], [1], [0, 0, 1, 1], [], []>} : vector<16x32xf32>, vector<32x128xf32>, vector<16x128xf32> -> vector<16x128xf32>
    %c0_12 = arith.constant 0 : index
    %c0_13 = arith.constant 0 : index
    %11 = vector.load %arg7[%c0_12, %c0_13] : memref<32x128xf32, #tpu.memory_space<vmem>>, vector<32x128xf32>
    %cst_14 = arith.constant dense<0.000000e+00> : vector<16x128xf32>
    %12 = tpu.matmul %8, %11, %cst_14 {dimension_numbers = #tpu.dot_dimension_numbers<[1], [0], [0], [1], [0, 0, 1, 1], [], []>} : vector<16x32xf32>, vector<32x128xf32>, vector<16x128xf32> -> vector<16x128xf32>
    %13 = arith.addf %10, %12 : vector<16x128xf32>
    %c0_15 = arith.constant 0 : index
    %c0_16 = arith.constant 0 : index
    %14 = vector.load %arg8[%c0_15, %c0_16] : memref<1x128xf32, #tpu.memory_space<vmem>>, vector<1x128xf32>
    %15 = vector.broadcast %14 : vector<1x128xf32> to vector<16x128xf32>
    %16 = arith.addf %13, %15 : vector<16x128xf32>
    %17 = arith.negf %16 : vector<16x128xf32>
    %18 = math.exp %17 : vector<16x128xf32>
    %cst_17 = arith.constant 1.000000e+00 : f32
    %19 = vector.broadcast %cst_17 : f32 to vector<16x128xf32>
    %20 = arith.addf %19, %18 : vector<16x128xf32>
    %21 = arith.divf %19, %20 : vector<16x128xf32>
    %22 = arith.mulf %16, %21 : vector<16x128xf32>
    %c0_18 = arith.constant 0 : index
    %c0_19 = arith.constant 0 : index
    %23 = vector.load %arg9[%c0_18, %c0_19] : memref<128x64xf32, #tpu.memory_space<vmem>>, vector<128x64xf32>
    %cst_20 = arith.constant dense<0.000000e+00> : vector<16x64xf32>
    %24 = tpu.matmul %22, %23, %cst_20 {dimension_numbers = #tpu.dot_dimension_numbers<[1], [0], [0], [1], [0, 0, 1, 1], [], []>} : vector<16x128xf32>, vector<128x64xf32>, vector<16x64xf32> -> vector<16x64xf32>
    %c0_21 = arith.constant 0 : index
    %c0_22 = arith.constant 0 : index
    %25 = vector.load %arg10[%c0_21, %c0_22] : memref<1x64xf32, #tpu.memory_space<vmem>>, vector<1x64xf32>
    %26 = vector.broadcast %25 : vector<1x64xf32> to vector<16x64xf32>
    %27 = arith.addf %24, %26 : vector<16x64xf32>
    %28 = vector.extract_strided_slice %27 {offsets = [0, 0], sizes = [16, 32], strides = [1, 1]} : vector<16x64xf32> to vector<16x32xf32>
    %29 = vector.extract_strided_slice %27 {offsets = [0, 32], sizes = [16, 32], strides = [1, 1]} : vector<16x64xf32> to vector<16x32xf32>
    %30 = arith.addf %1, %28 : vector<16x32xf32>
    %c0_23 = arith.constant 0 : index
    %c0_24 = arith.constant 0 : index
    %31 = vector.load %arg5[%c0_23, %c0_24] : memref<32x96xf32, #tpu.memory_space<vmem>>, vector<32x96xf32>
    %cst_25 = arith.constant dense<0.000000e+00> : vector<16x96xf32>
    %32 = tpu.matmul %29, %31, %cst_25 {dimension_numbers = #tpu.dot_dimension_numbers<[1], [0], [0], [1], [0, 0, 1, 1], [], []>} : vector<16x32xf32>, vector<32x96xf32>, vector<16x96xf32> -> vector<16x96xf32>
    %33 = arith.mulf %4, %32 : vector<16x96xf32>
    %c0_26 = arith.constant 0 : index
    %c0_27 = arith.constant 0 : index
    %34 = vector.load %arg21[%c0_26, %c0_27] : memref<16x96xf32, #tpu.memory_space<vmem>>, vector<16x96xf32>
    tpu.vector_store %arg21[%c0_26, %c0_27], %33 {strides = array<i32>} : memref<16x96xf32, #tpu.memory_space<vmem>>, vector<16x96xf32>,
    %c0_28 = arith.constant 0 : index
    %c0_29 = arith.constant 0 : index
    %35 = vector.load %arg11[%c0_28, %c0_29] : memref<16x160xf32, #tpu.memory_space<vmem>>, vector<16x160xf32>
    %c0_30 = arith.constant 0 : index
    %c0_31 = arith.constant 0 : index
    %36 = vector.load %arg12[%c0_30, %c0_31] : memref<160x160xf32, #tpu.memory_space<vmem>>, vector<160x160xf32>
    %cst_32 = arith.constant dense<0.000000e+00> : vector<16x160xf32>
    %37 = tpu.matmul %35, %36, %cst_32 {dimension_numbers = #tpu.dot_dimension_numbers<[1], [0], [0], [1], [0, 0, 1, 1], [], []>} : vector<16x160xf32>, vector<160x160xf32>, vector<16x160xf32> -> vector<16x160xf32>
    %38 = arith.mulf %37, %37 : vector<16x160xf32>
    %c0_33 = arith.constant 0 : index
    %c0_34 = arith.constant 0 : index
    %39 = vector.load %arg13[%c0_33, %c0_34] : memref<160x32xf32, #tpu.memory_space<vmem>>, vector<160x32xf32>
    %cst_35 = arith.constant dense<0.000000e+00> : vector<16x32xf32>
    %40 = tpu.matmul %38, %39, %cst_35 {dimension_numbers = #tpu.dot_dimension_numbers<[1], [0], [0], [1], [0, 0, 1, 1], [], []>} : vector<16x160xf32>, vector<160x32xf32>, vector<16x32xf32> -> vector<16x32xf32>
    %41 = math.sqrt %40 : vector<16x32xf32>
    %c0_36 = arith.constant 0 : index
    %c0_37 = arith.constant 0 : index
    %42 = vector.load %arg15[%c0_36, %c0_37] : memref<32x128xf32, #tpu.memory_space<vmem>>, vector<32x128xf32>
    %cst_38 = arith.constant dense<0.000000e+00> : vector<16x128xf32>
    %43 = tpu.matmul %0, %42, %cst_38 {dimension_numbers = #tpu.dot_dimension_numbers<[1], [0], [0], [1], [0, 0, 1, 1], [], []>} : vector<16x32xf32>, vector<32x128xf32>, vector<16x128xf32> -> vector<16x128xf32>
    %c0_39 = arith.constant 0 : index
    %c0_40 = arith.constant 0 : index
    %44 = vector.load %arg16[%c0_39, %c0_40] : memref<32x128xf32, #tpu.memory_space<vmem>>, vector<32x128xf32>
    %cst_41 = arith.constant dense<0.000000e+00> : vector<16x128xf32>
    %45 = tpu.matmul %41, %44, %cst_41 {dimension_numbers = #tpu.dot_dimension_numbers<[1], [0], [0], [1], [0, 0, 1, 1], [], []>} : vector<16x32xf32>, vector<32x128xf32>, vector<16x128xf32> -> vector<16x128xf32>
    %46 = arith.addf %43, %45 : vector<16x128xf32>
    %c0_42 = arith.constant 0 : index
    %c0_43 = arith.constant 0 : index
    %47 = vector.load %arg17[%c0_42, %c0_43] : memref<1x128xf32, #tpu.memory_space<vmem>>, vector<1x128xf32>
    %48 = vector.broadcast %47 : vector<1x128xf32> to vector<16x128xf32>
    %49 = arith.addf %46, %48 : vector<16x128xf32>
    %50 = arith.negf %49 : vector<16x128xf32>
    %51 = math.exp %50 : vector<16x128xf32>
    %cst_44 = arith.constant 1.000000e+00 : f32
    %52 = vector.broadcast %cst_44 : f32 to vector<16x128xf32>
    %53 = arith.addf %52, %51 : vector<16x128xf32>
    %54 = arith.divf %52, %53 : vector<16x128xf32>
    %55 = arith.mulf %49, %54 : vector<16x128xf32>
    %c0_45 = arith.constant 0 : index
    %c0_46 = arith.constant 0 : index
    %56 = vector.load %arg18[%c0_45, %c0_46] : memref<128x64xf32, #tpu.memory_space<vmem>>, vector<128x64xf32>
    %cst_47 = arith.constant dense<0.000000e+00> : vector<16x64xf32>
    %57 = tpu.matmul %55, %56, %cst_47 {dimension_numbers = #tpu.dot_dimension_numbers<[1], [0], [0], [1], [0, 0, 1, 1], [], []>} : vector<16x128xf32>, vector<128x64xf32>, vector<16x64xf32> -> vector<16x64xf32>
    %c0_48 = arith.constant 0 : index
    %c0_49 = arith.constant 0 : index
    %58 = vector.load %arg19[%c0_48, %c0_49] : memref<1x64xf32, #tpu.memory_space<vmem>>, vector<1x64xf32>
    %59 = vector.broadcast %58 : vector<1x64xf32> to vector<16x64xf32>
    %60 = arith.addf %57, %59 : vector<16x64xf32>
    %61 = vector.extract_strided_slice %60 {offsets = [0, 0], sizes = [16, 32], strides = [1, 1]} : vector<16x64xf32> to vector<16x32xf32>
    %62 = vector.extract_strided_slice %60 {offsets = [0, 32], sizes = [16, 32], strides = [1, 1]} : vector<16x64xf32> to vector<16x32xf32>
    %63 = arith.addf %30, %61 : vector<16x32xf32>
    %c0_50 = arith.constant 0 : index
    %c0_51 = arith.constant 0 : index
    %64 = vector.load %arg14[%c0_50, %c0_51] : memref<32x160xf32, #tpu.memory_space<vmem>>, vector<32x160xf32>
    %cst_52 = arith.constant dense<0.000000e+00> : vector<16x160xf32>
    %65 = tpu.matmul %62, %64, %cst_52 {dimension_numbers = #tpu.dot_dimension_numbers<[1], [0], [0], [1], [0, 0, 1, 1], [], []>} : vector<16x32xf32>, vector<32x160xf32>, vector<16x160xf32> -> vector<16x160xf32>
    %66 = arith.mulf %37, %65 : vector<16x160xf32>
    %c0_53 = arith.constant 0 : index
    %c0_54 = arith.constant 0 : index
    %67 = vector.load %arg22[%c0_53, %c0_54] : memref<16x160xf32, #tpu.memory_space<vmem>>, vector<16x160xf32>
    tpu.vector_store %arg22[%c0_53, %c0_54], %66 {strides = array<i32>} : memref<16x160xf32, #tpu.memory_space<vmem>>, vector<16x160xf32>,
    %c0_55 = arith.constant 0 : index
    %c0_56 = arith.constant 0 : index
    %68 = vector.load %arg20[%c0_55, %c0_56] : memref<16x32xf32, #tpu.memory_space<vmem>>, vector<16x32xf32>
    tpu.vector_store %arg20[%c0_55, %c0_56], %63 {strides = array<i32>} : memref<16x32xf32, #tpu.memory_space<vmem>>, vector<16x32xf32>,
    return
  }
  func.func @transform_0(%arg0: i32) -> (i32, i32) {
    %c0_i32 = arith.constant 0 : i32
    %c0_i32_0 = arith.constant 0 : i32
    return %arg0, %c0_i32 : i32, i32
  }
  func.func @transform_1(%arg0: i32) -> (i32, i32) {
    %c0_i32 = arith.constant 0 : i32
    %c0_i32_0 = arith.constant 0 : i32
    return %arg0, %c0_i32 : i32, i32
  }
  func.func @transform_2(%arg0: i32) -> (i32, i32) {
    %c0_i32 = arith.constant 0 : i32
    %c0_i32_0 = arith.constant 0 : i32
    %c0_i32_1 = arith.constant 0 : i32
    return %c0_i32, %c0_i32_0 : i32, i32
  }
  func.func @transform_3(%arg0: i32) -> (i32, i32) {
    %c0_i32 = arith.constant 0 : i32
    %c0_i32_0 = arith.constant 0 : i32
    %c0_i32_1 = arith.constant 0 : i32
    return %c0_i32, %c0_i32_0 : i32, i32
  }
  func.func @transform_4(%arg0: i32) -> (i32, i32) {
    %c0_i32 = arith.constant 0 : i32
    %c0_i32_0 = arith.constant 0 : i32
    %c0_i32_1 = arith.constant 0 : i32
    return %c0_i32, %c0_i32_0 : i32, i32
  }
  func.func @transform_5(%arg0: i32) -> (i32, i32) {
    %c0_i32 = arith.constant 0 : i32
    %c0_i32_0 = arith.constant 0 : i32
    %c0_i32_1 = arith.constant 0 : i32
    return %c0_i32, %c0_i32_0 : i32, i32
  }
  func.func @transform_6(%arg0: i32) -> (i32, i32) {
    %c0_i32 = arith.constant 0 : i32
    %c0_i32_0 = arith.constant 0 : i32
    %c0_i32_1 = arith.constant 0 : i32
    return %c0_i32, %c0_i32_0 : i32, i32
  }
  func.func @transform_7(%arg0: i32) -> (i32, i32) {
    %c0_i32 = arith.constant 0 : i32
    %c0_i32_0 = arith.constant 0 : i32
    %c0_i32_1 = arith.constant 0 : i32
    return %c0_i32, %c0_i32_0 : i32, i32
  }
  func.func @transform_8(%arg0: i32) -> (i32, i32) {
    %c0_i32 = arith.constant 0 : i32
    %c0_i32_0 = arith.constant 0 : i32
    %c0_i32_1 = arith.constant 0 : i32
    return %c0_i32, %c0_i32_0 : i32, i32
  }
  func.func @transform_9(%arg0: i32) -> (i32, i32) {
    %c0_i32 = arith.constant 0 : i32
    %c0_i32_0 = arith.constant 0 : i32
    %c0_i32_1 = arith.constant 0 : i32
    return %c0_i32, %c0_i32_0 : i32, i32
  }
  func.func @transform_10(%arg0: i32) -> (i32, i32) {
    %c0_i32 = arith.constant 0 : i32
    %c0_i32_0 = arith.constant 0 : i32
    return %arg0, %c0_i32 : i32, i32
  }
  func.func @transform_11(%arg0: i32) -> (i32, i32) {
    %c0_i32 = arith.constant 0 : i32
    %c0_i32_0 = arith.constant 0 : i32
    %c0_i32_1 = arith.constant 0 : i32
    return %c0_i32, %c0_i32_0 : i32, i32
  }
  func.func @transform_12(%arg0: i32) -> (i32, i32) {
    %c0_i32 = arith.constant 0 : i32
    %c0_i32_0 = arith.constant 0 : i32
    %c0_i32_1 = arith.constant 0 : i32
    return %c0_i32, %c0_i32_0 : i32, i32
  }
  func.func @transform_13(%arg0: i32) -> (i32, i32) {
    %c0_i32 = arith.constant 0 : i32
    %c0_i32_0 = arith.constant 0 : i32
    %c0_i32_1 = arith.constant 0 : i32
    return %c0_i32, %c0_i32_0 : i32, i32
  }
  func.func @transform_14(%arg0: i32) -> (i32, i32) {
    %c0_i32 = arith.constant 0 : i32
    %c0_i32_0 = arith.constant 0 : i32
    %c0_i32_1 = arith.constant 0 : i32
    return %c0_i32, %c0_i32_0 : i32, i32
  }
  func.func @transform_15(%arg0: i32) -> (i32, i32) {
    %c0_i32 = arith.constant 0 : i32
    %c0_i32_0 = arith.constant 0 : i32
    %c0_i32_1 = arith.constant 0 : i32
    return %c0_i32, %c0_i32_0 : i32, i32
  }
  func.func @transform_16(%arg0: i32) -> (i32, i32) {
    %c0_i32 = arith.constant 0 : i32
    %c0_i32_0 = arith.constant 0 : i32
    %c0_i32_1 = arith.constant 0 : i32
    return %c0_i32, %c0_i32_0 : i32, i32
  }
  func.func @transform_17(%arg0: i32) -> (i32, i32) {
    %c0_i32 = arith.constant 0 : i32
    %c0_i32_0 = arith.constant 0 : i32
    %c0_i32_1 = arith.constant 0 : i32
    return %c0_i32, %c0_i32_0 : i32, i32
  }
  func.func @transform_18(%arg0: i32) -> (i32, i32) {
    %c0_i32 = arith.constant 0 : i32
    %c0_i32_0 = arith.constant 0 : i32
    %c0_i32_1 = arith.constant 0 : i32
    return %c0_i32, %c0_i32_0 : i32, i32
  }
  func.func @transform_19(%arg0: i32) -> (i32, i32) {
    %c0_i32 = arith.constant 0 : i32
    %c0_i32_0 = arith.constant 0 : i32
    return %arg0, %c0_i32 : i32, i32
  }
  func.func @transform_20(%arg0: i32) -> (i32, i32) {
    %c0_i32 = arith.constant 0 : i32
    %c0_i32_0 = arith.constant 0 : i32
    return %arg0, %c0_i32 : i32, i32
  }
  func.func @transform_21(%arg0: i32) -> (i32, i32) {
    %c0_i32 = arith.constant 0 : i32
    %c0_i32_0 = arith.constant 0 : i32
    return %arg0, %c0_i32 : i32, i32
  }
}

module attributes {stable_mosaic.version = 11 : i64} {
  func.func @kernel(%arg0: i32, %arg1: memref<16x32xf32, #tpu.memory_space<vmem>>, %arg2: memref<16x96xf32, #tpu.memory_space<vmem>>, %arg3: memref<96x96xf32, #tpu.memory_space<vmem>>, %arg4: memref<96x32xf32, #tpu.memory_space<vmem>>, %arg5: memref<32x96xf32, #tpu.memory_space<vmem>>, %arg6: memref<32x128xf32, #tpu.memory_space<vmem>>, %arg7: memref<32x128xf32, #tpu.memory_space<vmem>>, %arg8: memref<1x128xf32, #tpu.memory_space<vmem>>, %arg9: memref<128x64xf32, #tpu.memory_space<vmem>>, %arg10: memref<1x64xf32, #tpu.memory_space<vmem>>, %arg11: memref<16x160xf32, #tpu.memory_space<vmem>>, %arg12: memref<160x160xf32, #tpu.memory_space<vmem>>, %arg13: memref<160x32xf32, #tpu.memory_space<vmem>>, %arg14: memref<32x160xf32, #tpu.memory_space<vmem>>, %arg15: memref<32x128xf32, #tpu.memory_space<vmem>>, %arg16: memref<32x128xf32, #tpu.memory_space<vmem>>, %arg17: memref<1x128xf32, #tpu.memory_space<vmem>>, %arg18: memref<128x64xf32, #tpu.memory_space<vmem>>, %arg19: memref<1x64xf32, #tpu.memory_space<vmem>>, %arg20: memref<16x32xf32, #tpu.memory_space<vmem>>, %arg21: memref<16x96xf32, #tpu.memory_space<vmem>>, %arg22: memref<16x160xf32, #tpu.memory_space<vmem>>) attributes {dimension_semantics = [#tpu.dimension_semantics<parallel>], iteration_bounds = array<i64: 2>, scalar_prefetch = 0 : i64, scratch_operands = 0 : i64, tpu.core_type = #tpu.core_type<tc>, window_params = [{transform_indices = @transform_0, window_bounds = array<i64: 16, 32>}, {transform_indices = @transform_1, window_bounds = array<i64: 16, 96>}, {pipeline_mode = #tpu.pipeline_mode<synchronous>, transform_indices = @transform_2, window_bounds = array<i64: 96, 96>}, {pipeline_mode = #tpu.pipeline_mode<synchronous>, transform_indices = @transform_3, window_bounds = array<i64: 96, 32>}, {pipeline_mode = #tpu.pipeline_mode<synchronous>, transform_indices = @transform_4, window_bounds = array<i64: 32, 96>}, {pipeline_mode = #tpu.pipeline_mode<synchronous>, transform_indices = @transform_5, window_bounds = array<i64: 32, 128>}, {pipeline_mode = #tpu.pipeline_mode<synchronous>, transform_indices = @transform_6, window_bounds = array<i64: 32, 128>}, {pipeline_mode = #tpu.pipeline_mode<synchronous>, transform_indices = @transform_7, window_bounds = array<i64: 1, 128>}, {pipeline_mode = #tpu.pipeline_mode<synchronous>, transform_indices = @transform_8, window_bounds = array<i64: 128, 64>}, {pipeline_mode = #tpu.pipeline_mode<synchronous>, transform_indices = @transform_9, window_bounds = array<i64: 1, 64>}, {transform_indices = @transform_10, window_bounds = array<i64: 16, 160>}, {pipeline_mode = #tpu.pipeline_mode<synchronous>, transform_indices = @transform_11, window_bounds = array<i64: 160, 160>}, {pipeline_mode = #tpu.pipeline_mode<synchronous>, transform_indices = @transform_12, window_bounds = array<i64: 160, 32>}, {pipeline_mode = #tpu.pipeline_mode<synchronous>, transform_indices = @transform_13, window_bounds = array<i64: 32, 160>}, {pipeline_mode = #tpu.pipeline_mode<synchronous>, transform_indices = @transform_14, window_bounds = array<i64: 32, 128>}, {pipeline_mode = #tpu.pipeline_mode<synchronous>, transform_indices = @transform_15, window_bounds = array<i64: 32, 128>}, {pipeline_mode = #tpu.pipeline_mode<synchronous>, transform_indices = @transform_16, window_bounds = array<i64: 1, 128>}, {pipeline_mode = #tpu.pipeline_mode<synchronous>, transform_indices = @transform_17, window_bounds = array<i64: 128, 64>}, {pipeline_mode = #tpu.pipeline_mode<synchronous>, transform_indices = @transform_18, window_bounds = array<i64: 1, 64>}, {transform_indices = @transform_19, window_bounds = array<i64: 16, 32>}, {transform_indices = @transform_20, window_bounds = array<i64: 16, 96>}, {transform_indices = @transform_21, window_bounds = array<i64: 16, 160>}]} {
    %c0 = arith.constant 0 : index
    %c0_0 = arith.constant 0 : index
    %0 = vector.load %arg1[%c0, %c0_0] : memref<16x32xf32, #tpu.memory_space<vmem>>, vector<16x32xf32>
    %cst = arith.constant 0.000000e+00 : f32
    %1 = vector.broadcast %cst : f32 to vector<16x32xf32>
    %c0_1 = arith.constant 0 : index
    %c0_2 = arith.constant 0 : index
    %2 = vector.load %arg2[%c0_1, %c0_2] : memref<16x96xf32, #tpu.memory_space<vmem>>, vector<16x96xf32>
    %c0_3 = arith.constant 0 : index
    %c0_4 = arith.constant 0 : index
    %3 = vector.load %arg3[%c0_3, %c0_4] : memref<96x96xf32, #tpu.memory_space<vmem>>, vector<96x96xf32>
    %cst_5 = arith.constant dense<0.000000e+00> : vector<16x96xf32>
    %4 = tpu.matmul %2, %3, %cst_5 {dimension_numbers = #tpu.dot_dimension_numbers<[1], [0], [0], [1], [0, 0, 1, 1], [], []>} : vector<16x96xf32>, vector<96x96xf32>, vector<16x96xf32> -> vector<16x96xf32>
    %5 = arith.mulf %4, %4 : vector<16x96xf32>
    %c0_6 = arith.constant 0 : index
    %c0_7 = arith.constant 0 : index
    %6 = vector.load %arg4[%c0_6, %c0_7] : memref<96x32xf32, #tpu.memory_space<vmem>>, vector<96x32xf32>
    %cst_8 = arith.constant dense<0.000000e+00> : vector<16x32xf32>
    %7 = tpu.matmul %5, %6, %cst_8 {dimension_numbers = #tpu.dot_dimension_numbers<[1], [0], [0], [1], [0, 0, 1, 1], [], []>} : vector<16x96xf32>, vector<96x32xf32>, vector<16x32xf32> -> vector<16x32xf32>
    %8 = math.sqrt %7 : vector<16x32xf32>
    %c0_9 = arith.constant 0 : index
    %c0_10 = arith.constant 0 : index
    %9 = vector.load %arg6[%c0_9, %c0_10] : memref<32x128xf32, #tpu.memory_space<vmem>>, vector<32x128xf32>
    %cst_11 = arith.constant dense<0.000000e+00> : vector<16x128xf32>
    %10 = tpu.matmul %0, %9, %cst_11 {dimension_numbers = #tpu.dot_dimension_numbers<[1], [0], [0], [1], [0, 0, 1, 1], [], []>} : vector<16x32xf32>, vector<32x128xf32>, vector<16x128xf32> -> vector<16x128xf32>
    %c0_12 = arith.constant 0 : index
    %c0_13 = arith.constant 0 : index
    %11 = vector.load %arg7[%c0_12, %c0_13] : memref<32x128xf32, #tpu.memory_space<vmem>>, vector<32x128xf32>
    %cst_14 = arith.constant dense<0.000000e+00> : vector<16x128xf32>
    %12 = tpu.matmul %8, %11, %cst_14 {dimension_numbers = #tpu.dot_dimension_numbers<[1], [0], [0], [1], [0, 0, 1, 1], [], []>} : vector<16x32xf32>, vector<32x128xf32>, vector<16x128xf32> -> vector<16x128xf32>
    %13 = arith.addf %10, %12 : vector<16x128xf32>
    %c0_15 = arith.constant 0 : index
    %c0_16 = arith.constant 0 : index
    %14 = vector.load %arg8[%c0_15, %c0_16] : memref<1x128xf32, #tpu.memory_space<vmem>>, vector<1x128xf32>
    %15 = vector.broadcast %14 : vector<1x128xf32> to vector<16x128xf32>
    %16 = arith.addf %13, %15 : vector<16x128xf32>
    %17 = arith.negf %16 : vector<16x128xf32>
    %18 = math.exp %17 : vector<16x128xf32>
    %cst_17 = arith.constant 1.000000e+00 : f32
    %19 = vector.broadcast %cst_17 : f32 to vector<16x128xf32>
    %20 = arith.addf %19, %18 : vector<16x128xf32>
    %21 = arith.divf %19, %20 : vector<16x128xf32>
    %22 = arith.mulf %16, %21 : vector<16x128xf32>
    %c0_18 = arith.constant 0 : index
    %c0_19 = arith.constant 0 : index
    %23 = vector.load %arg9[%c0_18, %c0_19] : memref<128x64xf32, #tpu.memory_space<vmem>>, vector<128x64xf32>
    %cst_20 = arith.constant dense<0.000000e+00> : vector<16x64xf32>
    %24 = tpu.matmul %22, %23, %cst_20 {dimension_numbers = #tpu.dot_dimension_numbers<[1], [0], [0], [1], [0, 0, 1, 1], [], []>} : vector<16x128xf32>, vector<128x64xf32>, vector<16x64xf32> -> vector<16x64xf32>
    %c0_21 = arith.constant 0 : index
    %c0_22 = arith.constant 0 : index
    %25 = vector.load %arg10[%c0_21, %c0_22] : memref<1x64xf32, #tpu.memory_space<vmem>>, vector<1x64xf32>
    %26 = vector.broadcast %25 : vector<1x64xf32> to vector<16x64xf32>
    %27 = arith.addf %24, %26 : vector<16x64xf32>
    %28 = vector.extract_strided_slice %27 {offsets = [0, 0], sizes = [16, 32], strides = [1, 1]} : vector<16x64xf32> to vector<16x32xf32>
    %29 = vector.extract_strided_slice %27 {offsets = [0, 32], sizes = [16, 32], strides = [1, 1]} : vector<16x64xf32> to vector<16x32xf32>
    %30 = arith.addf %1, %28 : vector<16x32xf32>
    %c0_23 = arith.constant 0 : index
    %c0_24 = arith.constant 0 : index
    %31 = vector.load %arg5[%c0_23, %c0_24] : memref<32x96xf32, #tpu.memory_space<vmem>>, vector<32x96xf32>
    %cst_25 = arith.constant dense<0.000000e+00> : vector<16x96xf32>
    %32 = tpu.matmul %29, %31, %cst_25 {dimension_numbers = #tpu.dot_dimension_numbers<[1], [0], [0], [1], [0, 0, 1, 1], [], []>} : vector<16x32xf32>, vector<32x96xf32>, vector<16x96xf32> -> vector<16x96xf32>
    %33 = arith.mulf %4, %32 : vector<16x96xf32>
    %c0_26 = arith.constant 0 : index
    %c0_27 = arith.constant 0 : index
    %34 = vector.load %arg21[%c0_26, %c0_27] : memref<16x96xf32, #tpu.memory_space<vmem>>, vector<16x96xf32>
    tpu.vector_store %arg21[%c0_26, %c0_27], %33 {strides = array<i32>} : memref<16x96xf32, #tpu.memory_space<vmem>>, vector<16x96xf32>,
    %c0_28 = arith.constant 0 : index
    %c0_29 = arith.constant 0 : index
    %35 = vector.load %arg11[%c0_28, %c0_29] : memref<16x160xf32, #tpu.memory_space<vmem>>, vector<16x160xf32>
    %c0_30 = arith.constant 0 : index
    %c0_31 = arith.constant 0 : index
    %36 = vector.load %arg12[%c0_30, %c0_31] : memref<160x160xf32, #tpu.memory_space<vmem>>, vector<160x160xf32>
    %cst_32 = arith.constant dense<0.000000e+00> : vector<16x160xf32>
    %37 = tpu.matmul %35, %36, %cst_32 {dimension_numbers = #tpu.dot_dimension_numbers<[1], [0], [0], [1], [0, 0, 1, 1], [], []>} : vector<16x160xf32>, vector<160x160xf32>, vector<16x160xf32> -> vector<16x160xf32>
    %38 = arith.mulf %37, %37 : vector<16x160xf32>
    %c0_33 = arith.constant 0 : index
    %c0_34 = arith.constant 0 : index
    %39 = vector.load %arg13[%c0_33, %c0_34] : memref<160x32xf32, #tpu.memory_space<vmem>>, vector<160x32xf32>
    %cst_35 = arith.constant dense<0.000000e+00> : vector<16x32xf32>
    %40 = tpu.matmul %38, %39, %cst_35 {dimension_numbers = #tpu.dot_dimension_numbers<[1], [0], [0], [1], [0, 0, 1, 1], [], []>} : vector<16x160xf32>, vector<160x32xf32>, vector<16x32xf32> -> vector<16x32xf32>
    %41 = math.sqrt %40 : vector<16x32xf32>
    %c0_36 = arith.constant 0 : index
    %c0_37 = arith.constant 0 : index
    %42 = vector.load %arg15[%c0_36, %c0_37] : memref<32x128xf32, #tpu.memory_space<vmem>>, vector<32x128xf32>
    %cst_38 = arith.constant dense<0.000000e+00> : vector<16x128xf32>
    %43 = tpu.matmul %0, %42, %cst_38 {dimension_numbers = #tpu.dot_dimension_numbers<[1], [0], [0], [1], [0, 0, 1, 1], [], []>} : vector<16x32xf32>, vector<32x128xf32>, vector<16x128xf32> -> vector<16x128xf32>
    %c0_39 = arith.constant 0 : index
    %c0_40 = arith.constant 0 : index
    %44 = vector.load %arg16[%c0_39, %c0_40] : memref<32x128xf32, #tpu.memory_space<vmem>>, vector<32x128xf32>
    %cst_41 = arith.constant dense<0.000000e+00> : vector<16x128xf32>
    %45 = tpu.matmul %41, %44, %cst_41 {dimension_numbers = #tpu.dot_dimension_numbers<[1], [0], [0], [1], [0, 0, 1, 1], [], []>} : vector<16x32xf32>, vector<32x128xf32>, vector<16x128xf32> -> vector<16x128xf32>
    %46 = arith.addf %43, %45 : vector<16x128xf32>
    %c0_42 = arith.constant 0 : index
    %c0_43 = arith.constant 0 : index
    %47 = vector.load %arg17[%c0_42, %c0_43] : memref<1x128xf32, #tpu.memory_space<vmem>>, vector<1x128xf32>
    %48 = vector.broadcast %47 : vector<1x128xf32> to vector<16x128xf32>
    %49 = arith.addf %46, %48 : vector<16x128xf32>
    %50 = arith.negf %49 : vector<16x128xf32>
    %51 = math.exp %50 : vector<16x128xf32>
    %cst_44 = arith.constant 1.000000e+00 : f32
    %52 = vector.broadcast %cst_44 : f32 to vector<16x128xf32>
    %53 = arith.addf %52, %51 : vector<16x128xf32>
    %54 = arith.divf %52, %53 : vector<16x128xf32>
    %55 = arith.mulf %49, %54 : vector<16x128xf32>
    %c0_45 = arith.constant 0 : index
    %c0_46 = arith.constant 0 : index
    %56 = vector.load %arg18[%c0_45, %c0_46] : memref<128x64xf32, #tpu.memory_space<vmem>>, vector<128x64xf32>
    %cst_47 = arith.constant dense<0.000000e+00> : vector<16x64xf32>
    %57 = tpu.matmul %55, %56, %cst_47 {dimension_numbers = #tpu.dot_dimension_numbers<[1], [0], [0], [1], [0, 0, 1, 1], [], []>} : vector<16x128xf32>, vector<128x64xf32>, vector<16x64xf32> -> vector<16x64xf32>
    %c0_48 = arith.constant 0 : index
    %c0_49 = arith.constant 0 : index
    %58 = vector.load %arg19[%c0_48, %c0_49] : memref<1x64xf32, #tpu.memory_space<vmem>>, vector<1x64xf32>
    %59 = vector.broadcast %58 : vector<1x64xf32> to vector<16x64xf32>
    %60 = arith.addf %57, %59 : vector<16x64xf32>
    %61 = vector.extract_strided_slice %60 {offsets = [0, 0], sizes = [16, 32], strides = [1, 1]} : vector<16x64xf32> to vector<16x32xf32>
    %62 = vector.extract_strided_slice %60 {offsets = [0, 32], sizes = [16, 32], strides = [1, 1]} : vector<16x64xf32> to vector<16x32xf32>
    %63 = arith.addf %30, %61 : vector<16x32xf32>
    %c0_50 = arith.constant 0 : index
    %c0_51 = arith.constant 0 : index
    %64 = vector.load %arg14[%c0_50, %c0_51] : memref<32x160xf32, #tpu.memory_space<vmem>>, vector<32x160xf32>
    %cst_52 = arith.constant dense<0.000000e+00> : vector<16x160xf32>
    %65 = tpu.matmul %62, %64, %cst_52 {dimension_numbers = #tpu.dot_dimension_numbers<[1], [0], [0], [1], [0, 0, 1, 1], [], []>} : vector<16x32xf32>, vector<32x160xf32>, vector<16x160xf32> -> vector<16x160xf32>
    %66 = arith.mulf %37, %65 : vector<16x160xf32>
    %c0_53 = arith.constant 0 : index
    %c0_54 = arith.constant 0 : index
    %67 = vector.load %arg22[%c0_53, %c0_54] : memref<16x160xf32, #tpu.memory_space<vmem>>, vector<16x160xf32>
    tpu.vector_store %arg22[%c0_53, %c0_54], %66 {strides = array<i32>} : memref<16x160xf32, #tpu.memory_space<vmem>>, vector<16x160xf32>,
    %c0_55 = arith.constant 0 : index
    %c0_56 = arith.constant 0 : index
    %68 = vector.load %arg20[%c0_55, %c0_56] : memref<16x32xf32, #tpu.memory_space<vmem>>, vector<16x32xf32>
    tpu.vector_store %arg20[%c0_55, %c0_56], %63 {strides = array<i32>} : memref<16x32xf32, #tpu.memory_space<vmem>>, vector<16x32xf32>,
    return
  }
  func.func @transform_0(%arg0: i32) -> (i32, i32) {
    %c0_i32 = arith.constant 0 : i32
    %c0_i32_0 = arith.constant 0 : i32
    return %arg0, %c0_i32 : i32, i32
  }
  func.func @transform_1(%arg0: i32) -> (i32, i32) {
    %c0_i32 = arith.constant 0 : i32
    %c0_i32_0 = arith.constant 0 : i32
    return %arg0, %c0_i32 : i32, i32
  }
  func.func @transform_2(%arg0: i32) -> (i32, i32) {
    %c0_i32 = arith.constant 0 : i32
    %c0_i32_0 = arith.constant 0 : i32
    %c0_i32_1 = arith.constant 0 : i32
    return %c0_i32, %c0_i32_0 : i32, i32
  }
  func.func @transform_3(%arg0: i32) -> (i32, i32) {
    %c0_i32 = arith.constant 0 : i32
    %c0_i32_0 = arith.constant 0 : i32
    %c0_i32_1 = arith.constant 0 : i32
    return %c0_i32, %c0_i32_0 : i32, i32
  }
  func.func @transform_4(%arg0: i32) -> (i32, i32) {
    %c0_i32 = arith.constant 0 : i32
    %c0_i32_0 = arith.constant 0 : i32
    %c0_i32_1 = arith.constant 0 : i32
    return %c0_i32, %c0_i32_0 : i32, i32
  }
  func.func @transform_5(%arg0: i32) -> (i32, i32) {
    %c0_i32 = arith.constant 0 : i32
    %c0_i32_0 = arith.constant 0 : i32
    %c0_i32_1 = arith.constant 0 : i32
    return %c0_i32, %c0_i32_0 : i32, i32
  }
  func.func @transform_6(%arg0: i32) -> (i32, i32) {
    %c0_i32 = arith.constant 0 : i32
    %c0_i32_0 = arith.constant 0 : i32
    %c0_i32_1 = arith.constant 0 : i32
    return %c0_i32, %c0_i32_0 : i32, i32
  }
  func.func @transform_7(%arg0: i32) -> (i32, i32) {
    %c0_i32 = arith.constant 0 : i32
    %c0_i32_0 = arith.constant 0 : i32
    %c0_i32_1 = arith.constant 0 : i32
    return %c0_i32, %c0_i32_0 : i32, i32
  }
  func.func @transform_8(%arg0: i32) -> (i32, i32) {
    %c0_i32 = arith.constant 0 : i32
    %c0_i32_0 = arith.constant 0 : i32
    %c0_i32_1 = arith.constant 0 : i32
    return %c0_i32, %c0_i32_0 : i32, i32
  }
  func.func @transform_9(%arg0: i32) -> (i32, i32) {
    %c0_i32 = arith.constant 0 : i32
    %c0_i32_0 = arith.constant 0 : i32
    %c0_i32_1 = arith.constant 0 : i32
    return %c0_i32, %c0_i32_0 : i32, i32
  }
  func.func @transform_10(%arg0: i32) -> (i32, i32) {
    %c0_i32 = arith.constant 0 : i32
    %c0_i32_0 = arith.constant 0 : i32
    return %arg0, %c0_i32 : i32, i32
  }
  func.func @transform_11(%arg0: i32) -> (i32, i32) {
    %c0_i32 = arith.constant 0 : i32
    %c0_i32_0 = arith.constant 0 : i32
    %c0_i32_1 = arith.constant 0 : i32
    return %c0_i32, %c0_i32_0 : i32, i32
  }
  func.func @transform_12(%arg0: i32) -> (i32, i32) {
    %c0_i32 = arith.constant 0 : i32
    %c0_i32_0 = arith.constant 0 : i32
    %c0_i32_1 = arith.constant 0 : i32
    return %c0_i32, %c0_i32_0 : i32, i32
  }
  func.func @transform_13(%arg0: i32) -> (i32, i32) {
    %c0_i32 = arith.constant 0 : i32
    %c0_i32_0 = arith.constant 0 : i32
    %c0_i32_1 = arith.constant 0 : i32
    return %c0_i32, %c0_i32_0 : i32, i32
  }
  func.func @transform_14(%arg0: i32) -> (i32, i32) {
    %c0_i32 = arith.constant 0 : i32
    %c0_i32_0 = arith.constant 0 : i32
    %c0_i32_1 = arith.constant 0 : i32
    return %c0_i32, %c0_i32_0 : i32, i32
  }
  func.func @transform_15(%arg0: i32) -> (i32, i32) {
    %c0_i32 = arith.constant 0 : i32
    %c0_i32_0 = arith.constant 0 : i32
    %c0_i32_1 = arith.constant 0 : i32
    return %c0_i32, %c0_i32_0 : i32, i32
  }
  func.func @transform_16(%arg0: i32) -> (i32, i32) {
    %c0_i32 = arith.constant 0 : i32
    %c0_i32_0 = arith.constant 0 : i32
    %c0_i32_1 = arith.constant 0 : i32
    return %c0_i32, %c0_i32_0 : i32, i32
  }
  func.func @transform_17(%arg0: i32) -> (i32, i32) {
    %c0_i32 = arith.constant 0 : i32
    %c0_i32_0 = arith.constant 0 : i32
    %c0_i32_1 = arith.constant 0 : i32
    return %c0_i32, %c0_i32_0 : i32, i32
  }
  func.func @transform_18(%arg0: i32) -> (i32, i32) {
    %c0_i32 = arith.constant 0 : i32
    %c0_i32_0 = arith.constant 0 : i32
    %c0_i32_1 = arith.constant 0 : i32
    return %c0_i32, %c0_i32_0 : i32, i32
  }
  func.func @transform_19(%arg0: i32) -> (i32, i32) {
    %c0_i32 = arith.constant 0 : i32
    %c0_i32_0 = arith.constant 0 : i32
    return %arg0, %c0_i32 : i32, i32
  }
  func.func @transform_20(%arg0: i32) -> (i32, i32) {
    %c0_i32 = arith.constant 0 : i32
    %c0_i32_0 = arith.constant 0 : i32
    return %arg0, %c0_i32 : i32, i32
  }
  func.func @transform_21(%arg0: i32) -> (i32, i32) {
    %c0_i32 = arith.constant 0 : i32
    %c0_i32_0 = arith.constant 0 : i32
    return %arg0, %c0_i32 : i32, i32
  }
}

</mosaic_0001>

<llo_original>
// kernel: tpu_custom_call.1
$region0: #{tpu_custom_call.1}
  #allocation0 [shape = 'u32[]', space=smem, size = 0x4, offset = 0x4, fixed_abs, tag = 'smem constant byte address 0x4 - core index']
  #allocation1 [shape = 'u32[144,128]{1,0:T(1,128)}', space=vmem, size = 0x12000, scoped, tag = 'internal scratch']
  %s0 = inlined_call_operand.hbm [shape: f32[18,32], index: 0, kind: input, shape index: {}]
  %s1 = inlined_call_operand.hbm [shape: f32[18,96], index: 1, kind: input, shape index: {}]
  %s2 = inlined_call_operand.vmem [shape: f32[96,96], index: 2, kind: input, shape index: {}]
  %s3 = inlined_call_operand.vmem [shape: f32[96,32], index: 3, kind: input, shape index: {}]
  %s4 = inlined_call_operand.hbm [shape: f32[32,96], index: 4, kind: input, shape index: {}]
  %s5 = inlined_call_operand.hbm [shape: f32[32,128], index: 5, kind: input, shape index: {}]
  %s6 = inlined_call_operand.hbm [shape: f32[32,128], index: 6, kind: input, shape index: {}]
  %s7 = inlined_call_operand.vmem [shape: f32[1,128], index: 7, kind: input, shape index: {}]
  %s8 = inlined_call_operand.vmem [shape: f32[128,64], index: 8, kind: input, shape index: {}]
  %s9 = inlined_call_operand.vmem [shape: f32[1,64], index: 9, kind: input, shape index: {}]
  %s10 = inlined_call_operand.vmem [shape: f32[18,160], index: 10, kind: input, shape index: {}]
  %s11 = inlined_call_operand.vmem [shape: f32[160,160], index: 11, kind: input, shape index: {}]
  %s12 = inlined_call_operand.vmem [shape: f32[160,32], index: 12, kind: input, shape index: {}]
  %s13 = inlined_call_operand.vmem [shape: f32[32,160], index: 13, kind: input, shape index: {}]
  %s14 = inlined_call_operand.vmem [shape: f32[32,128], index: 14, kind: input, shape index: {}]
  %s15 = inlined_call_operand.hbm [shape: f32[32,128], index: 15, kind: input, shape index: {}]
  %s16 = inlined_call_operand.vmem [shape: f32[1,128], index: 16, kind: input, shape index: {}]
  %s17 = inlined_call_operand.vmem [shape: f32[128,64], index: 17, kind: input, shape index: {}]
  %s18 = inlined_call_operand.vmem [shape: f32[1,64], index: 18, kind: input, shape index: {}]
  %s19 = inlined_call_operand.hbm [shape: f32[18,32], index: 19, kind: output, shape index: {0}]
  %s20 = inlined_call_operand.hbm [shape: f32[18,96], index: 20, kind: output, shape index: {1}]
  %s21 = inlined_call_operand.hbm [shape: f32[18,160], index: 21, kind: output, shape index: {2}]
  %22 = xla_tuple %s19, %s20, %s21
  %s23 = sld [smem:[#allocation0]]
  $region149: #{tpu_custom_call.1} parent=0
    _
  %s25 = ssub.s32 1, %s23
  %s26 = scalar_select 0, %s25, %s23
  $region1: #{tpu_custom_call.1} parent=0
    #allocation2 [shape = 'u8[16384]{0}', space=vmem, size = 0x4000, scoped, tag = 'input window, operand 0']
    #allocation3 [shape = 's32[2]{0}', space=sflag, size = 0x8, scoped, tag = 'scoped memory for tpu_custom_call.1']
    #allocation4 [shape = 's32[2]{0}', space=sflag, size = 0x8, scoped, tag = 'scoped memory for tpu_custom_call.1']
    #allocation5 [shape = 'u8[16384]{0}', space=vmem, size = 0x4000, scoped, tag = 'input window, operand 1']
    #allocation6 [shape = 's32[2]{0}', space=sflag, size = 0x8, scoped, tag = 'scoped memory for tpu_custom_call.1']
    #allocation7 [shape = 'u8[16384]{0}', space=vmem, size = 0x4000, scoped, tag = 'input window, operand 4, single buffered']
    #allocation8 [shape = 'u8[16384]{0}', space=vmem, size = 0x4000, scoped, tag = 'input window, operand 5, single buffered']
    #allocation9 [shape = 's32[1]{0}', space=sflag, size = 0x4, scoped, tag = 'scoped memory for tpu_custom_call.1']
    #allocation10 [shape = 'u8[16384]{0}', space=vmem, size = 0x4000, scoped, tag = 'input window, operand 6, single buffered']
    #allocation11 [shape = 'u8[16384]{0}', space=vmem, size = 0x4000, scoped, tag = 'input window, operand 15, single buffered']
    #allocation12 [shape = 's32[1]{0}', space=sflag, size = 0x4, scoped, tag = 'scoped memory for tpu_custom_call.1']
    #allocation13 [shape = 'u8[16384]{0}', space=vmem, size = 0x4000, scoped, tag = 'output window, operand 0']
    #allocation14 [shape = 'u8[16384]{0}', space=vmem, size = 0x4000, scoped, tag = 'output window, operand 1']
    #allocation15 [shape = 's32[2]{0}', space=sflag, size = 0x8, scoped, tag = 'scoped memory for tpu_custom_call.1']
    #allocation16 [shape = 'u8[32768]{0}', space=vmem, size = 0x8000, scoped, tag = 'output window, operand 2']
    %27 = vsyncpa [#allocation3], 0
    %s28 = scalar_lea.sflag [#allocation3], 1
    %29 = vsyncpa %s28, 0
    %30 = vsyncpa [#allocation6], 0
    %s31 = scalar_lea.sflag [#allocation6], 1
    %32 = vsyncpa %s31, 0
    %33 = vsyncpa [#allocation9], 0
    %34 = vsyncpa [#allocation12], 0
    %35 = vsyncpa [#allocation4], 0
    %s36 = scalar_lea.sflag [#allocation4], 1
    %37 = vsyncpa %s36, 0
    %38 = vsyncpa [#allocation15], 0
    %s39 = scalar_lea.sflag [#allocation15], 1
    %40 = vsyncpa %s39, 0
    loop: start=0, step=1, limit=4
    $region2: #{tpu_custom_call.1} parent=1 // loop_pre_header
      _
    $region3: #{tpu_custom_call.1} parent=1 // loop_header
      %s42 = sphi 0, %s46
      %p43 = scmp.ge.s32.totalorder %s42, 4
      %s52 = sphi 0, %s54
      %s55 = sphi 0, %s52
      %s56 = sphi 0, %s55
      %s72 = sphi 0, %s56
      %s78 = sphi 0, %s80
      %s81 = sphi 0, %s78
      %s82 = sphi 0, %s81
      %s98 = sphi 0, %s82
      %s102 = sphi 0, %s102
      %s104 = sphi 0, %s102
      %s105 = sphi 0, %s104
      %s119 = sphi 0, %s105
      %s123 = sphi 0, %s123
      %s125 = sphi 0, %s123
      %s126 = sphi 0, %s125
      %s140 = sphi 0, %s126
      %s144 = sphi 0, %s144
      %s146 = sphi 0, %s144
      %s147 = sphi 0, %s146
      %s161 = sphi 0, %s147
      %s165 = sphi 0, %s165
      %s167 = sphi 0, %s165
      %s168 = sphi 0, %s167
      %s182 = sphi 0, %s168
      %s186 = sphi 0, %s186
      %s188 = sphi 0, %s186
      %s189 = sphi 0, %s188
      %s203 = sphi 0, %s189
      %s207 = sphi 0, %s207
      %s209 = sphi 0, %s207
      %s210 = sphi 0, %s209
      %s224 = sphi 0, %s210
      %s228 = sphi 0, %s228
      %s230 = sphi 0, %s228
      %s231 = sphi 0, %s230
      %s245 = sphi 0, %s231
      %s249 = sphi 0, %s249
      %s251 = sphi 0, %s249
      %s252 = sphi 0, %s251
      %s266 = sphi 0, %s252
      %s272 = sphi 0, %s274
      %s275 = sphi 0, %s272
      %s276 = sphi 0, %s275
      %s292 = sphi 0, %s276
      %s296 = sphi 0, %s296
      %s298 = sphi 0, %s296
      %s299 = sphi 0, %s298
      %s313 = sphi 0, %s299
      %s317 = sphi 0, %s317
      %s319 = sphi 0, %s317
      %s320 = sphi 0, %s319
      %s334 = sphi 0, %s320
      %s338 = sphi 0, %s338
      %s340 = sphi 0, %s338
      %s341 = sphi 0, %s340
      %s355 = sphi 0, %s341
      %s359 = sphi 0, %s359
      %s361 = sphi 0, %s359
      %s362 = sphi 0, %s361
      %s376 = sphi 0, %s362
      %s380 = sphi 0, %s380
      %s382 = sphi 0, %s380
      %s383 = sphi 0, %s382
      %s397 = sphi 0, %s383
      %s401 = sphi 0, %s401
      %s403 = sphi 0, %s401
      %s404 = sphi 0, %s403
      %s418 = sphi 0, %s404
      %s422 = sphi 0, %s422
      %s424 = sphi 0, %s422
      %s425 = sphi 0, %s424
      %s439 = sphi 0, %s425
      %s443 = sphi 0, %s443
      %s445 = sphi 0, %s443
      %s446 = sphi 0, %s445
      %s460 = sphi 0, %s446
      %s466 = sphi 0, %s468
      %s469 = sphi 0, %s466
      %s470 = sphi 0, %s469
      %s486 = sphi 0, %s470
      %s492 = sphi 0, %s494
      %s495 = sphi 0, %s492
      %s496 = sphi 0, %s495
      %s512 = sphi 0, %s496
      %s518 = sphi 0, %s520
      %s521 = sphi 0, %s518
      %s522 = sphi 0, %s521
      %s538 = sphi 0, %s522
    $region4: #{tpu_custom_call.1} parent=1 // loop_header_branch
      %45 = sbr.rel (%p43) target = $region8
    $region5: #{tpu_custom_call.1} parent=1 // loop_body
      %s47 = ssub.s32 %s42, 1
      %s48 = ssub.s32 %s42, 2
      %s49 = sadd.s32 %s42, 1
      %s50 = ssub.s32 %s42, %s49
      %p51 = scmp.eq.s32.totalorder %s50, 0
      %s53 = sadd.s32 %s52, 1
      %s54 = scalar_select %p51, %s52, %s53
      %p57 = pneg %p51
      %p58 = scmp.eq.s32.totalorder %s42, 1
      %p59 = por %p57, %p58
      %p60 = scmp.ne.s32.totalorder %s52, %s55
      %p61 = scmp.eq.s32.totalorder %s42, 0
      %p62 = por %p60, %p61
      %p63 = scmp.ne.s32.totalorder %s52, %s55
      %p64 = scmp.eq.s32.totalorder %s47, 1
      %p65 = por %p63, %p64
      %p66 = scmp.ne.s32.totalorder %s55, %s56
      %p67 = scmp.eq.s32.totalorder %s47, 0
      %p68 = por %p66, %p67
      %p69 = scmp.ne.s32.totalorder %s55, %s56
      %p70 = scmp.eq.s32.totalorder %s48, 1
      %p71 = por %p69, %p70
      %p73 = scmp.ne.s32.totalorder %s56, %s72
      %p74 = scmp.eq.s32.totalorder %s48, 0
      %p75 = por %p73, %p74
      %s76 = ssub.s32 %s42, %s49
      %p77 = scmp.eq.s32.totalorder %s76, 0
      %s79 = sadd.s32 %s78, 1
      %s80 = scalar_select %p77, %s78, %s79
      %p83 = pneg %p77
      %p84 = scmp.eq.s32.totalorder %s42, 1
      %p85 = por %p83, %p84
      %p86 = scmp.ne.s32.totalorder %s78, %s81
      %p87 = scmp.eq.s32.totalorder %s42, 0
      %p88 = por %p86, %p87
      %p89 = scmp.ne.s32.totalorder %s78, %s81
      %p90 = scmp.eq.s32.totalorder %s47, 1
      %p91 = por %p89, %p90
      %p92 = scmp.ne.s32.totalorder %s81, %s82
      %p93 = scmp.eq.s32.totalorder %s47, 0
      %p94 = por %p92, %p93
      %p95 = scmp.ne.s32.totalorder %s81, %s82
      %p96 = scmp.eq.s32.totalorder %s48, 1
      %p97 = por %p95, %p96
      %p99 = scmp.ne.s32.totalorder %s82, %s98
      %p100 = scmp.eq.s32.totalorder %s48, 0
      %p101 = por %p99, %p100
      %s103 = sadd.s32 %s102, 1
      %p106 = scmp.eq.s32.totalorder %s42, 1
      %p107 = scmp.ne.s32.totalorder %s102, %s104
      %p108 = scmp.eq.s32.totalorder %s42, 0
      %p109 = por %p107, %p108
      %p110 = scmp.ne.s32.totalorder %s102, %s104
      %p111 = scmp.eq.s32.totalorder %s47, 1
      %p112 = por %p110, %p111
      %p113 = scmp.ne.s32.totalorder %s104, %s105
      %p114 = scmp.eq.s32.totalorder %s47, 0
      %p115 = por %p113, %p114
      %p116 = scmp.ne.s32.totalorder %s104, %s105
      %p117 = scmp.eq.s32.totalorder %s48, 1
      %p118 = por %p116, %p117
      %p120 = scmp.ne.s32.totalorder %s105, %s119
      %p121 = scmp.eq.s32.totalorder %s48, 0
      %p122 = por %p120, %p121
      %s124 = sadd.s32 %s123, 1
      %p127 = scmp.eq.s32.totalorder %s42, 1
      %p128 = scmp.ne.s32.totalorder %s123, %s125
      %p129 = scmp.eq.s32.totalorder %s42, 0
      %p130 = por %p128, %p129
      %p131 = scmp.ne.s32.totalorder %s123, %s125
      %p132 = scmp.eq.s32.totalorder %s47, 1
      %p133 = por %p131, %p132
      %p134 = scmp.ne.s32.totalorder %s125, %s126
      %p135 = scmp.eq.s32.totalorder %s47, 0
      %p136 = por %p134, %p135
      %p137 = scmp.ne.s32.totalorder %s125, %s126
      %p138 = scmp.eq.s32.totalorder %s48, 1
      %p139 = por %p137, %p138
      %p141 = scmp.ne.s32.totalorder %s126, %s140
      %p142 = scmp.eq.s32.totalorder %s48, 0
      %p143 = por %p141, %p142
      %s145 = sadd.s32 %s144, 1
      %p148 = scmp.eq.s32.totalorder %s42, 1
      %p149 = scmp.ne.s32.totalorder %s144, %s146
      %p150 = scmp.eq.s32.totalorder %s42, 0
      %p151 = por %p149, %p150
      %p152 = scmp.ne.s32.totalorder %s144, %s146
      %p153 = scmp.eq.s32.totalorder %s47, 1
      %p154 = por %p152, %p153
      %p155 = scmp.ne.s32.totalorder %s146, %s147
      %p156 = scmp.eq.s32.totalorder %s47, 0
      %p157 = por %p155, %p156
      %p158 = scmp.ne.s32.totalorder %s146, %s147
      %p159 = scmp.eq.s32.totalorder %s48, 1
      %p160 = por %p158, %p159
      %p162 = scmp.ne.s32.totalorder %s147, %s161
      %p163 = scmp.eq.s32.totalorder %s48, 0
      %p164 = por %p162, %p163
      %s166 = sadd.s32 %s165, 1
      %p169 = scmp.eq.s32.totalorder %s42, 1
      %p170 = scmp.ne.s32.totalorder %s165, %s167
      %p171 = scmp.eq.s32.totalorder %s42, 0
      %p172 = por %p170, %p171
      %p173 = scmp.ne.s32.totalorder %s165, %s167
      %p174 = scmp.eq.s32.totalorder %s47, 1
      %p175 = por %p173, %p174
      %p176 = scmp.ne.s32.totalorder %s167, %s168
      %p177 = scmp.eq.s32.totalorder %s47, 0
      %p178 = por %p176, %p177
      %p179 = scmp.ne.s32.totalorder %s167, %s168
      %p180 = scmp.eq.s32.totalorder %s48, 1
      %p181 = por %p179, %p180
      %p183 = scmp.ne.s32.totalorder %s168, %s182
      %p184 = scmp.eq.s32.totalorder %s48, 0
      %p185 = por %p183, %p184
      %s187 = sadd.s32 %s186, 1
      %p190 = scmp.eq.s32.totalorder %s42, 1
      %p191 = scmp.ne.s32.totalorder %s186, %s188
      %p192 = scmp.eq.s32.totalorder %s42, 0
      %p193 = por %p191, %p192
      %p194 = scmp.ne.s32.totalorder %s186, %s188
      %p195 = scmp.eq.s32.totalorder %s47, 1
      %p196 = por %p194, %p195
      %p197 = scmp.ne.s32.totalorder %s188, %s189
      %p198 = scmp.eq.s32.totalorder %s47, 0
      %p199 = por %p197, %p198
      %p200 = scmp.ne.s32.totalorder %s188, %s189
      %p201 = scmp.eq.s32.totalorder %s48, 1
      %p202 = por %p200, %p201
      %p204 = scmp.ne.s32.totalorder %s189, %s203
      %p205 = scmp.eq.s32.totalorder %s48, 0
      %p206 = por %p204, %p205
      %s208 = sadd.s32 %s207, 1
      %p211 = scmp.eq.s32.totalorder %s42, 1
      %p212 = scmp.ne.s32.totalorder %s207, %s209
      %p213 = scmp.eq.s32.totalorder %s42, 0
      %p214 = por %p212, %p213
      %p215 = scmp.ne.s32.totalorder %s207, %s209
      %p216 = scmp.eq.s32.totalorder %s47, 1
      %p217 = por %p215, %p216
      %p218 = scmp.ne.s32.totalorder %s209, %s210
      %p219 = scmp.eq.s32.totalorder %s47, 0
      %p220 = por %p218, %p219
      %p221 = scmp.ne.s32.totalorder %s209, %s210
      %p222 = scmp.eq.s32.totalorder %s48, 1
      %p223 = por %p221, %p222
      %p225 = scmp.ne.s32.totalorder %s210, %s224
      %p226 = scmp.eq.s32.totalorder %s48, 0
      %p227 = por %p225, %p226
      %s229 = sadd.s32 %s228, 1
      %p232 = scmp.eq.s32.totalorder %s42, 1
      %p233 = scmp.ne.s32.totalorder %s228, %s230
      %p234 = scmp.eq.s32.totalorder %s42, 0
      %p235 = por %p233, %p234
      %p236 = scmp.ne.s32.totalorder %s228, %s230
      %p237 = scmp.eq.s32.totalorder %s47, 1
      %p238 = por %p236, %p237
      %p239 = scmp.ne.s32.totalorder %s230, %s231
      %p240 = scmp.eq.s32.totalorder %s47, 0
      %p241 = por %p239, %p240
      %p242 = scmp.ne.s32.totalorder %s230, %s231
      %p243 = scmp.eq.s32.totalorder %s48, 1
      %p244 = por %p242, %p243
      %p246 = scmp.ne.s32.totalorder %s231, %s245
      %p247 = scmp.eq.s32.totalorder %s48, 0
      %p248 = por %p246, %p247
      %s250 = sadd.s32 %s249, 1
      %p253 = scmp.eq.s32.totalorder %s42, 1
      %p254 = scmp.ne.s32.totalorder %s249, %s251
      %p255 = scmp.eq.s32.totalorder %s42, 0
      %p256 = por %p254, %p255
      %p257 = scmp.ne.s32.totalorder %s249, %s251
      %p258 = scmp.eq.s32.totalorder %s47, 1
      %p259 = por %p257, %p258
      %p260 = scmp.ne.s32.totalorder %s251, %s252
      %p261 = scmp.eq.s32.totalorder %s47, 0
      %p262 = por %p260, %p261
      %p263 = scmp.ne.s32.totalorder %s251, %s252
      %p264 = scmp.eq.s32.totalorder %s48, 1
      %p265 = por %p263, %p264
      %p267 = scmp.ne.s32.totalorder %s252, %s266
      %p268 = scmp.eq.s32.totalorder %s48, 0
      %p269 = por %p267, %p268
      %s270 = ssub.s32 %s42, %s49
      %p271 = scmp.eq.s32.totalorder %s270, 0
      %s273 = sadd.s32 %s272, 1
      %s274 = scalar_select %p271, %s272, %s273
      %p277 = pneg %p271
      %p278 = scmp.eq.s32.totalorder %s42, 1
      %p279 = por %p277, %p278
      %p280 = scmp.ne.s32.totalorder %s272, %s275
      %p281 = scmp.eq.s32.totalorder %s42, 0
      %p282 = por %p280, %p281
      %p283 = scmp.ne.s32.totalorder %s272, %s275
      %p284 = scmp.eq.s32.totalorder %s47, 1
      %p285 = por %p283, %p284
      %p286 = scmp.ne.s32.totalorder %s275, %s276
      %p287 = scmp.eq.s32.totalorder %s47, 0
      %p288 = por %p286, %p287
      %p289 = scmp.ne.s32.totalorder %s275, %s276
      %p290 = scmp.eq.s32.totalorder %s48, 1
      %p291 = por %p289, %p290
      %p293 = scmp.ne.s32.totalorder %s276, %s292
      %p294 = scmp.eq.s32.totalorder %s48, 0
      %p295 = por %p293, %p294
      %s297 = sadd.s32 %s296, 1
      %p300 = scmp.eq.s32.totalorder %s42, 1
      %p301 = scmp.ne.s32.totalorder %s296, %s298
      %p302 = scmp.eq.s32.totalorder %s42, 0
      %p303 = por %p301, %p302
      %p304 = scmp.ne.s32.totalorder %s296, %s298
      %p305 = scmp.eq.s32.totalorder %s47, 1
      %p306 = por %p304, %p305
      %p307 = scmp.ne.s32.totalorder %s298, %s299
      %p308 = scmp.eq.s32.totalorder %s47, 0
      %p309 = por %p307, %p308
      %p310 = scmp.ne.s32.totalorder %s298, %s299
      %p311 = scmp.eq.s32.totalorder %s48, 1
      %p312 = por %p310, %p311
      %p314 = scmp.ne.s32.totalorder %s299, %s313
      %p315 = scmp.eq.s32.totalorder %s48, 0
      %p316 = por %p314, %p315
      %s318 = sadd.s32 %s317, 1
      %p321 = scmp.eq.s32.totalorder %s42, 1
      %p322 = scmp.ne.s32.totalorder %s317, %s319
      %p323 = scmp.eq.s32.totalorder %s42, 0
      %p324 = por %p322, %p323
      %p325 = scmp.ne.s32.totalorder %s317, %s319
      %p326 = scmp.eq.s32.totalorder %s47, 1
      %p327 = por %p325, %p326
      %p328 = scmp.ne.s32.totalorder %s319, %s320
      %p329 = scmp.eq.s32.totalorder %s47, 0
      %p330 = por %p328, %p329
      %p331 = scmp.ne.s32.totalorder %s319, %s320
      %p332 = scmp.eq.s32.totalorder %s48, 1
      %p333 = por %p331, %p332
      %p335 = scmp.ne.s32.totalorder %s320, %s334
      %p336 = scmp.eq.s32.totalorder %s48, 0
      %p337 = por %p335, %p336
      %s339 = sadd.s32 %s338, 1
      %p342 = scmp.eq.s32.totalorder %s42, 1
      %p343 = scmp.ne.s32.totalorder %s338, %s340
      %p344 = scmp.eq.s32.totalorder %s42, 0
      %p345 = por %p343, %p344
      %p346 = scmp.ne.s32.totalorder %s338, %s340
      %p347 = scmp.eq.s32.totalorder %s47, 1
      %p348 = por %p346, %p347
      %p349 = scmp.ne.s32.totalorder %s340, %s341
      %p350 = scmp.eq.s32.totalorder %s47, 0
      %p351 = por %p349, %p350
      %p352 = scmp.ne.s32.totalorder %s340, %s341
      %p353 = scmp.eq.s32.totalorder %s48, 1
      %p354 = por %p352, %p353
      %p356 = scmp.ne.s32.totalorder %s341, %s355
      %p357 = scmp.eq.s32.totalorder %s48, 0
      %p358 = por %p356, %p357
      %s360 = sadd.s32 %s359, 1
      %p363 = scmp.eq.s32.totalorder %s42, 1
      %p364 = scmp.ne.s32.totalorder %s359, %s361
      %p365 = scmp.eq.s32.totalorder %s42, 0
      %p366 = por %p364, %p365
      %p367 = scmp.ne.s32.totalorder %s359, %s361
      %p368 = scmp.eq.s32.totalorder %s47, 1
      %p369 = por %p367, %p368
      %p370 = scmp.ne.s32.totalorder %s361, %s362
      %p371 = scmp.eq.s32.totalorder %s47, 0
      %p372 = por %p370, %p371
      %p373 = scmp.ne.s32.totalorder %s361, %s362
      %p374 = scmp.eq.s32.totalorder %s48, 1
      %p375 = por %p373, %p374
      %p377 = scmp.ne.s32.totalorder %s362, %s376
      %p378 = scmp.eq.s32.totalorder %s48, 0
      %p379 = por %p377, %p378
      %s381 = sadd.s32 %s380, 1
      %p384 = scmp.eq.s32.totalorder %s42, 1
      %p385 = scmp.ne.s32.totalorder %s380, %s382
      %p386 = scmp.eq.s32.totalorder %s42, 0
      %p387 = por %p385, %p386
      %p388 = scmp.ne.s32.totalorder %s380, %s382
      %p389 = scmp.eq.s32.totalorder %s47, 1
      %p390 = por %p388, %p389
      %p391 = scmp.ne.s32.totalorder %s382, %s383
      %p392 = scmp.eq.s32.totalorder %s47, 0
      %p393 = por %p391, %p392
      %p394 = scmp.ne.s32.totalorder %s382, %s383
      %p395 = scmp.eq.s32.totalorder %s48, 1
      %p396 = por %p394, %p395
      %p398 = scmp.ne.s32.totalorder %s383, %s397
      %p399 = scmp.eq.s32.totalorder %s48, 0
      %p400 = por %p398, %p399
      %s402 = sadd.s32 %s401, 1
      %p405 = scmp.eq.s32.totalorder %s42, 1
      %p406 = scmp.ne.s32.totalorder %s401, %s403
      %p407 = scmp.eq.s32.totalorder %s42, 0
      %p408 = por %p406, %p407
      %p409 = scmp.ne.s32.totalorder %s401, %s403
      %p410 = scmp.eq.s32.totalorder %s47, 1
      %p411 = por %p409, %p410
      %p412 = scmp.ne.s32.totalorder %s403, %s404
      %p413 = scmp.eq.s32.totalorder %s47, 0
      %p414 = por %p412, %p413
      %p415 = scmp.ne.s32.totalorder %s403, %s404
      %p416 = scmp.eq.s32.totalorder %s48, 1
      %p417 = por %p415, %p416
      %p419 = scmp.ne.s32.totalorder %s404, %s418
      %p420 = scmp.eq.s32.totalorder %s48, 0
      %p421 = por %p419, %p420
      %s423 = sadd.s32 %s422, 1
      %p426 = scmp.eq.s32.totalorder %s42, 1
      %p427 = scmp.ne.s32.totalorder %s422, %s424
      %p428 = scmp.eq.s32.totalorder %s42, 0
      %p429 = por %p427, %p428
      %p430 = scmp.ne.s32.totalorder %s422, %s424
      %p431 = scmp.eq.s32.totalorder %s47, 1
      %p432 = por %p430, %p431
      %p433 = scmp.ne.s32.totalorder %s424, %s425
      %p434 = scmp.eq.s32.totalorder %s47, 0
      %p435 = por %p433, %p434
      %p436 = scmp.ne.s32.totalorder %s424, %s425
      %p437 = scmp.eq.s32.totalorder %s48, 1
      %p438 = por %p436, %p437
      %p440 = scmp.ne.s32.totalorder %s425, %s439
      %p441 = scmp.eq.s32.totalorder %s48, 0
      %p442 = por %p440, %p441
      %s444 = sadd.s32 %s443, 1
      %p447 = scmp.eq.s32.totalorder %s42, 1
      %p448 = scmp.ne.s32.totalorder %s443, %s445
      %p449 = scmp.eq.s32.totalorder %s42, 0
      %p450 = por %p448, %p449
      %p451 = scmp.ne.s32.totalorder %s443, %s445
      %p452 = scmp.eq.s32.totalorder %s47, 1
      %p453 = por %p451, %p452
      %p454 = scmp.ne.s32.totalorder %s445, %s446
      %p455 = scmp.eq.s32.totalorder %s47, 0
      %p456 = por %p454, %p455
      %p457 = scmp.ne.s32.totalorder %s445, %s446
      %p458 = scmp.eq.s32.totalorder %s48, 1
      %p459 = por %p457, %p458
      %p461 = scmp.ne.s32.totalorder %s446, %s460
      %p462 = scmp.eq.s32.totalorder %s48, 0
      %p463 = por %p461, %p462
      %s464 = ssub.s32 %s42, %s49
      %p465 = scmp.eq.s32.totalorder %s464, 0
      %s467 = sadd.s32 %s466, 1
      %s468 = scalar_select %p465, %s466, %s467
      %p471 = pneg %p465
      %p472 = scmp.eq.s32.totalorder %s42, 1
      %p473 = por %p471, %p472
      %p474 = scmp.ne.s32.totalorder %s466, %s469
      %p475 = scmp.eq.s32.totalorder %s42, 0
      %p476 = por %p474, %p475
      %p477 = scmp.ne.s32.totalorder %s466, %s469
      %p478 = scmp.eq.s32.totalorder %s47, 1
      %p479 = por %p477, %p478
      %p480 = scmp.ne.s32.totalorder %s469, %s470
      %p481 = scmp.eq.s32.totalorder %s47, 0
      %p482 = por %p480, %p481
      %p483 = scmp.ne.s32.totalorder %s469, %s470
      %p484 = scmp.eq.s32.totalorder %s48, 1
      %p485 = por %p483, %p484
      %p487 = scmp.ne.s32.totalorder %s470, %s486
      %p488 = scmp.eq.s32.totalorder %s48, 0
      %p489 = por %p487, %p488
      %s490 = ssub.s32 %s42, %s49
      %p491 = scmp.eq.s32.totalorder %s490, 0
      %s493 = sadd.s32 %s492, 1
      %s494 = scalar_select %p491, %s492, %s493
      %p497 = pneg %p491
      %p498 = scmp.eq.s32.totalorder %s42, 1
      %p499 = por %p497, %p498
      %p500 = scmp.ne.s32.totalorder %s492, %s495
      %p501 = scmp.eq.s32.totalorder %s42, 0
      %p502 = por %p500, %p501
      %p503 = scmp.ne.s32.totalorder %s492, %s495
      %p504 = scmp.eq.s32.totalorder %s47, 1
      %p505 = por %p503, %p504
      %p506 = scmp.ne.s32.totalorder %s495, %s496
      %p507 = scmp.eq.s32.totalorder %s47, 0
      %p508 = por %p506, %p507
      %p509 = scmp.ne.s32.totalorder %s495, %s496
      %p510 = scmp.eq.s32.totalorder %s48, 1
      %p511 = por %p509, %p510
      %p513 = scmp.ne.s32.totalorder %s496, %s512
      %p514 = scmp.eq.s32.totalorder %s48, 0
      %p515 = por %p513, %p514
      %s516 = ssub.s32 %s42, %s49
      %p517 = scmp.eq.s32.totalorder %s516, 0
      %s519 = sadd.s32 %s518, 1
      %s520 = scalar_select %p517, %s518, %s519
      %p523 = pneg %p517
      %p524 = scmp.eq.s32.totalorder %s42, 1
      %p525 = por %p523, %p524
      %p526 = scmp.ne.s32.totalorder %s518, %s521
      %p527 = scmp.eq.s32.totalorder %s42, 0
      %p528 = por %p526, %p527
      %p529 = scmp.ne.s32.totalorder %s518, %s521
      %p530 = scmp.eq.s32.totalorder %s47, 1
      %p531 = por %p529, %p530
      %p532 = scmp.ne.s32.totalorder %s521, %s522
      %p533 = scmp.eq.s32.totalorder %s47, 0
      %p534 = por %p532, %p533
      %p535 = scmp.ne.s32.totalorder %s521, %s522
      %p536 = scmp.eq.s32.totalorder %s48, 1
      %p537 = por %p535, %p536
      %p539 = scmp.ne.s32.totalorder %s522, %s538
      %p540 = scmp.eq.s32.totalorder %s48, 0
      %p541 = por %p539, %p540
      %p542 = scmp.le.s32.totalorder 1, %s42
      %p543 = scmp.lt.s32.totalorder %s42, 3
      %p544 = pnand %p542, %p543
      %p545 = pneg %p544
      // Predicated region
      $region9: #{tpu_custom_call.1} parent=5 // pred_check
        _
      $region10: #{tpu_custom_call.1} parent=5 // pred_check_branch
        %547 = sbr.rel (%p544) target = $region12
      $region11: #{tpu_custom_call.1} parent=5 // pred_region
        %s548 = ssub.s32 %s42, 1
        // Predicated region
        $region13: #{tpu_custom_call.1} parent=11 // pred_check
          %p549 = pneg %p115
        $region14: #{tpu_custom_call.1} parent=11 // pred_check_branch
          %551 = sbr.rel (%p549) target = $region16
        $region15: #{tpu_custom_call.1} parent=11 // pred_region
          _
        $region16: #{tpu_custom_call.1} parent=11 // pred_fallthru
          _
        // Predicated region
        $region17: #{tpu_custom_call.1} parent=11 // pred_check
          %p552 = pneg %p136
        $region18: #{tpu_custom_call.1} parent=11 // pred_check_branch
          %554 = sbr.rel (%p552) target = $region20
        $region19: #{tpu_custom_call.1} parent=11 // pred_region
          _
        $region20: #{tpu_custom_call.1} parent=11 // pred_fallthru
          _
        // Predicated region
        $region21: #{tpu_custom_call.1} parent=11 // pred_check
          %p555 = pneg %p157
        $region22: #{tpu_custom_call.1} parent=11 // pred_check_branch
          %557 = sbr.rel (%p555) target = $region24
        $region23: #{tpu_custom_call.1} parent=11 // pred_region
          %s559 = ssub.s32 512, 512
          %560 = vsyncadd [#allocation6], %s559
          %s561 = sshll.u32 [#allocation7], 4
          %s562 = int_to_ptr.vmem [resolvable:$true] %s561
          %567 = dma.hbm_to_vmem [thread:$0]  %s4, 512, %s562, [#allocation6], 128, 128, 8
        $region24: #{tpu_custom_call.1} parent=11 // pred_fallthru
          _
        // Predicated region
        $region25: #{tpu_custom_call.1} parent=11 // pred_check
          %p568 = pneg %p178
        $region26: #{tpu_custom_call.1} parent=11 // pred_check_branch
          %570 = sbr.rel (%p568) target = $region28
        $region27: #{tpu_custom_call.1} parent=11 // pred_region
          %s572 = ssub.s32 512, 512
          %573 = vsyncadd [#allocation9], %s572
          %s574 = sshll.u32 [#allocation8], 4
          %s575 = int_to_ptr.vmem [resolvable:$true] %s574
          %580 = dma.hbm_to_vmem [thread:$0]  %s5, 512, %s575, [#allocation9], 128, 128, 8
        $region28: #{tpu_custom_call.1} parent=11 // pred_fallthru
          _
        // Predicated region
        $region29: #{tpu_custom_call.1} parent=11 // pred_check
          %p581 = pneg %p199
        $region30: #{tpu_custom_call.1} parent=11 // pred_check_branch
          %583 = sbr.rel (%p581) target = $region32
        $region31: #{tpu_custom_call.1} parent=11 // pred_region
          %s585 = ssub.s32 512, 512
          %586 = vsyncadd [#allocation9], %s585
          %s587 = sshll.u32 [#allocation10], 4
          %s588 = int_to_ptr.vmem [resolvable:$true] %s587
          %593 = dma.hbm_to_vmem [thread:$0]  %s6, 512, %s588, [#allocation9], 128, 128, 8
        $region32: #{tpu_custom_call.1} parent=11 // pred_fallthru
          _
        // Predicated region
        $region33: #{tpu_custom_call.1} parent=11 // pred_check
          %p594 = pneg %p220
        $region34: #{tpu_custom_call.1} parent=11 // pred_check_branch
          %596 = sbr.rel (%p594) target = $region36
        $region35: #{tpu_custom_call.1} parent=11 // pred_region
          _
        $region36: #{tpu_custom_call.1} parent=11 // pred_fallthru
          _
        // Predicated region
        $region37: #{tpu_custom_call.1} parent=11 // pred_check
          %p597 = pneg %p241
        $region38: #{tpu_custom_call.1} parent=11 // pred_check_branch
          %599 = sbr.rel (%p597) target = $region40
        $region39: #{tpu_custom_call.1} parent=11 // pred_region
          _
        $region40: #{tpu_custom_call.1} parent=11 // pred_fallthru
          _
        // Predicated region
        $region41: #{tpu_custom_call.1} parent=11 // pred_check
          %p600 = pneg %p262
        $region42: #{tpu_custom_call.1} parent=11 // pred_check_branch
          %602 = sbr.rel (%p600) target = $region44
        $region43: #{tpu_custom_call.1} parent=11 // pred_region
          _
        $region44: #{tpu_custom_call.1} parent=11 // pred_fallthru
          _
        // Predicated region
        $region45: #{tpu_custom_call.1} parent=11 // pred_check
          %p603 = pneg %p309
        $region46: #{tpu_custom_call.1} parent=11 // pred_check_branch
          %605 = sbr.rel (%p603) target = $region48
        $region47: #{tpu_custom_call.1} parent=11 // pred_region
          _
        $region48: #{tpu_custom_call.1} parent=11 // pred_fallthru
          _
        // Predicated region
        $region49: #{tpu_custom_call.1} parent=11 // pred_check
          %p606 = pneg %p330
        $region50: #{tpu_custom_call.1} parent=11 // pred_check_branch
          %608 = sbr.rel (%p606) target = $region52
        $region51: #{tpu_custom_call.1} parent=11 // pred_region
          _
        $region52: #{tpu_custom_call.1} parent=11 // pred_fallthru
          _
        // Predicated region
        $region53: #{tpu_custom_call.1} parent=11 // pred_check
          %p609 = pneg %p351
        $region54: #{tpu_custom_call.1} parent=11 // pred_check_branch
          %611 = sbr.rel (%p609) target = $region56
        $region55: #{tpu_custom_call.1} parent=11 // pred_region
          _
        $region56: #{tpu_custom_call.1} parent=11 // pred_fallthru
          _
        // Predicated region
        $region57: #{tpu_custom_call.1} parent=11 // pred_check
          %p612 = pneg %p372
        $region58: #{tpu_custom_call.1} parent=11 // pred_check_branch
          %614 = sbr.rel (%p612) target = $region60
        $region59: #{tpu_custom_call.1} parent=11 // pred_region
          _
        $region60: #{tpu_custom_call.1} parent=11 // pred_fallthru
          _
        // Predicated region
        $region61: #{tpu_custom_call.1} parent=11 // pred_check
          %p615 = pneg %p393
        $region62: #{tpu_custom_call.1} parent=11 // pred_check_branch
          %617 = sbr.rel (%p615) target = $region64
        $region63: #{tpu_custom_call.1} parent=11 // pred_region
          %s619 = ssub.s32 512, 512
          %620 = vsyncadd [#allocation12], %s619
          %s621 = sshll.u32 [#allocation11], 4
          %s622 = int_to_ptr.vmem [resolvable:$true] %s621
          %627 = dma.hbm_to_vmem [thread:$0]  %s15, 512, %s622, [#allocation12], 128, 128, 8
        $region64: #{tpu_custom_call.1} parent=11 // pred_fallthru
          _
        // Predicated region
        $region65: #{tpu_custom_call.1} parent=11 // pred_check
          %p628 = pneg %p414
        $region66: #{tpu_custom_call.1} parent=11 // pred_check_branch
          %630 = sbr.rel (%p628) target = $region68
        $region67: #{tpu_custom_call.1} parent=11 // pred_region
          _
        $region68: #{tpu_custom_call.1} parent=11 // pred_fallthru
          _
        // Predicated region
        $region69: #{tpu_custom_call.1} parent=11 // pred_check
          %p631 = pneg %p435
        $region70: #{tpu_custom_call.1} parent=11 // pred_check_branch
          %633 = sbr.rel (%p631) target = $region72
        $region71: #{tpu_custom_call.1} parent=11 // pred_region
          _
        $region72: #{tpu_custom_call.1} parent=11 // pred_fallthru
          _
        // Predicated region
        $region73: #{tpu_custom_call.1} parent=11 // pred_check
          %p634 = pneg %p456
        $region74: #{tpu_custom_call.1} parent=11 // pred_check_branch
          %636 = sbr.rel (%p634) target = $region76
        $region75: #{tpu_custom_call.1} parent=11 // pred_region
          _
        $region76: #{tpu_custom_call.1} parent=11 // pred_fallthru
          _
      $region12: #{tpu_custom_call.1} parent=5 // pred_fallthru
        _
      %p637 = scmp.lt.s32.totalorder %s42, 2
      // Predicated region
      $region77: #{tpu_custom_call.1} parent=5 // pred_check
        %p638 = pneg %p637
      $region78: #{tpu_custom_call.1} parent=5 // pred_check_branch
        %640 = sbr.rel (%p638) target = $region80
      $region79: #{tpu_custom_call.1} parent=5 // pred_region
        // Predicated region
        $region81: #{tpu_custom_call.1} parent=79 // pred_check
          %p641 = pneg %p62
        $region82: #{tpu_custom_call.1} parent=79 // pred_check_branch
          %643 = sbr.rel (%p641) target = $region84
        $region83: #{tpu_custom_call.1} parent=79 // pred_region
          %s644 = sand.u32 %s52, 1
          %s645 = scalar_lea.sflag [#allocation3], %s644
          %s646 = sand.u32 %s52, 1
          %s647 = smul.addr %s646, 16
          %s648 = scalar_lea.vmem [#allocation2], %s647
          %s649 = smul.u32 2, %s42
          %s650 = ssub.s32 3, %s649
          %p651 = scmp.lt.s32.totalorder %s650, 2
          %s652 = scalar_select %p651, %s650, 2
          %s653 = smul.u32 128, %s652
          %s655 = ssub.s32 256, %s653
          %656 = vsyncadd %s645, %s655
          %p657 = scmp.ne.s32.totalorder 0, %s653
          %s658 = smul.addr %s649, 128
          %s659 = scalar_lea.hbm %s0, %s658
          %s660 = smul.u32 8, %s652
          %s661 = sshll.u32 %s648, 4
          %s662 = int_to_ptr.vmem [resolvable:$true] %s661
          %s663 = sshll.u32 %s660, 4
          %667 = dma.hbm_to_vmem [thread:$0]  (%p657), %s659, %s663, %s662, %s645, 128, 128, 8
        $region84: #{tpu_custom_call.1} parent=79 // pred_fallthru
          _
        // Predicated region
        $region85: #{tpu_custom_call.1} parent=79 // pred_check
          %p668 = pneg %p88
        $region86: #{tpu_custom_call.1} parent=79 // pred_check_branch
          %670 = sbr.rel (%p668) target = $region88
        $region87: #{tpu_custom_call.1} parent=79 // pred_region
          %s671 = sand.u32 %s42, 1
          %s672 = scalar_lea.sflag [#allocation6], %s671
          %s673 = sand.u32 %s78, 1
          %s674 = smul.addr %s673, 16
          %s675 = scalar_lea.vmem [#allocation5], %s674
          %s676 = smul.u32 2, %s42
          %s677 = ssub.s32 3, %s676
          %p678 = scmp.lt.s32.totalorder %s677, 2
          %s679 = scalar_select %p678, %s677, 2
          %s680 = smul.u32 128, %s679
          %s682 = ssub.s32 256, %s680
          %683 = vsyncadd %s672, %s682
          %p684 = scmp.ne.s32.totalorder 0, %s680
          %s685 = smul.addr %s676, 128
          %s686 = scalar_lea.hbm %s1, %s685
          %s687 = smul.u32 8, %s679
          %s688 = sshll.u32 %s675, 4
          %s689 = int_to_ptr.vmem [resolvable:$true] %s688
          %s690 = sshll.u32 %s687, 4
          %694 = dma.hbm_to_vmem [thread:$0]  (%p684), %s686, %s690, %s689, %s672, 128, 128, 8
        $region88: #{tpu_custom_call.1} parent=79 // pred_fallthru
          _
        // Predicated region
        $region89: #{tpu_custom_call.1} parent=79 // pred_check
          %p695 = pneg %p282
        $region90: #{tpu_custom_call.1} parent=79 // pred_check_branch
          %697 = sbr.rel (%p695) target = $region92
        $region91: #{tpu_custom_call.1} parent=79 // pred_region
          %s698 = smul.u32 2, %s42
          %s699 = ssub.s32 3, %s698
          %p700 = scmp.lt.s32.totalorder %s699, 2
          %s701 = scalar_select %p700, %s699, 2
          %s702 = smul.u32 128, %s701
          %s703 = smul.u32 %s702, 2
          %p704 = scmp.lt.s32.totalorder %s698, 2
          %s705 = scalar_select %p704, %s698, 2
          %s706 = smul.addr %s705, 2
          %s707 = smul.addr %s706, 8
          %s708 = scalar_lea.vmem %s10, %s707
          %s709 = smul.u32 2, %s42
          %s710 = ssub.s32 3, %s709
          %p711 = scmp.lt.s32.totalorder %s710, 2
          %s712 = scalar_select %p711, %s710, 2
          %s713 = smul.u32 128, %s712
          %s714 = smul.u32 %s713, 2
        $region92: #{tpu_custom_call.1} parent=79 // pred_fallthru
          _
      $region80: #{tpu_custom_call.1} parent=5 // pred_fallthru
        _
      %p715 = scmp.le.s32.totalorder 1, %s42
      %p716 = scmp.lt.s32.totalorder %s42, 3
      %p717 = pnand %p715, %p716
      %p718 = pneg %p717
      // Predicated region
      $region93: #{tpu_custom_call.1} parent=5 // pred_check
        _
      $region94: #{tpu_custom_call.1} parent=5 // pred_check_branch
        %720 = sbr.rel (%p717) target = $region96
      $region95: #{tpu_custom_call.1} parent=5 // pred_region
        %s721 = ssub.s32 %s42, 1
        %s722 = sand.u32 %s55, 1
        %s723 = scalar_lea.sflag [#allocation3], %s722
        %s724 = sand.u32 %s55, 1
        %s725 = smul.addr %s724, 16
        %s726 = scalar_lea.vmem [#allocation2], %s725
        // Predicated region
        $region97: #{tpu_custom_call.1} parent=95 // pred_check
          %p727 = pneg %p68
        $region98: #{tpu_custom_call.1} parent=95 // pred_check_branch
          %729 = sbr.rel (%p727) target = $region100
        $region99: #{tpu_custom_call.1} parent=95 // pred_region
          %730 = dma.done %s723, 256
        $region100: #{tpu_custom_call.1} parent=95 // pred_fallthru
          _
        %s731 = sand.u32 %s47, 1
        %s732 = scalar_lea.sflag [#allocation6], %s731
        %s733 = sand.u32 %s81, 1
        %s734 = smul.addr %s733, 16
        %s735 = scalar_lea.vmem [#allocation5], %s734
        // Predicated region
        $region101: #{tpu_custom_call.1} parent=95 // pred_check
          %p736 = pneg %p94
        $region102: #{tpu_custom_call.1} parent=95 // pred_check_branch
          %738 = sbr.rel (%p736) target = $region104
        $region103: #{tpu_custom_call.1} parent=95 // pred_region
          %739 = dma.done %s732, 256
        $region104: #{tpu_custom_call.1} parent=95 // pred_fallthru
          _
        // Predicated region
        $region105: #{tpu_custom_call.1} parent=95 // pred_check
          %p740 = pneg %p157
        $region106: #{tpu_custom_call.1} parent=95 // pred_check_branch
          %742 = sbr.rel (%p740) target = $region108
        $region107: #{tpu_custom_call.1} parent=95 // pred_region
          %743 = dma.done [#allocation6], 512
        $region108: #{tpu_custom_call.1} parent=95 // pred_fallthru
          _
        // Predicated region
        $region109: #{tpu_custom_call.1} parent=95 // pred_check
          %p744 = pneg %p178
        $region110: #{tpu_custom_call.1} parent=95 // pred_check_branch
          %746 = sbr.rel (%p744) target = $region112
        $region111: #{tpu_custom_call.1} parent=95 // pred_region
          %747 = dma.done [#allocation9], 512
        $region112: #{tpu_custom_call.1} parent=95 // pred_fallthru
          _
        // Predicated region
        $region113: #{tpu_custom_call.1} parent=95 // pred_check
          %p748 = pneg %p199
        $region114: #{tpu_custom_call.1} parent=95 // pred_check_branch
          %750 = sbr.rel (%p748) target = $region116
        $region115: #{tpu_custom_call.1} parent=95 // pred_region
          %751 = dma.done [#allocation9], 512
        $region116: #{tpu_custom_call.1} parent=95 // pred_fallthru
          _
        // Predicated region
        $region117: #{tpu_custom_call.1} parent=95 // pred_check
          %p752 = pneg %p393
        $region118: #{tpu_custom_call.1} parent=95 // pred_check_branch
          %754 = sbr.rel (%p752) target = $region120
        $region119: #{tpu_custom_call.1} parent=95 // pred_region
          %755 = dma.done [#allocation12], 512
        $region120: #{tpu_custom_call.1} parent=95 // pred_fallthru
          _
        %s756 = sand.u32 %s55, 1
        %s757 = scalar_lea.sflag [#allocation3], %s756
        %s758 = sand.u32 %s55, 1
        %s759 = smul.addr %s758, 16
        %s760 = scalar_lea.vmem [#allocation2], %s759
        %p761 = pneg %p68
        %p762 = pneg %p65
        %s763 = sand.u32 %s47, 1
        %s764 = scalar_lea.sflag [#allocation6], %s763
        %s765 = sand.u32 %s81, 1
        %s766 = smul.addr %s765, 16
        %s767 = scalar_lea.vmem [#allocation5], %s766
        %p768 = pneg %p94
        %p769 = pneg %p91
        %p770 = pneg %p115
        %p771 = pneg %p112
        %p772 = pneg %p136
        %p773 = pneg %p133
        %p774 = pneg %p157
        %p775 = pneg %p154
        %p776 = pneg %p178
        %p777 = pneg %p175
        %p778 = pneg %p199
        %p779 = pneg %p196
        %p780 = pneg %p220
        %p781 = pneg %p217
        %p782 = pneg %p241
        %p783 = pneg %p238
        %p784 = pneg %p262
        %p785 = pneg %p259
        %s786 = smul.u32 2, %s47
        %s787 = ssub.s32 3, %s786
        %p788 = scmp.lt.s32.totalorder %s787, 2
        %s789 = scalar_select %p788, %s787, 2
        %s790 = smul.u32 128, %s789
        %s791 = smul.u32 %s790, 2
        %p792 = scmp.lt.s32.totalorder %s786, 2
        %s793 = scalar_select %p792, %s786, 2
        %s794 = smul.addr %s793, 2
        %s795 = smul.addr %s794, 8
        %s796 = scalar_lea.vmem %s10, %s795
        %p797 = pneg %p288
        %p798 = pneg %p285
        %p799 = pneg %p309
        %p800 = pneg %p306
        %p801 = pneg %p330
        %p802 = pneg %p327
        %p803 = pneg %p351
        %p804 = pneg %p348
        %p805 = pneg %p372
        %p806 = pneg %p369
        %p807 = pneg %p393
        %p808 = pneg %p390
        %p809 = pneg %p414
        %p810 = pneg %p411
        %p811 = pneg %p435
        %p812 = pneg %p432
        %p813 = pneg %p456
        %p814 = pneg %p453
        %p815 = pneg %p482
        %p816 = pneg %p479
        %s817 = sand.u32 %s469, 1
        %s818 = scalar_lea.sflag [#allocation4], %s817
        %s819 = sand.u32 %s469, 1
        %s820 = smul.addr %s819, 16
        %s821 = scalar_lea.vmem [#allocation13], %s820
        %p822 = pneg %p508
        %p823 = pneg %p505
        %s824 = sand.u32 %s47, 1
        %s825 = scalar_lea.sflag [#allocation15], %s824
        %s826 = sand.u32 %s495, 1
        %s827 = smul.addr %s826, 16
        %s828 = scalar_lea.vmem [#allocation14], %s827
        %p829 = pneg %p534
        %p830 = pneg %p531
        %s831 = sand.u32 %s47, 1
        %s832 = scalar_lea.sflag [#allocation15], %s831
        %s833 = sand.u32 %s521, 1
        %s834 = smul.addr %s833, 32
        %s835 = scalar_lea.vmem [#allocation16], %s834
        %s836 = smul.u32 2, %s47
        %s837 = ssub.s32 3, %s836
        %p838 = scmp.lt.s32.totalorder %s837, 2
        %s839 = scalar_select %p838, %s837, 2
        %s840 = smul.u32 128, %s839
        %s841 = smul.u32 2, %s47
        %s842 = ssub.s32 3, %s841
        %p843 = scmp.lt.s32.totalorder %s842, 2
        %s844 = scalar_select %p843, %s842, 2
        %s845 = smul.u32 128, %s844
        %s846 = smul.u32 2, %s47
        %s847 = ssub.s32 3, %s846
        %p848 = scmp.lt.s32.totalorder %s847, 2
        %s849 = scalar_select %p848, %s847, 2
        %s850 = smul.u32 128, %s849
        %s851 = smul.u32 %s850, 2
        %p852 = scmp.lt.s32.totalorder %s846, 2
        %s853 = scalar_select %p852, %s846, 2
        %s854 = smul.addr %s853, 2
        %s855 = smul.addr %s854, 8
        %s856 = scalar_lea.vmem %s10, %s855
        %s857 = smul.u32 2, %s47
        %s858 = ssub.s32 3, %s857
        %p859 = scmp.lt.s32.totalorder %s858, 2
        %s860 = scalar_select %p859, %s858, 2
        %s861 = smul.u32 128, %s860
        %s862 = smul.u32 %s861, 2
        %s863 = smul.u32 2, %s47
        %s864 = ssub.s32 3, %s863
        %p865 = scmp.lt.s32.totalorder %s864, 2
        %s866 = scalar_select %p865, %s864, 2
        %s867 = smul.u32 128, %s866
        %s868 = smul.u32 2, %s47
        %s869 = ssub.s32 3, %s868
        %p870 = scmp.lt.s32.totalorder %s869, 2
        %s871 = scalar_select %p870, %s869, 2
        %s872 = smul.u32 128, %s871
        %s873 = smul.u32 2, %s47
        %s874 = ssub.s32 3, %s873
        %p875 = scmp.lt.s32.totalorder %s874, 2
        %s876 = scalar_select %p875, %s874, 2
        %s877 = smul.u32 128, %s876
        %s878 = smul.u32 %s877, 2
        %v879 = vld [vmem:[%s726] sm:$0xff]
        %v880 = vld [vmem:[%s726 + $0x8] sm:$0xff]
        %v881 = vld [vmem:[%s735] sm:$0xff]
        %v882 = vld [vmem:[%s735 + $0x8] sm:$0xff]
        %v883 = vld [vmem:[%s2] sm:$0xff]
        %v884 = vld [vmem:[%s2 + $0x8] sm:$0xff]
        %v885 = vld [vmem:[%s2 + $0x10] sm:$0xff]
        %v886 = vld [vmem:[%s2 + $0x18] sm:$0xff]
        %v887 = vld [vmem:[%s2 + $0x20] sm:$0xff]
        %v888 = vld [vmem:[%s2 + $0x28] sm:$0xff]
        %v889 = vld [vmem:[%s2 + $0x30] sm:$0xff]
        %v890 = vld [vmem:[%s2 + $0x38] sm:$0xff]
        %v891 = vld [vmem:[%s2 + $0x40] sm:$0xff]
        %v892 = vld [vmem:[%s2 + $0x48] sm:$0xff]
        %v893 = vld [vmem:[%s2 + $0x50] sm:$0xff]
        %v894 = vld [vmem:[%s2 + $0x58] sm:$0xff]
        %vm895 = vcmask 785408
        %v897 = vsel %vm895, %v881, 0
        %v900 = vsel %vm895, %v882, 0
        %902 = vmatprep.subr.mxu0 0.0
        %903 = vmatpush1.msra.mxu0 %v883
        %904 = vmatprep.subr.mxu0 0.0
        %905 = vmatpush1.msra.mxu0 %v884
        %906 = vmatprep.subr.mxu0 0.0
        %907 = vmatpush1.msra.mxu0 %v885
        %908 = vmatprep.subr.mxu0 0.0
        %909 = vmatpush1.msra.mxu0 %v886
        %910 = vmatprep.subr.mxu0 0.0
        %911 = vmatpush1.msra.mxu0 %v887
        %912 = vmatprep.subr.mxu0 0.0
        %913 = vmatpush1.msra.mxu0 %v888
        %914 = vmatprep.subr.mxu0 0.0
        %915 = vmatpush1.msra.mxu0 %v889
        %916 = vmatprep.subr.mxu0 0.0
        %917 = vmatpush1.msra.mxu0 %v890
        %918 = vmatprep.subr.mxu0 0.0
        %919 = vmatpush1.msra.mxu0 %v891
        %920 = vmatprep.subr.mxu0 0.0
        %921 = vmatpush1.msra.mxu0 %v892
        %922 = vmatprep.subr.mxu0 0.0
        %923 = vmatpush1.msra.mxu0 %v893
        %924 = vmatprep.subr.mxu0 0.0
        %925 = vmatpush1.msra.mxu0 %v894
        %926 = vmatprep.subr.mxu0 0.0
        %927 = vmatpush1.msra.mxu0 0.0
        %928 = vmatprep.subr.mxu0 0.0
        %929 = vmatpush1.msra.mxu0 0.0
        %930 = vmatprep.subr.mxu0 0.0
        %931 = vmatpush1.msra.mxu0 0.0
        %932 = vmatprep.subr.mxu0 0.0
        %933 = vmatpush1.msra.mxu0 0.0
        %934 = vmatprep.subr.mxu0 0.0
        %935 = vmatpush1.msra.mxu0 0.0
        %936 = vmatprep.subr.mxu0 0.0
        %937 = vmatpush1.msra.mxu0 0.0
        %938 = vmatprep.subr.mxu0 0.0
        %939 = vmatpush1.msra.mxu0 0.0
        %940 = vmatprep.subr.mxu0 0.0
        %941 = vmatpush1.msra.mxu0 0.0
        %942 = vmatprep.subr.mxu0 0.0
        %943 = vmatpush1.msra.mxu0 0.0
        %944 = vmatprep.subr.mxu0 0.0
        %945 = vmatpush1.msra.mxu0 0.0
        %946 = vmatprep.subr.mxu0 0.0
        %947 = vmatpush1.msra.mxu0 0.0
        %948 = vmatprep.subr.mxu0 0.0
        %949 = vmatpush1.msra.mxu0 0.0
        %950 = vmatprep.subr.mxu0 0.0
        %951 = vmatpush1.msra.mxu0 0.0
        %952 = vmatprep.subr.mxu0 0.0
        %953 = vmatpush1.msra.mxu0 0.0
        %954 = vmatprep.subr.mxu0 0.0
        %955 = vmatpush1.msra.mxu0 0.0
        %956 = vmatprep.subr.mxu0 0.0
        %957 = vmatpush1.msra.mxu0 0.0
        %958 = vmatprep.subr.mxu0 0.0
        %959 = vmatpush1.msra.mxu0 0.0
        %960 = vmatprep.subr.mxu0 0.0
        %961 = vmatpush1.msra.mxu0 0.0
        %962 = vmatprep.subr.mxu0 0.0
        %963 = vmatpush1.msra.mxu0 0.0
        %964 = vmatprep.subr.mxu0 0.0
        %965 = vmatpush1.msra.mxu0 0.0
        %966 = vmatprep.mubr.f32.mxu0 0.0
        %967 = vmatmul.mubr.f32.gmra.mrb[0].mxu0 %v897
        %v968 = vpop.f32.mrb[0].mxu0
        %v969 = vadd.f32 0.0, %v968
        %v970 = vpop.f32.mrb[0].mxu0
        %971 = vmatprep.mubr.f32.mxu0 0.0
        %972 = vmatmul.mubr.f32.gmra.mrb[0].mxu0 %v900
        %v973 = vpop.f32.mrb[0].mxu0
        %v974 = vadd.f32 0.0, %v973
        %v975 = vpop.f32.mrb[0].mxu0
        %976 = vdwg.mxu0
        %v977 = vmul.f32 %v969, %v969
        %v978 = vmul.f32 %v974, %v974
        %v979 = vld [vmem:[%s3] sm:$0xff]
        %v980 = vld [vmem:[%s3 + $0x8] sm:$0xff]
        %v981 = vld [vmem:[%s3 + $0x10] sm:$0xff]
        %v982 = vld [vmem:[%s3 + $0x18] sm:$0xff]
        %v983 = vld [vmem:[%s3 + $0x20] sm:$0xff]
        %v984 = vld [vmem:[%s3 + $0x28] sm:$0xff]
        %v985 = vld [vmem:[%s3 + $0x30] sm:$0xff]
        %v986 = vld [vmem:[%s3 + $0x38] sm:$0xff]
        %v987 = vld [vmem:[%s3 + $0x40] sm:$0xff]
        %v988 = vld [vmem:[%s3 + $0x48] sm:$0xff]
        %v989 = vld [vmem:[%s3 + $0x50] sm:$0xff]
        %v990 = vld [vmem:[%s3 + $0x58] sm:$0xff]
        %v992 = vsel %vm895, %v977, 0
        %v995 = vsel %vm895, %v978, 0
        %997 = vmatprep.subr.mxu0 0.0
        %998 = vmatpush1.msra.mxu0 %v979
        %999 = vmatprep.subr.mxu0 0.0
        %1000 = vmatpush1.msra.mxu0 %v980
        %1001 = vmatprep.subr.mxu0 0.0
        %1002 = vmatpush1.msra.mxu0 %v981
        %1003 = vmatprep.subr.mxu0 0.0
        %1004 = vmatpush1.msra.mxu0 %v982
        %1005 = vmatprep.subr.mxu0 0.0
        %1006 = vmatpush1.msra.mxu0 %v983
        %1007 = vmatprep.subr.mxu0 0.0
        %1008 = vmatpush1.msra.mxu0 %v984
        %1009 = vmatprep.subr.mxu0 0.0
        %1010 = vmatpush1.msra.mxu0 %v985
        %1011 = vmatprep.subr.mxu0 0.0
        %1012 = vmatpush1.msra.mxu0 %v986
        %1013 = vmatprep.subr.mxu0 0.0
        %1014 = vmatpush1.msra.mxu0 %v987
        %1015 = vmatprep.subr.mxu0 0.0
        %1016 = vmatpush1.msra.mxu0 %v988
        %1017 = vmatprep.subr.mxu0 0.0
        %1018 = vmatpush1.msra.mxu0 %v989
        %1019 = vmatprep.subr.mxu0 0.0
        %1020 = vmatpush1.msra.mxu0 %v990
        %1021 = vmatprep.subr.mxu0 0.0
        %1022 = vmatpush1.msra.mxu0 0.0
        %1023 = vmatprep.subr.mxu0 0.0
        %1024 = vmatpush1.msra.mxu0 0.0
        %1025 = vmatprep.subr.mxu0 0.0
        %1026 = vmatpush1.msra.mxu0 0.0
        %1027 = vmatprep.subr.mxu0 0.0
        %1028 = vmatpush1.msra.mxu0 0.0
        %1029 = vmatprep.subr.mxu0 0.0
        %1030 = vmatpush1.msra.mxu0 0.0
        %1031 = vmatprep.subr.mxu0 0.0
        %1032 = vmatpush1.msra.mxu0 0.0
        %1033 = vmatprep.subr.mxu0 0.0
        %1034 = vmatpush1.msra.mxu0 0.0
        %1035 = vmatprep.subr.mxu0 0.0
        %1036 = vmatpush1.msra.mxu0 0.0
        %1037 = vmatprep.subr.mxu0 0.0
        %1038 = vmatpush1.msra.mxu0 0.0
        %1039 = vmatprep.subr.mxu0 0.0
        %1040 = vmatpush1.msra.mxu0 0.0
        %1041 = vmatprep.subr.mxu0 0.0
        %1042 = vmatpush1.msra.mxu0 0.0
        %1043 = vmatprep.subr.mxu0 0.0
        %1044 = vmatpush1.msra.mxu0 0.0
        %1045 = vmatprep.subr.mxu0 0.0
        %1046 = vmatpush1.msra.mxu0 0.0
        %1047 = vmatprep.subr.mxu0 0.0
        %1048 = vmatpush1.msra.mxu0 0.0
        %1049 = vmatprep.subr.mxu0 0.0
        %1050 = vmatpush1.msra.mxu0 0.0
        %1051 = vmatprep.subr.mxu0 0.0
        %1052 = vmatpush1.msra.mxu0 0.0
        %1053 = vmatprep.subr.mxu0 0.0
        %1054 = vmatpush1.msra.mxu0 0.0
        %1055 = vmatprep.subr.mxu0 0.0
        %1056 = vmatpush1.msra.mxu0 0.0
        %1057 = vmatprep.subr.mxu0 0.0
        %1058 = vmatpush1.msra.mxu0 0.0
        %1059 = vmatprep.subr.mxu0 0.0
        %1060 = vmatpush1.msra.mxu0 0.0
        %1061 = vmatprep.mubr.f32.mxu0 0.0
        %1062 = vmatmul.mubr.f32.gmra.mrb[0].mxu0 %v992
        %v1063 = vpop.f32.mrb[0].mxu0
        %v1064 = vadd.f32 0.0, %v1063
        %v1065 = vpop.f32.mrb[0].mxu0
        %1066 = vmatprep.mubr.f32.mxu0 0.0
        %1067 = vmatmul.mubr.f32.gmra.mrb[0].mxu0 %v995
        %v1068 = vpop.f32.mrb[0].mxu0
        %v1069 = vadd.f32 0.0, %v1068
        %v1070 = vpop.f32.mrb[0].mxu0
        %1071 = vdwg.mxu0
        %v1072 = vrsqrt.pop %v1064
        %v1073 = vmul.f32 %v1064, %v1072
        %vm1074 = vcmp.eq.f32.partialorder %v1064, inf
        %v1075 = vsel %vm1074, %v1064, %v1073
        %vm1076 = vcmp.eq.f32.partialorder %v1064, 0.0
        %v1077 = vand.u32 %v1064, 2147483648
        %v1078 = vsel %vm1076, %v1077, %v1075
        %v1079 = vrsqrt.pop %v1069
        %v1080 = vmul.f32 %v1069, %v1079
        %vm1081 = vcmp.eq.f32.partialorder %v1069, inf
        %v1082 = vsel %vm1081, %v1069, %v1080
        %vm1083 = vcmp.eq.f32.partialorder %v1069, 0.0
        %v1084 = vand.u32 %v1069, 2147483648
        %v1085 = vsel %vm1083, %v1084, %v1082
        %v1086 = vld [vmem:[#allocation8] sm:$0xff]
        %v1087 = vld [vmem:[#allocation8 + $0x8] sm:$0xff]
        %v1088 = vld [vmem:[#allocation8 + $0x10] sm:$0xff]
        %v1089 = vld [vmem:[#allocation8 + $0x18] sm:$0xff]
        %v1090 = vld [vmem:[#allocation10] sm:$0xff]
        %v1091 = vld [vmem:[#allocation10 + $0x8] sm:$0xff]
        %v1092 = vld [vmem:[#allocation10 + $0x10] sm:$0xff]
        %v1093 = vld [vmem:[#allocation10 + $0x18] sm:$0xff]
        %vm1094 = vcmask 261120
        %v1096 = vsel %vm1094, %v1078, 0
        %v1099 = vsel %vm1094, %v1085, 0
        %1101 = vmatprep.subr.mxu0 0.0
        %1102 = vmatpush1.msra.mxu0 %v1090
        %1103 = vmatprep.subr.mxu0 0.0
        %1104 = vmatpush1.msra.mxu0 %v1091
        %1105 = vmatprep.subr.mxu0 0.0
        %1106 = vmatpush1.msra.mxu0 %v1092
        %1107 = vmatprep.subr.mxu0 0.0
        %1108 = vmatpush1.msra.mxu0 %v1093
        %1109 = vmatprep.subr.mxu0 0.0
        %1110 = vmatpush1.msra.mxu0 0.0
        %1111 = vmatprep.subr.mxu0 0.0
        %1112 = vmatpush1.msra.mxu0 0.0
        %1113 = vmatprep.subr.mxu0 0.0
        %1114 = vmatpush1.msra.mxu0 0.0
        %1115 = vmatprep.subr.mxu0 0.0
        %1116 = vmatpush1.msra.mxu0 0.0
        %1117 = vmatprep.subr.mxu0 0.0
        %1118 = vmatpush1.msra.mxu0 0.0
        %1119 = vmatprep.subr.mxu0 0.0
        %1120 = vmatpush1.msra.mxu0 0.0
        %1121 = vmatprep.subr.mxu0 0.0
        %1122 = vmatpush1.msra.mxu0 0.0
        %1123 = vmatprep.subr.mxu0 0.0
        %1124 = vmatpush1.msra.mxu0 0.0
        %1125 = vmatprep.subr.mxu0 0.0
        %1126 = vmatpush1.msra.mxu0 0.0
        %1127 = vmatprep.subr.mxu0 0.0
        %1128 = vmatpush1.msra.mxu0 0.0
        %1129 = vmatprep.subr.mxu0 0.0
        %1130 = vmatpush1.msra.mxu0 0.0
        %1131 = vmatprep.subr.mxu0 0.0
        %1132 = vmatpush1.msra.mxu0 0.0
        %1133 = vmatprep.subr.mxu0 0.0
        %1134 = vmatpush1.msra.mxu0 0.0
        %1135 = vmatprep.subr.mxu0 0.0
        %1136 = vmatpush1.msra.mxu0 0.0
        %1137 = vmatprep.subr.mxu0 0.0
        %1138 = vmatpush1.msra.mxu0 0.0
        %1139 = vmatprep.subr.mxu0 0.0
        %1140 = vmatpush1.msra.mxu0 0.0
        %1141 = vmatprep.subr.mxu0 0.0
        %1142 = vmatpush1.msra.mxu0 0.0
        %1143 = vmatprep.subr.mxu0 0.0
        %1144 = vmatpush1.msra.mxu0 0.0
        %1145 = vmatprep.subr.mxu0 0.0
        %1146 = vmatpush1.msra.mxu0 0.0
        %1147 = vmatprep.subr.mxu0 0.0
        %1148 = vmatpush1.msra.mxu0 0.0
        %1149 = vmatprep.subr.mxu0 0.0
        %1150 = vmatpush1.msra.mxu0 0.0
        %1151 = vmatprep.subr.mxu0 0.0
        %1152 = vmatpush1.msra.mxu0 0.0
        %1153 = vmatprep.subr.mxu0 0.0
        %1154 = vmatpush1.msra.mxu0 0.0
        %1155 = vmatprep.subr.mxu0 0.0
        %1156 = vmatpush1.msra.mxu0 0.0
        %1157 = vmatprep.subr.mxu0 0.0
        %1158 = vmatpush1.msra.mxu0 0.0
        %1159 = vmatprep.subr.mxu0 0.0
        %1160 = vmatpush1.msra.mxu0 0.0
        %1161 = vmatprep.subr.mxu0 0.0
        %1162 = vmatpush1.msra.mxu0 0.0
        %1163 = vmatprep.subr.mxu0 0.0
        %1164 = vmatpush1.msra.mxu0 0.0
        %1165 = vmatprep.mubr.f32.mxu0 0.0
        %1166 = vmatmul.mubr.f32.gmra.mrb[0].mxu0 %v1096
        %v1167 = vpop.f32.mrb[0].mxu0
        %v1168 = vadd.f32 0.0, %v1167
        %v1169 = vpop.f32.mrb[0].mxu0
        %1170 = vmatprep.mubr.f32.mxu0 0.0
        %1171 = vmatmul.mubr.f32.gmra.mrb[0].mxu0 %v1099
        %v1172 = vpop.f32.mrb[0].mxu0
        %v1173 = vadd.f32 0.0, %v1172
        %v1174 = vpop.f32.mrb[0].mxu0
        %1175 = vdwg.mxu0
        %v1177 = vsel %vm1094, %v879, 0
        %v1180 = vsel %vm1094, %v880, 0
        %1182 = vmatprep.subr.mxu0 0.0
        %1183 = vmatpush1.msra.mxu0 %v1086
        %1184 = vmatprep.subr.mxu0 0.0
        %1185 = vmatpush1.msra.mxu0 %v1087
        %1186 = vmatprep.subr.mxu0 0.0
        %1187 = vmatpush1.msra.mxu0 %v1088
        %1188 = vmatprep.subr.mxu0 0.0
        %1189 = vmatpush1.msra.mxu0 %v1089
        %1190 = vmatprep.subr.mxu0 0.0
        %1191 = vmatpush1.msra.mxu0 0.0
        %1192 = vmatprep.subr.mxu0 0.0
        %1193 = vmatpush1.msra.mxu0 0.0
        %1194 = vmatprep.subr.mxu0 0.0
        %1195 = vmatpush1.msra.mxu0 0.0
        %1196 = vmatprep.subr.mxu0 0.0
        %1197 = vmatpush1.msra.mxu0 0.0
        %1198 = vmatprep.subr.mxu0 0.0
        %1199 = vmatpush1.msra.mxu0 0.0
        %1200 = vmatprep.subr.mxu0 0.0
        %1201 = vmatpush1.msra.mxu0 0.0
        %1202 = vmatprep.subr.mxu0 0.0
        %1203 = vmatpush1.msra.mxu0 0.0
        %1204 = vmatprep.subr.mxu0 0.0
        %1205 = vmatpush1.msra.mxu0 0.0
        %1206 = vmatprep.subr.mxu0 0.0
        %1207 = vmatpush1.msra.mxu0 0.0
        %1208 = vmatprep.subr.mxu0 0.0
        %1209 = vmatpush1.msra.mxu0 0.0
        %1210 = vmatprep.subr.mxu0 0.0
        %1211 = vmatpush1.msra.mxu0 0.0
        %1212 = vmatprep.subr.mxu0 0.0
        %1213 = vmatpush1.msra.mxu0 0.0
        %1214 = vmatprep.subr.mxu0 0.0
        %1215 = vmatpush1.msra.mxu0 0.0
        %1216 = vmatprep.subr.mxu0 0.0
        %1217 = vmatpush1.msra.mxu0 0.0
        %1218 = vmatprep.subr.mxu0 0.0
        %1219 = vmatpush1.msra.mxu0 0.0
        %1220 = vmatprep.subr.mxu0 0.0
        %1221 = vmatpush1.msra.mxu0 0.0
        %1222 = vmatprep.subr.mxu0 0.0
        %1223 = vmatpush1.msra.mxu0 0.0
        %1224 = vmatprep.subr.mxu0 0.0
        %1225 = vmatpush1.msra.mxu0 0.0
        %1226 = vmatprep.subr.mxu0 0.0
        %1227 = vmatpush1.msra.mxu0 0.0
        %1228 = vmatprep.subr.mxu0 0.0
        %1229 = vmatpush1.msra.mxu0 0.0
        %1230 = vmatprep.subr.mxu0 0.0
        %1231 = vmatpush1.msra.mxu0 0.0
        %1232 = vmatprep.subr.mxu0 0.0
        %1233 = vmatpush1.msra.mxu0 0.0
        %1234 = vmatprep.subr.mxu0 0.0
        %1235 = vmatpush1.msra.mxu0 0.0
        %1236 = vmatprep.subr.mxu0 0.0
        %1237 = vmatpush1.msra.mxu0 0.0
        %1238 = vmatprep.subr.mxu0 0.0
        %1239 = vmatpush1.msra.mxu0 0.0
        %1240 = vmatprep.subr.mxu0 0.0
        %1241 = vmatpush1.msra.mxu0 0.0
        %1242 = vmatprep.subr.mxu0 0.0
        %1243 = vmatpush1.msra.mxu0 0.0
        %1244 = vmatprep.subr.mxu0 0.0
        %1245 = vmatpush1.msra.mxu0 0.0
        %1246 = vmatprep.mubr.f32.mxu0 0.0
        %1247 = vmatmul.mubr.f32.gmra.mrb[0].mxu0 %v1177
        %v1248 = vpop.f32.mrb[0].mxu0
        %v1249 = vadd.f32 %v1168, %v1248
        %v1250 = vpop.f32.mrb[0].mxu0
        %1251 = vmatprep.mubr.f32.mxu0 0.0
        %1252 = vmatmul.mubr.f32.gmra.mrb[0].mxu0 %v1180
        %v1253 = vpop.f32.mrb[0].mxu0
        %v1254 = vadd.f32 %v1173, %v1253
        %v1255 = vpop.f32.mrb[0].mxu0
        %1256 = vdwg.mxu0
        %v1257 = vld [vmem:[%s7] sm:$0x1]
        %v1259 = vlaneseq
        %v1260 = vshrl.u32 %v1259, 7
        %v1261 = vsub.s32 0, %v1260
        %v1262 = vrot.slane %v1257, %v1261
        %v1264 = vadd.f32 %v1249, %v1262
        %v1265 = vadd.f32 %v1254, %v1262
        %v1266 = vxor.u32 %v1264, 2147483648
        %v1267 = vxor.u32 %v1265, 2147483648
        %v1268 = vmul.f32 %v1266, 1.442695
        %v1269 = vpow.pop %v1268
        %v1270 = vmul.f32 %v1267, 1.442695
        %v1271 = vpow.pop %v1270
        %v1272 = vadd.f32 %v1269, 1.0
        %v1273 = vadd.f32 %v1271, 1.0
        %v1274 = vrcp.pop %v1272
        %v1275 = vmul.f32 1.0, %v1274
        %v1276 = vrcp.pop %v1273
        %v1277 = vmul.f32 1.0, %v1276
        %v1278 = vmul.f32 %v1264, %v1275
        %v1279 = vmul.f32 %v1265, %v1277
        %v1280 = vld [vmem:[%s8] sm:$0xff]
        %v1281 = vld [vmem:[%s8 + $0x8] sm:$0xff]
        %v1282 = vld [vmem:[%s8 + $0x10] sm:$0xff]
        %v1283 = vld [vmem:[%s8 + $0x18] sm:$0xff]
        %v1284 = vld [vmem:[%s8 + $0x20] sm:$0xff]
        %v1285 = vld [vmem:[%s8 + $0x28] sm:$0xff]
        %v1286 = vld [vmem:[%s8 + $0x30] sm:$0xff]
        %v1287 = vld [vmem:[%s8 + $0x38] sm:$0xff]
        %v1288 = vld [vmem:[%s8 + $0x40] sm:$0xff]
        %v1289 = vld [vmem:[%s8 + $0x48] sm:$0xff]
        %v1290 = vld [vmem:[%s8 + $0x50] sm:$0xff]
        %v1291 = vld [vmem:[%s8 + $0x58] sm:$0xff]
        %v1292 = vld [vmem:[%s8 + $0x60] sm:$0xff]
        %v1293 = vld [vmem:[%s8 + $0x68] sm:$0xff]
        %v1294 = vld [vmem:[%s8 + $0x70] sm:$0xff]
        %v1295 = vld [vmem:[%s8 + $0x78] sm:$0xff]
        %v1296 = vld [vmem:[%s9] sm:$0x1]
        %v1298 = vlaneseq
        %v1299 = vshrl.u32 %v1298, 7
        %v1300 = vsub.s32 0, %v1299
        %v1301 = vrot.slane %v1296, %v1300
        %1303 = vmatprep.subr.mxu0 0.0
        %1304 = vmatpush1.msra.mxu0 %v1280
        %1305 = vmatprep.subr.mxu0 0.0
        %1306 = vmatpush1.msra.mxu0 %v1281
        %1307 = vmatprep.subr.mxu0 0.0
        %1308 = vmatpush1.msra.mxu0 %v1282
        %1309 = vmatprep.subr.mxu0 0.0
        %1310 = vmatpush1.msra.mxu0 %v1283
        %1311 = vmatprep.subr.mxu0 0.0
        %1312 = vmatpush1.msra.mxu0 %v1284
        %1313 = vmatprep.subr.mxu0 0.0
        %1314 = vmatpush1.msra.mxu0 %v1285
        %1315 = vmatprep.subr.mxu0 0.0
        %1316 = vmatpush1.msra.mxu0 %v1286
        %1317 = vmatprep.subr.mxu0 0.0
        %1318 = vmatpush1.msra.mxu0 %v1287
        %1319 = vmatprep.subr.mxu0 0.0
        %1320 = vmatpush1.msra.mxu0 %v1288
        %1321 = vmatprep.subr.mxu0 0.0
        %1322 = vmatpush1.msra.mxu0 %v1289
        %1323 = vmatprep.subr.mxu0 0.0
        %1324 = vmatpush1.msra.mxu0 %v1290
        %1325 = vmatprep.subr.mxu0 0.0
        %1326 = vmatpush1.msra.mxu0 %v1291
        %1327 = vmatprep.subr.mxu0 0.0
        %1328 = vmatpush1.msra.mxu0 %v1292
        %1329 = vmatprep.subr.mxu0 0.0
        %1330 = vmatpush1.msra.mxu0 %v1293
        %1331 = vmatprep.subr.mxu0 0.0
        %1332 = vmatpush1.msra.mxu0 %v1294
        %1333 = vmatprep.subr.mxu0 0.0
        %1334 = vmatpush1.msra.mxu0 %v1295
        %1335 = vmatprep.subr.mxu0 0.0
        %1336 = vmatpush1.msra.mxu0 0.0
        %1337 = vmatprep.subr.mxu0 0.0
        %1338 = vmatpush1.msra.mxu0 0.0
        %1339 = vmatprep.subr.mxu0 0.0
        %1340 = vmatpush1.msra.mxu0 0.0
        %1341 = vmatprep.subr.mxu0 0.0
        %1342 = vmatpush1.msra.mxu0 0.0
        %1343 = vmatprep.subr.mxu0 0.0
        %1344 = vmatpush1.msra.mxu0 0.0
        %1345 = vmatprep.subr.mxu0 0.0
        %1346 = vmatpush1.msra.mxu0 0.0
        %1347 = vmatprep.subr.mxu0 0.0
        %1348 = vmatpush1.msra.mxu0 0.0
        %1349 = vmatprep.subr.mxu0 0.0
        %1350 = vmatpush1.msra.mxu0 0.0
        %1351 = vmatprep.subr.mxu0 0.0
        %1352 = vmatpush1.msra.mxu0 0.0
        %1353 = vmatprep.subr.mxu0 0.0
        %1354 = vmatpush1.msra.mxu0 0.0
        %1355 = vmatprep.subr.mxu0 0.0
        %1356 = vmatpush1.msra.mxu0 0.0
        %1357 = vmatprep.subr.mxu0 0.0
        %1358 = vmatpush1.msra.mxu0 0.0
        %1359 = vmatprep.subr.mxu0 0.0
        %1360 = vmatpush1.msra.mxu0 0.0
        %1361 = vmatprep.subr.mxu0 0.0
        %1362 = vmatpush1.msra.mxu0 0.0
        %1363 = vmatprep.subr.mxu0 0.0
        %1364 = vmatpush1.msra.mxu0 0.0
        %1365 = vmatprep.subr.mxu0 0.0
        %1366 = vmatpush1.msra.mxu0 0.0
        %1367 = vmatprep.mubr.f32.mxu0 0.0
        %1368 = vmatmul.mubr.f32.gmra.mrb[0].mxu0 %v1278
        %v1369 = vpop.f32.mrb[0].mxu0
        %v1370 = vadd.f32 %v1301, %v1369
        %v1371 = vpop.f32.mrb[0].mxu0
        %1372 = vmatprep.mubr.f32.mxu0 0.0
        %1373 = vmatmul.mubr.f32.gmra.mrb[0].mxu0 %v1279
        %v1374 = vpop.f32.mrb[0].mxu0
        %v1375 = vadd.f32 %v1301, %v1374
        %v1376 = vpop.f32.mrb[0].mxu0
        %1377 = vdwg.mxu0
        %v1378 = vadd.f32 %v1370, 0.0
        %v1379 = vadd.f32 %v1375, 0.0
        %v1380 = vld [vmem:[#allocation7] sm:$0xff]
        %v1381 = vld [vmem:[#allocation7 + $0x8] sm:$0xff]
        %v1382 = vld [vmem:[#allocation7 + $0x10] sm:$0xff]
        %v1383 = vld [vmem:[#allocation7 + $0x18] sm:$0xff]
        %1386 = vrot.lane.b32.xlu0 %v1370, 96
        %v1387 = vpop.permute.xlu0 %1386
        %1388 = vrot.lane.b32.xlu0 %v1375, 96
        %v1389 = vpop.permute.xlu0 %1388
        %v1390 = vsel %vm1094, %v1387, 0
        %v1392 = vsel %vm1094, %v1389, 0
        %1394 = vmatprep.subr.mxu0 0.0
        %1395 = vmatpush1.msra.mxu0 %v1380
        %1396 = vmatprep.subr.mxu0 0.0
        %1397 = vmatpush1.msra.mxu0 %v1381
        %1398 = vmatprep.subr.mxu0 0.0
        %1399 = vmatpush1.msra.mxu0 %v1382
        %1400 = vmatprep.subr.mxu0 0.0
        %1401 = vmatpush1.msra.mxu0 %v1383
        %1402 = vmatprep.subr.mxu0 0.0
        %1403 = vmatpush1.msra.mxu0 0.0
        %1404 = vmatprep.subr.mxu0 0.0
        %1405 = vmatpush1.msra.mxu0 0.0
        %1406 = vmatprep.subr.mxu0 0.0
        %1407 = vmatpush1.msra.mxu0 0.0
        %1408 = vmatprep.subr.mxu0 0.0
        %1409 = vmatpush1.msra.mxu0 0.0
        %1410 = vmatprep.subr.mxu0 0.0
        %1411 = vmatpush1.msra.mxu0 0.0
        %1412 = vmatprep.subr.mxu0 0.0
        %1413 = vmatpush1.msra.mxu0 0.0
        %1414 = vmatprep.subr.mxu0 0.0
        %1415 = vmatpush1.msra.mxu0 0.0
        %1416 = vmatprep.subr.mxu0 0.0
        %1417 = vmatpush1.msra.mxu0 0.0
        %1418 = vmatprep.subr.mxu0 0.0
        %1419 = vmatpush1.msra.mxu0 0.0
        %1420 = vmatprep.subr.mxu0 0.0
        %1421 = vmatpush1.msra.mxu0 0.0
        %1422 = vmatprep.subr.mxu0 0.0
        %1423 = vmatpush1.msra.mxu0 0.0
        %1424 = vmatprep.subr.mxu0 0.0
        %1425 = vmatpush1.msra.mxu0 0.0
        %1426 = vmatprep.subr.mxu0 0.0
        %1427 = vmatpush1.msra.mxu0 0.0
        %1428 = vmatprep.subr.mxu0 0.0
        %1429 = vmatpush1.msra.mxu0 0.0
        %1430 = vmatprep.subr.mxu0 0.0
        %1431 = vmatpush1.msra.mxu0 0.0
        %1432 = vmatprep.subr.mxu0 0.0
        %1433 = vmatpush1.msra.mxu0 0.0
        %1434 = vmatprep.subr.mxu0 0.0
        %1435 = vmatpush1.msra.mxu0 0.0
        %1436 = vmatprep.subr.mxu0 0.0
        %1437 = vmatpush1.msra.mxu0 0.0
        %1438 = vmatprep.subr.mxu0 0.0
        %1439 = vmatpush1.msra.mxu0 0.0
        %1440 = vmatprep.subr.mxu0 0.0
        %1441 = vmatpush1.msra.mxu0 0.0
        %1442 = vmatprep.subr.mxu0 0.0
        %1443 = vmatpush1.msra.mxu0 0.0
        %1444 = vmatprep.subr.mxu0 0.0
        %1445 = vmatpush1.msra.mxu0 0.0
        %1446 = vmatprep.subr.mxu0 0.0
        %1447 = vmatpush1.msra.mxu0 0.0
        %1448 = vmatprep.subr.mxu0 0.0
        %1449 = vmatpush1.msra.mxu0 0.0
        %1450 = vmatprep.subr.mxu0 0.0
        %1451 = vmatpush1.msra.mxu0 0.0
        %1452 = vmatprep.subr.mxu0 0.0
        %1453 = vmatpush1.msra.mxu0 0.0
        %1454 = vmatprep.subr.mxu0 0.0
        %1455 = vmatpush1.msra.mxu0 0.0
        %1456 = vmatprep.subr.mxu0 0.0
        %1457 = vmatpush1.msra.mxu0 0.0
        %1458 = vmatprep.mubr.f32.mxu0 0.0
        %1459 = vmatmul.mubr.f32.gmra.mrb[0].mxu0 %v1390
        %v1460 = vpop.f32.mrb[0].mxu0
        %v1461 = vadd.f32 0.0, %v1460
        %v1462 = vpop.f32.mrb[0].mxu0
        %1463 = vmatprep.mubr.f32.mxu0 0.0
        %1464 = vmatmul.mubr.f32.gmra.mrb[0].mxu0 %v1392
        %v1465 = vpop.f32.mrb[0].mxu0
        %v1466 = vadd.f32 0.0, %v1465
        %v1467 = vpop.f32.mrb[0].mxu0
        %1468 = vdwg.mxu0
        %v1469 = vmul.f32 %v969, %v1461
        %v1470 = vmul.f32 %v974, %v1466
        %1471 = vst.msk [vmem:[%s828] sm:$0xff] %vm895, %v1469
        %1472 = vst.msk [vmem:[%s828 + $0x8] sm:$0xff] %vm895, %v1470
        %v1473 = vld [vmem:[%s856] sm:$0xff]
        %v1474 = vld [vmem:[%s856 + $0x8] sm:$0xff]
        %v1475 = vld [vmem:[%s856 + $0x10] sm:$0xff]
        %v1476 = vld [vmem:[%s856 + $0x18] sm:$0xff]
        %v1477 = vld [vmem:[%s11] sm:$0xff]
        %v1478 = vld [vmem:[%s11 + $0x8] sm:$0xff]
        %v1479 = vld [vmem:[%s11 + $0x10] sm:$0xff]
        %v1480 = vld [vmem:[%s11 + $0x18] sm:$0xff]
        %v1481 = vld [vmem:[%s11 + $0x20] sm:$0xff]
        %v1482 = vld [vmem:[%s11 + $0x28] sm:$0xff]
        %v1483 = vld [vmem:[%s11 + $0x30] sm:$0xff]
        %v1484 = vld [vmem:[%s11 + $0x38] sm:$0xff]
        %v1485 = vld [vmem:[%s11 + $0x40] sm:$0xff]
        %v1486 = vld [vmem:[%s11 + $0x48] sm:$0xff]
        %v1487 = vld [vmem:[%s11 + $0x50] sm:$0xff]
        %v1488 = vld [vmem:[%s11 + $0x58] sm:$0xff]
        %v1489 = vld [vmem:[%s11 + $0x60] sm:$0xff]
        %v1490 = vld [vmem:[%s11 + $0x68] sm:$0xff]
        %v1491 = vld [vmem:[%s11 + $0x70] sm:$0xff]
        %v1492 = vld [vmem:[%s11 + $0x78] sm:$0xff]
        %v1493 = vld [vmem:[%s11 + $0x80] sm:$0xff]
        %v1494 = vld [vmem:[%s11 + $0x88] sm:$0xff]
        %v1495 = vld [vmem:[%s11 + $0x90] sm:$0xff]
        %v1496 = vld [vmem:[%s11 + $0x98] sm:$0xff]
        %v1497 = vld [vmem:[%s11 + $0xa0] sm:$0xff]
        %v1498 = vld [vmem:[%s11 + $0xa8] sm:$0xff]
        %v1499 = vld [vmem:[%s11 + $0xb0] sm:$0xff]
        %v1500 = vld [vmem:[%s11 + $0xb8] sm:$0xff]
        %v1501 = vld [vmem:[%s11 + $0xc0] sm:$0xff]
        %v1502 = vld [vmem:[%s11 + $0xc8] sm:$0xff]
        %v1503 = vld [vmem:[%s11 + $0xd0] sm:$0xff]
        %v1504 = vld [vmem:[%s11 + $0xd8] sm:$0xff]
        %v1505 = vld [vmem:[%s11 + $0xe0] sm:$0xff]
        %v1506 = vld [vmem:[%s11 + $0xe8] sm:$0xff]
        %v1507 = vld [vmem:[%s11 + $0xf0] sm:$0xff]
        %v1508 = vld [vmem:[%s11 + $0xf8] sm:$0xff]
        %v1509 = vld [vmem:[%s11 + $0x100] sm:$0xff]
        %v1510 = vld [vmem:[%s11 + $0x108] sm:$0xff]
        %v1511 = vld [vmem:[%s11 + $0x110] sm:$0xff]
        %v1512 = vld [vmem:[%s11 + $0x118] sm:$0xff]
        %v1513 = vld [vmem:[%s11 + $0x120] sm:$0xff]
        %v1514 = vld [vmem:[%s11 + $0x128] sm:$0xff]
        %v1515 = vld [vmem:[%s11 + $0x130] sm:$0xff]
        %v1516 = vld [vmem:[%s11 + $0x138] sm:$0xff]
        %v1518 = vsel %vm1094, %v1474, 0
        %v1521 = vsel %vm1094, %v1476, 0
        %1523 = vmatprep.subr.mxu0 %v1478
        %1524 = vmatpush1.msra.mxu0 %v1477
        %1525 = vmatprep.subr.mxu0 %v1480
        %1526 = vmatpush1.msra.mxu0 %v1479
        %1527 = vmatprep.subr.mxu0 %v1482
        %1528 = vmatpush1.msra.mxu0 %v1481
        %1529 = vmatprep.subr.mxu0 %v1484
        %1530 = vmatpush1.msra.mxu0 %v1483
        %1531 = vmatprep.subr.mxu0 %v1486
        %1532 = vmatpush1.msra.mxu0 %v1485
        %1533 = vmatprep.subr.mxu0 %v1488
        %1534 = vmatpush1.msra.mxu0 %v1487
        %1535 = vmatprep.subr.mxu0 %v1490
        %1536 = vmatpush1.msra.mxu0 %v1489
        %1537 = vmatprep.subr.mxu0 %v1492
        %1538 = vmatpush1.msra.mxu0 %v1491
        %1539 = vmatprep.subr.mxu0 %v1494
        %1540 = vmatpush1.msra.mxu0 %v1493
        %1541 = vmatprep.subr.mxu0 %v1496
        %1542 = vmatpush1.msra.mxu0 %v1495
        %1543 = vmatprep.subr.mxu0 %v1498
        %1544 = vmatpush1.msra.mxu0 %v1497
        %1545 = vmatprep.subr.mxu0 %v1500
        %1546 = vmatpush1.msra.mxu0 %v1499
        %1547 = vmatprep.subr.mxu0 %v1502
        %1548 = vmatpush1.msra.mxu0 %v1501
        %1549 = vmatprep.subr.mxu0 %v1504
        %1550 = vmatpush1.msra.mxu0 %v1503
        %1551 = vmatprep.subr.mxu0 %v1506
        %1552 = vmatpush1.msra.mxu0 %v1505
        %1553 = vmatprep.subr.mxu0 %v1508
        %1554 = vmatpush1.msra.mxu0 %v1507
        %1555 = vmatprep.subr.mxu0 %v1510
        %1556 = vmatpush1.msra.mxu0 %v1509
        %1557 = vmatprep.subr.mxu0 %v1512
        %1558 = vmatpush1.msra.mxu0 %v1511
        %1559 = vmatprep.subr.mxu0 %v1514
        %1560 = vmatpush1.msra.mxu0 %v1513
        %1561 = vmatprep.subr.mxu0 %v1516
        %1562 = vmatpush1.msra.mxu0 %v1515
        %1563 = vmatprep.subr.mxu0 0.0
        %1564 = vmatpush1.msra.mxu0 0.0
        %1565 = vmatprep.subr.mxu0 0.0
        %1566 = vmatpush1.msra.mxu0 0.0
        %1567 = vmatprep.subr.mxu0 0.0
        %1568 = vmatpush1.msra.mxu0 0.0
        %1569 = vmatprep.subr.mxu0 0.0
        %1570 = vmatpush1.msra.mxu0 0.0
        %1571 = vmatprep.subr.mxu0 0.0
        %1572 = vmatpush1.msra.mxu0 0.0
        %1573 = vmatprep.subr.mxu0 0.0
        %1574 = vmatpush1.msra.mxu0 0.0
        %1575 = vmatprep.subr.mxu0 0.0
        %1576 = vmatpush1.msra.mxu0 0.0
        %1577 = vmatprep.subr.mxu0 0.0
        %1578 = vmatpush1.msra.mxu0 0.0
        %1579 = vmatprep.subr.mxu0 0.0
        %1580 = vmatpush1.msra.mxu0 0.0
        %1581 = vmatprep.subr.mxu0 0.0
        %1582 = vmatpush1.msra.mxu0 0.0
        %1583 = vmatprep.subr.mxu0 0.0
        %1584 = vmatpush1.msra.mxu0 0.0
        %1585 = vmatprep.subr.mxu0 0.0
        %1586 = vmatpush1.msra.mxu0 0.0
        %1587 = vmatprep.mubr.f32.mxu0 %v1518
        %1588 = vmatmul.mubr.f32.gmra.mrb[0].mxu0 %v1473
        %v1589 = vpop.f32.mrb[0].mxu0
        %v1590 = vadd.f32 0.0, %v1589
        %v1591 = vpop.f32.mrb[0].mxu0
        %v1592 = vadd.f32 0.0, %v1591
        %1593 = vmatprep.mubr.f32.mxu0 %v1521
        %1594 = vmatmul.mubr.f32.gmra.mrb[0].mxu0 %v1475
        %v1595 = vpop.f32.mrb[0].mxu0
        %v1596 = vadd.f32 0.0, %v1595
        %v1597 = vpop.f32.mrb[0].mxu0
        %v1598 = vadd.f32 0.0, %v1597
        %1599 = vdwg.mxu0
        %v1600 = vmul.f32 %v1590, %v1590
        %v1601 = vmul.f32 %v1592, %v1592
        %v1602 = vmul.f32 %v1596, %v1596
        %v1603 = vmul.f32 %v1598, %v1598
        %v1604 = vld [vmem:[%s12] sm:$0xff]
        %v1605 = vld [vmem:[%s12 + $0x8] sm:$0xff]
        %v1606 = vld [vmem:[%s12 + $0x10] sm:$0xff]
        %v1607 = vld [vmem:[%s12 + $0x18] sm:$0xff]
        %v1608 = vld [vmem:[%s12 + $0x20] sm:$0xff]
        %v1609 = vld [vmem:[%s12 + $0x28] sm:$0xff]
        %v1610 = vld [vmem:[%s12 + $0x30] sm:$0xff]
        %v1611 = vld [vmem:[%s12 + $0x38] sm:$0xff]
        %v1612 = vld [vmem:[%s12 + $0x40] sm:$0xff]
        %v1613 = vld [vmem:[%s12 + $0x48] sm:$0xff]
        %v1614 = vld [vmem:[%s12 + $0x50] sm:$0xff]
        %v1615 = vld [vmem:[%s12 + $0x58] sm:$0xff]
        %v1616 = vld [vmem:[%s12 + $0x60] sm:$0xff]
        %v1617 = vld [vmem:[%s12 + $0x68] sm:$0xff]
        %v1618 = vld [vmem:[%s12 + $0x70] sm:$0xff]
        %v1619 = vld [vmem:[%s12 + $0x78] sm:$0xff]
        %v1620 = vld [vmem:[%s12 + $0x80] sm:$0xff]
        %v1621 = vld [vmem:[%s12 + $0x88] sm:$0xff]
        %v1622 = vld [vmem:[%s12 + $0x90] sm:$0xff]
        %v1623 = vld [vmem:[%s12 + $0x98] sm:$0xff]
        %v1625 = vsel %vm1094, %v1601, 0
        %v1628 = vsel %vm1094, %v1603, 0
        %1630 = vmatprep.subr.mxu0 0.0
        %1631 = vmatpush1.msra.mxu0 %v1604
        %1632 = vmatprep.subr.mxu0 0.0
        %1633 = vmatpush1.msra.mxu0 %v1605
        %1634 = vmatprep.subr.mxu0 0.0
        %1635 = vmatpush1.msra.mxu0 %v1606
        %1636 = vmatprep.subr.mxu0 0.0
        %1637 = vmatpush1.msra.mxu0 %v1607
        %1638 = vmatprep.subr.mxu0 0.0
        %1639 = vmatpush1.msra.mxu0 %v1608
        %1640 = vmatprep.subr.mxu0 0.0
        %1641 = vmatpush1.msra.mxu0 %v1609
        %1642 = vmatprep.subr.mxu0 0.0
        %1643 = vmatpush1.msra.mxu0 %v1610
        %1644 = vmatprep.subr.mxu0 0.0
        %1645 = vmatpush1.msra.mxu0 %v1611
        %1646 = vmatprep.subr.mxu0 0.0
        %1647 = vmatpush1.msra.mxu0 %v1612
        %1648 = vmatprep.subr.mxu0 0.0
        %1649 = vmatpush1.msra.mxu0 %v1613
        %1650 = vmatprep.subr.mxu0 0.0
        %1651 = vmatpush1.msra.mxu0 %v1614
        %1652 = vmatprep.subr.mxu0 0.0
        %1653 = vmatpush1.msra.mxu0 %v1615
        %1654 = vmatprep.subr.mxu0 0.0
        %1655 = vmatpush1.msra.mxu0 %v1616
        %1656 = vmatprep.subr.mxu0 0.0
        %1657 = vmatpush1.msra.mxu0 %v1617
        %1658 = vmatprep.subr.mxu0 0.0
        %1659 = vmatpush1.msra.mxu0 %v1618
        %1660 = vmatprep.subr.mxu0 0.0
        %1661 = vmatpush1.msra.mxu0 %v1619
        %1662 = vmatprep.subr.mxu0 0.0
        %1663 = vmatpush1.msra.mxu0 %v1620
        %1664 = vmatprep.subr.mxu0 0.0
        %1665 = vmatpush1.msra.mxu0 %v1621
        %1666 = vmatprep.subr.mxu0 0.0
        %1667 = vmatpush1.msra.mxu0 %v1622
        %1668 = vmatprep.subr.mxu0 0.0
        %1669 = vmatpush1.msra.mxu0 %v1623
        %1670 = vmatprep.subr.mxu0 0.0
        %1671 = vmatpush1.msra.mxu0 0.0
        %1672 = vmatprep.subr.mxu0 0.0
        %1673 = vmatpush1.msra.mxu0 0.0
        %1674 = vmatprep.subr.mxu0 0.0
        %1675 = vmatpush1.msra.mxu0 0.0
        %1676 = vmatprep.subr.mxu0 0.0
        %1677 = vmatpush1.msra.mxu0 0.0
        %1678 = vmatprep.subr.mxu0 0.0
        %1679 = vmatpush1.msra.mxu0 0.0
        %1680 = vmatprep.subr.mxu0 0.0
        %1681 = vmatpush1.msra.mxu0 0.0
        %1682 = vmatprep.subr.mxu0 0.0
        %1683 = vmatpush1.msra.mxu0 0.0
        %1684 = vmatprep.subr.mxu0 0.0
        %1685 = vmatpush1.msra.mxu0 0.0
        %1686 = vmatprep.subr.mxu0 0.0
        %1687 = vmatpush1.msra.mxu0 0.0
        %1688 = vmatprep.subr.mxu0 0.0
        %1689 = vmatpush1.msra.mxu0 0.0
        %1690 = vmatprep.subr.mxu0 0.0
        %1691 = vmatpush1.msra.mxu0 0.0
        %1692 = vmatprep.subr.mxu0 0.0
        %1693 = vmatpush1.msra.mxu0 0.0
        %1694 = vmatprep.mubr.f32.mxu0 %v1625
        %1695 = vmatmul.mubr.f32.gmra.mrb[0].mxu0 %v1600
        %v1696 = vpop.f32.mrb[0].mxu0
        %v1697 = vadd.f32 0.0, %v1696
        %v1698 = vpop.f32.mrb[0].mxu0
        %1699 = vmatprep.mubr.f32.mxu0 %v1628
        %1700 = vmatmul.mubr.f32.gmra.mrb[0].mxu0 %v1602
        %v1701 = vpop.f32.mrb[0].mxu0
        %v1702 = vadd.f32 0.0, %v1701
        %v1703 = vpop.f32.mrb[0].mxu0
        %1704 = vdwg.mxu0
        %v1705 = vrsqrt.pop %v1697
        %v1706 = vmul.f32 %v1697, %v1705
        %vm1707 = vcmp.eq.f32.partialorder %v1697, inf
        %v1708 = vsel %vm1707, %v1697, %v1706
        %vm1709 = vcmp.eq.f32.partialorder %v1697, 0.0
        %v1710 = vand.u32 %v1697, 2147483648
        %v1711 = vsel %vm1709, %v1710, %v1708
        %v1712 = vrsqrt.pop %v1702
        %v1713 = vmul.f32 %v1702, %v1712
        %vm1714 = vcmp.eq.f32.partialorder %v1702, inf
        %v1715 = vsel %vm1714, %v1702, %v1713
        %vm1716 = vcmp.eq.f32.partialorder %v1702, 0.0
        %v1717 = vand.u32 %v1702, 2147483648
        %v1718 = vsel %vm1716, %v1717, %v1715
        %v1719 = vld [vmem:[%s14] sm:$0xff]
        %v1720 = vld [vmem:[%s14 + $0x8] sm:$0xff]
        %v1721 = vld [vmem:[%s14 + $0x10] sm:$0xff]
        %v1722 = vld [vmem:[%s14 + $0x18] sm:$0xff]
        %v1723 = vld [vmem:[#allocation11] sm:$0xff]
        %v1724 = vld [vmem:[#allocation11 + $0x8] sm:$0xff]
        %v1725 = vld [vmem:[#allocation11 + $0x10] sm:$0xff]
        %v1726 = vld [vmem:[#allocation11 + $0x18] sm:$0xff]
        %v1728 = vsel %vm1094, %v1711, 0
        %v1731 = vsel %vm1094, %v1718, 0
        %1733 = vmatprep.subr.mxu0 0.0
        %1734 = vmatpush1.msra.mxu0 %v1723
        %1735 = vmatprep.subr.mxu0 0.0
        %1736 = vmatpush1.msra.mxu0 %v1724
        %1737 = vmatprep.subr.mxu0 0.0
        %1738 = vmatpush1.msra.mxu0 %v1725
        %1739 = vmatprep.subr.mxu0 0.0
        %1740 = vmatpush1.msra.mxu0 %v1726
        %1741 = vmatprep.subr.mxu0 0.0
        %1742 = vmatpush1.msra.mxu0 0.0
        %1743 = vmatprep.subr.mxu0 0.0
        %1744 = vmatpush1.msra.mxu0 0.0
        %1745 = vmatprep.subr.mxu0 0.0
        %1746 = vmatpush1.msra.mxu0 0.0
        %1747 = vmatprep.subr.mxu0 0.0
        %1748 = vmatpush1.msra.mxu0 0.0
        %1749 = vmatprep.subr.mxu0 0.0
        %1750 = vmatpush1.msra.mxu0 0.0
        %1751 = vmatprep.subr.mxu0 0.0
        %1752 = vmatpush1.msra.mxu0 0.0
        %1753 = vmatprep.subr.mxu0 0.0
        %1754 = vmatpush1.msra.mxu0 0.0
        %1755 = vmatprep.subr.mxu0 0.0
        %1756 = vmatpush1.msra.mxu0 0.0
        %1757 = vmatprep.subr.mxu0 0.0
        %1758 = vmatpush1.msra.mxu0 0.0
        %1759 = vmatprep.subr.mxu0 0.0
        %1760 = vmatpush1.msra.mxu0 0.0
        %1761 = vmatprep.subr.mxu0 0.0
        %1762 = vmatpush1.msra.mxu0 0.0
        %1763 = vmatprep.subr.mxu0 0.0
        %1764 = vmatpush1.msra.mxu0 0.0
        %1765 = vmatprep.subr.mxu0 0.0
        %1766 = vmatpush1.msra.mxu0 0.0
        %1767 = vmatprep.subr.mxu0 0.0
        %1768 = vmatpush1.msra.mxu0 0.0
        %1769 = vmatprep.subr.mxu0 0.0
        %1770 = vmatpush1.msra.mxu0 0.0
        %1771 = vmatprep.subr.mxu0 0.0
        %1772 = vmatpush1.msra.mxu0 0.0
        %1773 = vmatprep.subr.mxu0 0.0
        %1774 = vmatpush1.msra.mxu0 0.0
        %1775 = vmatprep.subr.mxu0 0.0
        %1776 = vmatpush1.msra.mxu0 0.0
        %1777 = vmatprep.subr.mxu0 0.0
        %1778 = vmatpush1.msra.mxu0 0.0
        %1779 = vmatprep.subr.mxu0 0.0
        %1780 = vmatpush1.msra.mxu0 0.0
        %1781 = vmatprep.subr.mxu0 0.0
        %1782 = vmatpush1.msra.mxu0 0.0
        %1783 = vmatprep.subr.mxu0 0.0
        %1784 = vmatpush1.msra.mxu0 0.0
        %1785 = vmatprep.subr.mxu0 0.0
        %1786 = vmatpush1.msra.mxu0 0.0
        %1787 = vmatprep.subr.mxu0 0.0
        %1788 = vmatpush1.msra.mxu0 0.0
        %1789 = vmatprep.subr.mxu0 0.0
        %1790 = vmatpush1.msra.mxu0 0.0
        %1791 = vmatprep.subr.mxu0 0.0
        %1792 = vmatpush1.msra.mxu0 0.0
        %1793 = vmatprep.subr.mxu0 0.0
        %1794 = vmatpush1.msra.mxu0 0.0
        %1795 = vmatprep.subr.mxu0 0.0
        %1796 = vmatpush1.msra.mxu0 0.0
        %1797 = vmatprep.mubr.f32.mxu0 0.0
        %1798 = vmatmul.mubr.f32.gmra.mrb[0].mxu0 %v1728
        %v1799 = vpop.f32.mrb[0].mxu0
        %v1800 = vadd.f32 0.0, %v1799
        %v1801 = vpop.f32.mrb[0].mxu0
        %1802 = vmatprep.mubr.f32.mxu0 0.0
        %1803 = vmatmul.mubr.f32.gmra.mrb[0].mxu0 %v1731
        %v1804 = vpop.f32.mrb[0].mxu0
        %v1805 = vadd.f32 0.0, %v1804
        %v1806 = vpop.f32.mrb[0].mxu0
        %1807 = vdwg.mxu0
        %1808 = vmatprep.subr.mxu0 0.0
        %1809 = vmatpush1.msra.mxu0 %v1719
        %1810 = vmatprep.subr.mxu0 0.0
        %1811 = vmatpush1.msra.mxu0 %v1720
        %1812 = vmatprep.subr.mxu0 0.0
        %1813 = vmatpush1.msra.mxu0 %v1721
        %1814 = vmatprep.subr.mxu0 0.0
        %1815 = vmatpush1.msra.mxu0 %v1722
        %1816 = vmatprep.subr.mxu0 0.0
        %1817 = vmatpush1.msra.mxu0 0.0
        %1818 = vmatprep.subr.mxu0 0.0
        %1819 = vmatpush1.msra.mxu0 0.0
        %1820 = vmatprep.subr.mxu0 0.0
        %1821 = vmatpush1.msra.mxu0 0.0
        %1822 = vmatprep.subr.mxu0 0.0
        %1823 = vmatpush1.msra.mxu0 0.0
        %1824 = vmatprep.subr.mxu0 0.0
        %1825 = vmatpush1.msra.mxu0 0.0
        %1826 = vmatprep.subr.mxu0 0.0
        %1827 = vmatpush1.msra.mxu0 0.0
        %1828 = vmatprep.subr.mxu0 0.0
        %1829 = vmatpush1.msra.mxu0 0.0
        %1830 = vmatprep.subr.mxu0 0.0
        %1831 = vmatpush1.msra.mxu0 0.0
        %1832 = vmatprep.subr.mxu0 0.0
        %1833 = vmatpush1.msra.mxu0 0.0
        %1834 = vmatprep.subr.mxu0 0.0
        %1835 = vmatpush1.msra.mxu0 0.0
        %1836 = vmatprep.subr.mxu0 0.0
        %1837 = vmatpush1.msra.mxu0 0.0
        %1838 = vmatprep.subr.mxu0 0.0
        %1839 = vmatpush1.msra.mxu0 0.0
        %1840 = vmatprep.subr.mxu0 0.0
        %1841 = vmatpush1.msra.mxu0 0.0
        %1842 = vmatprep.subr.mxu0 0.0
        %1843 = vmatpush1.msra.mxu0 0.0
        %1844 = vmatprep.subr.mxu0 0.0
        %1845 = vmatpush1.msra.mxu0 0.0
        %1846 = vmatprep.subr.mxu0 0.0
        %1847 = vmatpush1.msra.mxu0 0.0
        %1848 = vmatprep.subr.mxu0 0.0
        %1849 = vmatpush1.msra.mxu0 0.0
        %1850 = vmatprep.subr.mxu0 0.0
        %1851 = vmatpush1.msra.mxu0 0.0
        %1852 = vmatprep.subr.mxu0 0.0
        %1853 = vmatpush1.msra.mxu0 0.0
        %1854 = vmatprep.subr.mxu0 0.0
        %1855 = vmatpush1.msra.mxu0 0.0
        %1856 = vmatprep.subr.mxu0 0.0
        %1857 = vmatpush1.msra.mxu0 0.0
        %1858 = vmatprep.subr.mxu0 0.0
        %1859 = vmatpush1.msra.mxu0 0.0
        %1860 = vmatprep.subr.mxu0 0.0
        %1861 = vmatpush1.msra.mxu0 0.0
        %1862 = vmatprep.subr.mxu0 0.0
        %1863 = vmatpush1.msra.mxu0 0.0
        %1864 = vmatprep.subr.mxu0 0.0
        %1865 = vmatpush1.msra.mxu0 0.0
        %1866 = vmatprep.subr.mxu0 0.0
        %1867 = vmatpush1.msra.mxu0 0.0
        %1868 = vmatprep.subr.mxu0 0.0
        %1869 = vmatpush1.msra.mxu0 0.0
        %1870 = vmatprep.subr.mxu0 0.0
        %1871 = vmatpush1.msra.mxu0 0.0
        %1872 = vmatprep.mubr.f32.mxu0 0.0
        %1873 = vmatmul.mubr.f32.gmra.mrb[0].mxu0 %v1177
        %v1874 = vpop.f32.mrb[0].mxu0
        %v1875 = vadd.f32 %v1800, %v1874
        %v1876 = vpop.f32.mrb[0].mxu0
        %1877 = vmatprep.mubr.f32.mxu0 0.0
        %1878 = vmatmul.mubr.f32.gmra.mrb[0].mxu0 %v1180
        %v1879 = vpop.f32.mrb[0].mxu0
        %v1880 = vadd.f32 %v1805, %v1879
        %v1881 = vpop.f32.mrb[0].mxu0
        %1882 = vdwg.mxu0
        %v1883 = vld [vmem:[%s16] sm:$0x1]
        %v1885 = vlaneseq
        %v1886 = vshrl.u32 %v1885, 7
        %v1887 = vsub.s32 0, %v1886
        %v1888 = vrot.slane %v1883, %v1887
        %v1890 = vadd.f32 %v1875, %v1888
        %v1891 = vadd.f32 %v1880, %v1888
        %v1892 = vxor.u32 %v1890, 2147483648
        %v1893 = vxor.u32 %v1891, 2147483648
        %v1894 = vmul.f32 %v1892, 1.442695
        %v1895 = vpow.pop %v1894
        %v1896 = vmul.f32 %v1893, 1.442695
        %v1897 = vpow.pop %v1896
        %v1898 = vadd.f32 %v1895, 1.0
        %v1899 = vadd.f32 %v1897, 1.0
        %v1900 = vrcp.pop %v1898
        %v1901 = vmul.f32 1.0, %v1900
        %v1902 = vrcp.pop %v1899
        %v1903 = vmul.f32 1.0, %v1902
        %v1904 = vmul.f32 %v1890, %v1901
        %v1905 = vmul.f32 %v1891, %v1903
        %v1906 = vld [vmem:[%s17] sm:$0xff]
        %v1907 = vld [vmem:[%s17 + $0x8] sm:$0xff]
        %v1908 = vld [vmem:[%s17 + $0x10] sm:$0xff]
        %v1909 = vld [vmem:[%s17 + $0x18] sm:$0xff]
        %v1910 = vld [vmem:[%s17 + $0x20] sm:$0xff]
        %v1911 = vld [vmem:[%s17 + $0x28] sm:$0xff]
        %v1912 = vld [vmem:[%s17 + $0x30] sm:$0xff]
        %v1913 = vld [vmem:[%s17 + $0x38] sm:$0xff]
        %v1914 = vld [vmem:[%s17 + $0x40] sm:$0xff]
        %v1915 = vld [vmem:[%s17 + $0x48] sm:$0xff]
        %v1916 = vld [vmem:[%s17 + $0x50] sm:$0xff]
        %v1917 = vld [vmem:[%s17 + $0x58] sm:$0xff]
        %v1918 = vld [vmem:[%s17 + $0x60] sm:$0xff]
        %v1919 = vld [vmem:[%s17 + $0x68] sm:$0xff]
        %v1920 = vld [vmem:[%s17 + $0x70] sm:$0xff]
        %v1921 = vld [vmem:[%s17 + $0x78] sm:$0xff]
        %v1922 = vld [vmem:[%s18] sm:$0x1]
        %v1924 = vlaneseq
        %v1925 = vshrl.u32 %v1924, 7
        %v1926 = vsub.s32 0, %v1925
        %v1927 = vrot.slane %v1922, %v1926
        %1929 = vmatprep.subr.mxu0 0.0
        %1930 = vmatpush1.msra.mxu0 %v1906
        %1931 = vmatprep.subr.mxu0 0.0
        %1932 = vmatpush1.msra.mxu0 %v1907
        %1933 = vmatprep.subr.mxu0 0.0
        %1934 = vmatpush1.msra.mxu0 %v1908
        %1935 = vmatprep.subr.mxu0 0.0
        %1936 = vmatpush1.msra.mxu0 %v1909
        %1937 = vmatprep.subr.mxu0 0.0
        %1938 = vmatpush1.msra.mxu0 %v1910
        %1939 = vmatprep.subr.mxu0 0.0
        %1940 = vmatpush1.msra.mxu0 %v1911
        %1941 = vmatprep.subr.mxu0 0.0
        %1942 = vmatpush1.msra.mxu0 %v1912
        %1943 = vmatprep.subr.mxu0 0.0
        %1944 = vmatpush1.msra.mxu0 %v1913
        %1945 = vmatprep.subr.mxu0 0.0
        %1946 = vmatpush1.msra.mxu0 %v1914
        %1947 = vmatprep.subr.mxu0 0.0
        %1948 = vmatpush1.msra.mxu0 %v1915
        %1949 = vmatprep.subr.mxu0 0.0
        %1950 = vmatpush1.msra.mxu0 %v1916
        %1951 = vmatprep.subr.mxu0 0.0
        %1952 = vmatpush1.msra.mxu0 %v1917
        %1953 = vmatprep.subr.mxu0 0.0
        %1954 = vmatpush1.msra.mxu0 %v1918
        %1955 = vmatprep.subr.mxu0 0.0
        %1956 = vmatpush1.msra.mxu0 %v1919
        %1957 = vmatprep.subr.mxu0 0.0
        %1958 = vmatpush1.msra.mxu0 %v1920
        %1959 = vmatprep.subr.mxu0 0.0
        %1960 = vmatpush1.msra.mxu0 %v1921
        %1961 = vmatprep.subr.mxu0 0.0
        %1962 = vmatpush1.msra.mxu0 0.0
        %1963 = vmatprep.subr.mxu0 0.0
        %1964 = vmatpush1.msra.mxu0 0.0
        %1965 = vmatprep.subr.mxu0 0.0
        %1966 = vmatpush1.msra.mxu0 0.0
        %1967 = vmatprep.subr.mxu0 0.0
        %1968 = vmatpush1.msra.mxu0 0.0
        %1969 = vmatprep.subr.mxu0 0.0
        %1970 = vmatpush1.msra.mxu0 0.0
        %1971 = vmatprep.subr.mxu0 0.0
        %1972 = vmatpush1.msra.mxu0 0.0
        %1973 = vmatprep.subr.mxu0 0.0
        %1974 = vmatpush1.msra.mxu0 0.0
        %1975 = vmatprep.subr.mxu0 0.0
        %1976 = vmatpush1.msra.mxu0 0.0
        %1977 = vmatprep.subr.mxu0 0.0
        %1978 = vmatpush1.msra.mxu0 0.0
        %1979 = vmatprep.subr.mxu0 0.0
        %1980 = vmatpush1.msra.mxu0 0.0
        %1981 = vmatprep.subr.mxu0 0.0
        %1982 = vmatpush1.msra.mxu0 0.0
        %1983 = vmatprep.subr.mxu0 0.0
        %1984 = vmatpush1.msra.mxu0 0.0
        %1985 = vmatprep.subr.mxu0 0.0
        %1986 = vmatpush1.msra.mxu0 0.0
        %1987 = vmatprep.subr.mxu0 0.0
        %1988 = vmatpush1.msra.mxu0 0.0
        %1989 = vmatprep.subr.mxu0 0.0
        %1990 = vmatpush1.msra.mxu0 0.0
        %1991 = vmatprep.subr.mxu0 0.0
        %1992 = vmatpush1.msra.mxu0 0.0
        %1993 = vmatprep.mubr.f32.mxu0 0.0
        %1994 = vmatmul.mubr.f32.gmra.mrb[0].mxu0 %v1904
        %v1995 = vpop.f32.mrb[0].mxu0
        %v1996 = vadd.f32 %v1927, %v1995
        %v1997 = vpop.f32.mrb[0].mxu0
        %1998 = vmatprep.mubr.f32.mxu0 0.0
        %1999 = vmatmul.mubr.f32.gmra.mrb[0].mxu0 %v1905
        %v2000 = vpop.f32.mrb[0].mxu0
        %v2001 = vadd.f32 %v1927, %v2000
        %v2002 = vpop.f32.mrb[0].mxu0
        %2003 = vdwg.mxu0
        %v2004 = vadd.f32 %v1378, %v1996
        %v2005 = vadd.f32 %v1379, %v2001
        %v2006 = vld [vmem:[%s13] sm:$0xff]
        %v2007 = vld [vmem:[%s13 + $0x8] sm:$0xff]
        %v2008 = vld [vmem:[%s13 + $0x10] sm:$0xff]
        %v2009 = vld [vmem:[%s13 + $0x18] sm:$0xff]
        %v2010 = vld [vmem:[%s13 + $0x20] sm:$0xff]
        %v2011 = vld [vmem:[%s13 + $0x28] sm:$0xff]
        %v2012 = vld [vmem:[%s13 + $0x30] sm:$0xff]
        %v2013 = vld [vmem:[%s13 + $0x38] sm:$0xff]
        %2016 = vrot.lane.b32.xlu0 %v1996, 96
        %v2017 = vpop.permute.xlu0 %2016
        %2018 = vrot.lane.b32.xlu0 %v2001, 96
        %v2019 = vpop.permute.xlu0 %2018
        %v2020 = vsel %vm1094, %v2017, 0
        %v2022 = vsel %vm1094, %v2019, 0
        %2024 = vmatprep.subr.mxu0 %v2007
        %2025 = vmatpush1.msra.mxu0 %v2006
        %2026 = vmatprep.subr.mxu0 %v2009
        %2027 = vmatpush1.msra.mxu0 %v2008
        %2028 = vmatprep.subr.mxu0 %v2011
        %2029 = vmatpush1.msra.mxu0 %v2010
        %2030 = vmatprep.subr.mxu0 %v2013
        %2031 = vmatpush1.msra.mxu0 %v2012
        %2032 = vmatprep.subr.mxu0 0.0
        %2033 = vmatpush1.msra.mxu0 0.0
        %2034 = vmatprep.subr.mxu0 0.0
        %2035 = vmatpush1.msra.mxu0 0.0
        %2036 = vmatprep.subr.mxu0 0.0
        %2037 = vmatpush1.msra.mxu0 0.0
        %2038 = vmatprep.subr.mxu0 0.0
        %2039 = vmatpush1.msra.mxu0 0.0
        %2040 = vmatprep.subr.mxu0 0.0
        %2041 = vmatpush1.msra.mxu0 0.0
        %2042 = vmatprep.subr.mxu0 0.0
        %2043 = vmatpush1.msra.mxu0 0.0
        %2044 = vmatprep.subr.mxu0 0.0
        %2045 = vmatpush1.msra.mxu0 0.0
        %2046 = vmatprep.subr.mxu0 0.0
        %2047 = vmatpush1.msra.mxu0 0.0
        %2048 = vmatprep.subr.mxu0 0.0
        %2049 = vmatpush1.msra.mxu0 0.0
        %2050 = vmatprep.subr.mxu0 0.0
        %2051 = vmatpush1.msra.mxu0 0.0
        %2052 = vmatprep.subr.mxu0 0.0
        %2053 = vmatpush1.msra.mxu0 0.0
        %2054 = vmatprep.subr.mxu0 0.0
        %2055 = vmatpush1.msra.mxu0 0.0
        %2056 = vmatprep.subr.mxu0 0.0
        %2057 = vmatpush1.msra.mxu0 0.0
        %2058 = vmatprep.subr.mxu0 0.0
        %2059 = vmatpush1.msra.mxu0 0.0
        %2060 = vmatprep.subr.mxu0 0.0
        %2061 = vmatpush1.msra.mxu0 0.0
        %2062 = vmatprep.subr.mxu0 0.0
        %2063 = vmatpush1.msra.mxu0 0.0
        %2064 = vmatprep.subr.mxu0 0.0
        %2065 = vmatpush1.msra.mxu0 0.0
        %2066 = vmatprep.subr.mxu0 0.0
        %2067 = vmatpush1.msra.mxu0 0.0
        %2068 = vmatprep.subr.mxu0 0.0
        %2069 = vmatpush1.msra.mxu0 0.0
        %2070 = vmatprep.subr.mxu0 0.0
        %2071 = vmatpush1.msra.mxu0 0.0
        %2072 = vmatprep.subr.mxu0 0.0
        %2073 = vmatpush1.msra.mxu0 0.0
        %2074 = vmatprep.subr.mxu0 0.0
        %2075 = vmatpush1.msra.mxu0 0.0
        %2076 = vmatprep.subr.mxu0 0.0
        %2077 = vmatpush1.msra.mxu0 0.0
        %2078 = vmatprep.subr.mxu0 0.0
        %2079 = vmatpush1.msra.mxu0 0.0
        %2080 = vmatprep.subr.mxu0 0.0
        %2081 = vmatpush1.msra.mxu0 0.0
        %2082 = vmatprep.subr.mxu0 0.0
        %2083 = vmatpush1.msra.mxu0 0.0
        %2084 = vmatprep.subr.mxu0 0.0
        %2085 = vmatpush1.msra.mxu0 0.0
        %2086 = vmatprep.subr.mxu0 0.0
        %2087 = vmatpush1.msra.mxu0 0.0
        %2088 = vmatprep.mubr.f32.mxu0 0.0
        %2089 = vmatmul.mubr.f32.gmra.mrb[0].mxu0 %v2020
        %v2090 = vpop.f32.mrb[0].mxu0
        %v2091 = vadd.f32 0.0, %v2090
        %v2092 = vpop.f32.mrb[0].mxu0
        %v2093 = vadd.f32 0.0, %v2092
        %2094 = vmatprep.mubr.f32.mxu0 0.0
        %2095 = vmatmul.mubr.f32.gmra.mrb[0].mxu0 %v2022
        %v2096 = vpop.f32.mrb[0].mxu0
        %v2097 = vadd.f32 0.0, %v2096
        %v2098 = vpop.f32.mrb[0].mxu0
        %v2099 = vadd.f32 0.0, %v2098
        %2100 = vdwg.mxu0
        %v2101 = vmul.f32 %v1590, %v2091
        %v2102 = vmul.f32 %v1592, %v2093
        %v2103 = vmul.f32 %v1596, %v2097
        %v2104 = vmul.f32 %v1598, %v2099
        %2105 = vst [vmem:[%s835] sm:$0xff] %v2101
        %2106 = vst.msk [vmem:[%s835 + $0x8] sm:$0xff] %vm1094, %v2102
        %2107 = vst [vmem:[%s835 + $0x10] sm:$0xff] %v2103
        %2108 = vst.msk [vmem:[%s835 + $0x18] sm:$0xff] %vm1094, %v2104
        %2109 = vst.msk [vmem:[%s821] sm:$0xff] %vm1094, %v2004
        %2110 = vst.msk [vmem:[%s821 + $0x8] sm:$0xff] %vm1094, %v2005
        %s2111 = sand.u32 %s469, 1
        %s2112 = scalar_lea.sflag [#allocation4], %s2111
        %s2113 = sand.u32 %s469, 1
        %s2114 = smul.addr %s2113, 16
        %s2115 = scalar_lea.vmem [#allocation13], %s2114
        %s2116 = sand.u32 %s47, 1
        %s2117 = scalar_lea.sflag [#allocation15], %s2116
        %s2118 = sand.u32 %s495, 1
        %s2119 = smul.addr %s2118, 16
        %s2120 = scalar_lea.vmem [#allocation14], %s2119
        %s2121 = sand.u32 %s47, 1
        %s2122 = scalar_lea.sflag [#allocation15], %s2121
        %s2123 = sand.u32 %s521, 1
        %s2124 = smul.addr %s2123, 32
        %s2125 = scalar_lea.vmem [#allocation16], %s2124
        // Predicated region
        $region121: #{tpu_custom_call.1} parent=95 // pred_check
          %p2126 = pneg %p479
        $region122: #{tpu_custom_call.1} parent=95 // pred_check_branch
          %2128 = sbr.rel (%p2126) target = $region124
        $region123: #{tpu_custom_call.1} parent=95 // pred_region
          %s2129 = smul.u32 2, %s47
          %s2130 = ssub.s32 3, %s2129
          %p2131 = scmp.lt.s32.totalorder %s2130, 2
          %s2132 = scalar_select %p2131, %s2130, 2
          %s2133 = smul.u32 128, %s2132
          %s2135 = ssub.s32 256, %s2133
          %2136 = vsyncadd %s2112, %s2135
          %p2137 = scmp.ne.s32.totalorder 0, %s2133
          %s2138 = smul.addr %s2129, 128
          %s2139 = scalar_lea.hbm %s19, %s2138
          %s2140 = smul.u32 8, %s2132
          %s2141 = sshll.u32 %s2115, 4
          %s2142 = int_to_ptr.vmem [resolvable:$true] %s2141
          %s2143 = sshll.u32 %s2140, 4
          %2147 = dma.vmem_to_hbm [thread:$0]  (%p2137), %s2142, %s2143, %s2139, %s2112, 128, 128, 8
        $region124: #{tpu_custom_call.1} parent=95 // pred_fallthru
          _
        // Predicated region
        $region125: #{tpu_custom_call.1} parent=95 // pred_check
          %p2148 = pneg %p505
        $region126: #{tpu_custom_call.1} parent=95 // pred_check_branch
          %2150 = sbr.rel (%p2148) target = $region128
        $region127: #{tpu_custom_call.1} parent=95 // pred_region
          %s2151 = smul.u32 2, %s47
          %s2152 = ssub.s32 3, %s2151
          %p2153 = scmp.lt.s32.totalorder %s2152, 2
          %s2154 = scalar_select %p2153, %s2152, 2
          %s2155 = smul.u32 128, %s2154
          %s2157 = ssub.s32 256, %s2155
          %2158 = vsyncadd %s2117, %s2157
          %p2159 = scmp.ne.s32.totalorder 0, %s2155
          %s2160 = smul.addr %s2151, 128
          %s2161 = scalar_lea.hbm %s20, %s2160
          %s2162 = smul.u32 8, %s2154
          %s2163 = sshll.u32 %s2120, 4
          %s2164 = int_to_ptr.vmem [resolvable:$true] %s2163
          %s2165 = sshll.u32 %s2162, 4
          %2169 = dma.vmem_to_hbm [thread:$0]  (%p2159), %s2164, %s2165, %s2161, %s2117, 128, 128, 8
        $region128: #{tpu_custom_call.1} parent=95 // pred_fallthru
          _
        // Predicated region
        $region129: #{tpu_custom_call.1} parent=95 // pred_check
          %p2170 = pneg %p531
        $region130: #{tpu_custom_call.1} parent=95 // pred_check_branch
          %2172 = sbr.rel (%p2170) target = $region132
        $region131: #{tpu_custom_call.1} parent=95 // pred_region
          %s2173 = smul.u32 2, %s47
          %s2174 = ssub.s32 3, %s2173
          %p2175 = scmp.lt.s32.totalorder %s2174, 2
          %s2176 = scalar_select %p2175, %s2174, 2
          %s2177 = smul.u32 128, %s2176
          %s2178 = smul.u32 %s2177, 2
          %s2180 = ssub.s32 512, %s2178
          %2181 = vsyncadd %s2122, %s2180
          %p2182 = scmp.ne.s32.totalorder 0, %s2178
          %s2183 = smul.addr %s2173, 2
          %s2184 = smul.addr %s2183, 128
          %s2185 = scalar_lea.hbm %s21, %s2184
          %s2186 = smul.u32 16, %s2176
          %s2187 = sshll.u32 %s2125, 4
          %s2188 = int_to_ptr.vmem [resolvable:$true] %s2187
          %s2189 = sshll.u32 %s2186, 4
          %2193 = dma.vmem_to_hbm [thread:$0]  (%p2182), %s2188, %s2189, %s2185, %s2122, 256, 256, 16
        $region132: #{tpu_custom_call.1} parent=95 // pred_fallthru
          _
      $region96: #{tpu_custom_call.1} parent=5 // pred_fallthru
        _
      %p2194 = scmp.le.s32.totalorder 2, %s42
      // Predicated region
      $region133: #{tpu_custom_call.1} parent=5 // pred_check
        %p2195 = pneg %p2194
      $region134: #{tpu_custom_call.1} parent=5 // pred_check_branch
        %2197 = sbr.rel (%p2195) target = $region136
      $region135: #{tpu_custom_call.1} parent=5 // pred_region
        %s2198 = ssub.s32 %s42, 2
        // Predicated region
        $region137: #{tpu_custom_call.1} parent=135 // pred_check
          %p2199 = pneg %p485
        $region138: #{tpu_custom_call.1} parent=135 // pred_check_branch
          %2201 = sbr.rel (%p2199) target = $region140
        $region139: #{tpu_custom_call.1} parent=135 // pred_region
          %s2202 = sand.u32 %s470, 1
          %s2203 = scalar_lea.sflag [#allocation4], %s2202
          %s2204 = sand.u32 %s470, 1
          %s2205 = smul.addr %s2204, 16
          %s2206 = scalar_lea.vmem [#allocation13], %s2205
          %2207 = dma.done %s2203, 256
        $region140: #{tpu_custom_call.1} parent=135 // pred_fallthru
          _
        // Predicated region
        $region141: #{tpu_custom_call.1} parent=135 // pred_check
          %p2208 = pneg %p511
        $region142: #{tpu_custom_call.1} parent=135 // pred_check_branch
          %2210 = sbr.rel (%p2208) target = $region144
        $region143: #{tpu_custom_call.1} parent=135 // pred_region
          %s2211 = sand.u32 %s48, 1
          %s2212 = scalar_lea.sflag [#allocation15], %s2211
          %s2213 = sand.u32 %s496, 1
          %s2214 = smul.addr %s2213, 16
          %s2215 = scalar_lea.vmem [#allocation14], %s2214
          %2216 = dma.done %s2212, 256
        $region144: #{tpu_custom_call.1} parent=135 // pred_fallthru
          _
        // Predicated region
        $region145: #{tpu_custom_call.1} parent=135 // pred_check
          %p2217 = pneg %p537
        $region146: #{tpu_custom_call.1} parent=135 // pred_check_branch
          %2219 = sbr.rel (%p2217) target = $region148
        $region147: #{tpu_custom_call.1} parent=135 // pred_region
          %s2220 = sand.u32 %s48, 1
          %s2221 = scalar_lea.sflag [#allocation15], %s2220
          %s2222 = sand.u32 %s522, 1
          %s2223 = smul.addr %s2222, 32
          %s2224 = scalar_lea.vmem [#allocation16], %s2223
          %2225 = dma.done %s2221, 512
        $region148: #{tpu_custom_call.1} parent=135 // pred_fallthru
          _
      $region136: #{tpu_custom_call.1} parent=5 // pred_fallthru
        _
    $region6: #{tpu_custom_call.1} parent=1 // loop_footer
      %s46 = sadd.s32 1, %s42
    $region7: #{tpu_custom_call.1} parent=1 // loop_footer_branch
      %41 = sbr.rel target = $region3
    $region8: #{tpu_custom_call.1} parent=1 // loop_exit
      _
    %2226 = vsyncpa [#allocation3], 1
    %s2227 = scalar_lea.sflag [#allocation3], 1
    %2228 = vsyncpa %s2227, 1
    %2229 = vsyncpa [#allocation6], 1
    %s2230 = scalar_lea.sflag [#allocation6], 1
    %2231 = vsyncpa %s2230, 1
    %2232 = vsyncpa [#allocation9], 1
    %2233 = vsyncpa [#allocation12], 1
    %2234 = vsyncpa [#allocation4], 1
    %s2235 = scalar_lea.sflag [#allocation4], 1
    %2236 = vsyncpa %s2235, 1
    %2237 = vsyncpa [#allocation15], 1
    %s2238 = scalar_lea.sflag [#allocation15], 1
    %2239 = vsyncpa %s2238, 1

// kernel: tpu_custom_call.1
$region0: #{tpu_custom_call.1}
  #allocation0 [shape = 'u32[]', space=smem, size = 0x4, offset = 0x4, fixed_abs, tag = 'smem constant byte address 0x4 - core index']
  #allocation1 [shape = 'u32[144,128]{1,0:T(1,128)}', space=vmem, size = 0x12000, scoped, tag = 'internal scratch']
  %s0 = inlined_call_operand.hbm [shape: f32[18,32], index: 0, kind: input, shape index: {}]
  %s1 = inlined_call_operand.hbm [shape: f32[18,96], index: 1, kind: input, shape index: {}]
  %s2 = inlined_call_operand.vmem [shape: f32[96,96], index: 2, kind: input, shape index: {}]
  %s3 = inlined_call_operand.vmem [shape: f32[96,32], index: 3, kind: input, shape index: {}]
  %s4 = inlined_call_operand.hbm [shape: f32[32,96], index: 4, kind: input, shape index: {}]
  %s5 = inlined_call_operand.hbm [shape: f32[32,128], index: 5, kind: input, shape index: {}]
  %s6 = inlined_call_operand.hbm [shape: f32[32,128], index: 6, kind: input, shape index: {}]
  %s7 = inlined_call_operand.vmem [shape: f32[1,128], index: 7, kind: input, shape index: {}]
  %s8 = inlined_call_operand.vmem [shape: f32[128,64], index: 8, kind: input, shape index: {}]
  %s9 = inlined_call_operand.vmem [shape: f32[1,64], index: 9, kind: input, shape index: {}]
  %s10 = inlined_call_operand.vmem [shape: f32[18,160], index: 10, kind: input, shape index: {}]
  %s11 = inlined_call_operand.vmem [shape: f32[160,160], index: 11, kind: input, shape index: {}]
  %s12 = inlined_call_operand.vmem [shape: f32[160,32], index: 12, kind: input, shape index: {}]
  %s13 = inlined_call_operand.vmem [shape: f32[32,160], index: 13, kind: input, shape index: {}]
  %s14 = inlined_call_operand.vmem [shape: f32[32,128], index: 14, kind: input, shape index: {}]
  %s15 = inlined_call_operand.hbm [shape: f32[32,128], index: 15, kind: input, shape index: {}]
  %s16 = inlined_call_operand.vmem [shape: f32[1,128], index: 16, kind: input, shape index: {}]
  %s17 = inlined_call_operand.vmem [shape: f32[128,64], index: 17, kind: input, shape index: {}]
  %s18 = inlined_call_operand.vmem [shape: f32[1,64], index: 18, kind: input, shape index: {}]
  %s19 = inlined_call_operand.hbm [shape: f32[18,32], index: 19, kind: output, shape index: {0}]
  %s20 = inlined_call_operand.hbm [shape: f32[18,96], index: 20, kind: output, shape index: {1}]
  %s21 = inlined_call_operand.hbm [shape: f32[18,160], index: 21, kind: output, shape index: {2}]
  %22 = xla_tuple %s19, %s20, %s21
  %s23 = sld [smem:[#allocation0]]
  $region149: #{tpu_custom_call.1} parent=0
    _
  %s25 = ssub.s32 1, %s23
  %s26 = scalar_select 0, %s25, %s23
  $region1: #{tpu_custom_call.1} parent=0
    #allocation2 [shape = 'u8[16384]{0}', space=vmem, size = 0x4000, scoped, tag = 'input window, operand 0']
    #allocation3 [shape = 's32[2]{0}', space=sflag, size = 0x8, scoped, tag = 'scoped memory for tpu_custom_call.1']
    #allocation4 [shape = 's32[2]{0}', space=sflag, size = 0x8, scoped, tag = 'scoped memory for tpu_custom_call.1']
    #allocation5 [shape = 'u8[16384]{0}', space=vmem, size = 0x4000, scoped, tag = 'input window, operand 1']
    #allocation6 [shape = 's32[2]{0}', space=sflag, size = 0x8, scoped, tag = 'scoped memory for tpu_custom_call.1']
    #allocation7 [shape = 'u8[16384]{0}', space=vmem, size = 0x4000, scoped, tag = 'input window, operand 4, single buffered']
    #allocation8 [shape = 'u8[16384]{0}', space=vmem, size = 0x4000, scoped, tag = 'input window, operand 5, single buffered']
    #allocation9 [shape = 's32[1]{0}', space=sflag, size = 0x4, scoped, tag = 'scoped memory for tpu_custom_call.1']
    #allocation10 [shape = 'u8[16384]{0}', space=vmem, size = 0x4000, scoped, tag = 'input window, operand 6, single buffered']
    #allocation11 [shape = 'u8[16384]{0}', space=vmem, size = 0x4000, scoped, tag = 'input window, operand 15, single buffered']
    #allocation12 [shape = 's32[1]{0}', space=sflag, size = 0x4, scoped, tag = 'scoped memory for tpu_custom_call.1']
    #allocation13 [shape = 'u8[16384]{0}', space=vmem, size = 0x4000, scoped, tag = 'output window, operand 0']
    #allocation14 [shape = 'u8[16384]{0}', space=vmem, size = 0x4000, scoped, tag = 'output window, operand 1']
    #allocation15 [shape = 's32[2]{0}', space=sflag, size = 0x8, scoped, tag = 'scoped memory for tpu_custom_call.1']
    #allocation16 [shape = 'u8[32768]{0}', space=vmem, size = 0x8000, scoped, tag = 'output window, operand 2']
    %27 = vsyncpa [#allocation3], 0
    %s28 = scalar_lea.sflag [#allocation3], 1
    %29 = vsyncpa %s28, 0
    %30 = vsyncpa [#allocation6], 0
    %s31 = scalar_lea.sflag [#allocation6], 1
    %32 = vsyncpa %s31, 0
    %33 = vsyncpa [#allocation9], 0
    %34 = vsyncpa [#allocation12], 0
    %35 = vsyncpa [#allocation4], 0
    %s36 = scalar_lea.sflag [#allocation4], 1
    %37 = vsyncpa %s36, 0
    %38 = vsyncpa [#allocation15], 0
    %s39 = scalar_lea.sflag [#allocation15], 1
    %40 = vsyncpa %s39, 0
    loop: start=0, step=1, limit=4
    $region2: #{tpu_custom_call.1} parent=1 // loop_pre_header
      _
    $region3: #{tpu_custom_call.1} parent=1 // loop_header
      %s42 = sphi 0, %s46
      %p43 = scmp.ge.s32.totalorder %s42, 4
      %s52 = sphi 0, %s54
      %s55 = sphi 0, %s52
      %s56 = sphi 0, %s55
      %s72 = sphi 0, %s56
      %s78 = sphi 0, %s80
      %s81 = sphi 0, %s78
      %s82 = sphi 0, %s81
      %s98 = sphi 0, %s82
      %s102 = sphi 0, %s102
      %s104 = sphi 0, %s102
      %s105 = sphi 0, %s104
      %s119 = sphi 0, %s105
      %s123 = sphi 0, %s123
      %s125 = sphi 0, %s123
      %s126 = sphi 0, %s125
      %s140 = sphi 0, %s126
      %s144 = sphi 0, %s144
      %s146 = sphi 0, %s144
      %s147 = sphi 0, %s146
      %s161 = sphi 0, %s147
      %s165 = sphi 0, %s165
      %s167 = sphi 0, %s165
      %s168 = sphi 0, %s167
      %s182 = sphi 0, %s168
      %s186 = sphi 0, %s186
      %s188 = sphi 0, %s186
      %s189 = sphi 0, %s188
      %s203 = sphi 0, %s189
      %s207 = sphi 0, %s207
      %s209 = sphi 0, %s207
      %s210 = sphi 0, %s209
      %s224 = sphi 0, %s210
      %s228 = sphi 0, %s228
      %s230 = sphi 0, %s228
      %s231 = sphi 0, %s230
      %s245 = sphi 0, %s231
      %s249 = sphi 0, %s249
      %s251 = sphi 0, %s249
      %s252 = sphi 0, %s251
      %s266 = sphi 0, %s252
      %s272 = sphi 0, %s274
      %s275 = sphi 0, %s272
      %s276 = sphi 0, %s275
      %s292 = sphi 0, %s276
      %s296 = sphi 0, %s296
      %s298 = sphi 0, %s296
      %s299 = sphi 0, %s298
      %s313 = sphi 0, %s299
      %s317 = sphi 0, %s317
      %s319 = sphi 0, %s317
      %s320 = sphi 0, %s319
      %s334 = sphi 0, %s320
      %s338 = sphi 0, %s338
      %s340 = sphi 0, %s338
      %s341 = sphi 0, %s340
      %s355 = sphi 0, %s341
      %s359 = sphi 0, %s359
      %s361 = sphi 0, %s359
      %s362 = sphi 0, %s361
      %s376 = sphi 0, %s362
      %s380 = sphi 0, %s380
      %s382 = sphi 0, %s380
      %s383 = sphi 0, %s382
      %s397 = sphi 0, %s383
      %s401 = sphi 0, %s401
      %s403 = sphi 0, %s401
      %s404 = sphi 0, %s403
      %s418 = sphi 0, %s404
      %s422 = sphi 0, %s422
      %s424 = sphi 0, %s422
      %s425 = sphi 0, %s424
      %s439 = sphi 0, %s425
      %s443 = sphi 0, %s443
      %s445 = sphi 0, %s443
      %s446 = sphi 0, %s445
      %s460 = sphi 0, %s446
      %s466 = sphi 0, %s468
      %s469 = sphi 0, %s466
      %s470 = sphi 0, %s469
      %s486 = sphi 0, %s470
      %s492 = sphi 0, %s494
      %s495 = sphi 0, %s492
      %s496 = sphi 0, %s495
      %s512 = sphi 0, %s496
      %s518 = sphi 0, %s520
      %s521 = sphi 0, %s518
      %s522 = sphi 0, %s521
      %s538 = sphi 0, %s522
    $region4: #{tpu_custom_call.1} parent=1 // loop_header_branch
      %45 = sbr.rel (%p43) target = $region8
    $region5: #{tpu_custom_call.1} parent=1 // loop_body
      %s47 = ssub.s32 %s42, 1
      %s48 = ssub.s32 %s42, 2
      %s49 = sadd.s32 %s42, 1
      %s50 = ssub.s32 %s42, %s49
      %p51 = scmp.eq.s32.totalorder %s50, 0
      %s53 = sadd.s32 %s52, 1
      %s54 = scalar_select %p51, %s52, %s53
      %p57 = pneg %p51
      %p58 = scmp.eq.s32.totalorder %s42, 1
      %p59 = por %p57, %p58
      %p60 = scmp.ne.s32.totalorder %s52, %s55
      %p61 = scmp.eq.s32.totalorder %s42, 0
      %p62 = por %p60, %p61
      %p63 = scmp.ne.s32.totalorder %s52, %s55
      %p64 = scmp.eq.s32.totalorder %s47, 1
      %p65 = por %p63, %p64
      %p66 = scmp.ne.s32.totalorder %s55, %s56
      %p67 = scmp.eq.s32.totalorder %s47, 0
      %p68 = por %p66, %p67
      %p69 = scmp.ne.s32.totalorder %s55, %s56
      %p70 = scmp.eq.s32.totalorder %s48, 1
      %p71 = por %p69, %p70
      %p73 = scmp.ne.s32.totalorder %s56, %s72
      %p74 = scmp.eq.s32.totalorder %s48, 0
      %p75 = por %p73, %p74
      %s76 = ssub.s32 %s42, %s49
      %p77 = scmp.eq.s32.totalorder %s76, 0
      %s79 = sadd.s32 %s78, 1
      %s80 = scalar_select %p77, %s78, %s79
      %p83 = pneg %p77
      %p84 = scmp.eq.s32.totalorder %s42, 1
      %p85 = por %p83, %p84
      %p86 = scmp.ne.s32.totalorder %s78, %s81
      %p87 = scmp.eq.s32.totalorder %s42, 0
      %p88 = por %p86, %p87
      %p89 = scmp.ne.s32.totalorder %s78, %s81
      %p90 = scmp.eq.s32.totalorder %s47, 1
      %p91 = por %p89, %p90
      %p92 = scmp.ne.s32.totalorder %s81, %s82
      %p93 = scmp.eq.s32.totalorder %s47, 0
      %p94 = por %p92, %p93
      %p95 = scmp.ne.s32.totalorder %s81, %s82
      %p96 = scmp.eq.s32.totalorder %s48, 1
      %p97 = por %p95, %p96
      %p99 = scmp.ne.s32.totalorder %s82, %s98
      %p100 = scmp.eq.s32.totalorder %s48, 0
      %p101 = por %p99, %p100
      %s103 = sadd.s32 %s102, 1
      %p106 = scmp.eq.s32.totalorder %s42, 1
      %p107 = scmp.ne.s32.totalorder %s102, %s104
      %p108 = scmp.eq.s32.totalorder %s42, 0
      %p109 = por %p107, %p108
      %p110 = scmp.ne.s32.totalorder %s102, %s104
      %p111 = scmp.eq.s32.totalorder %s47, 1
      %p112 = por %p110, %p111
      %p113 = scmp.ne.s32.totalorder %s104, %s105
      %p114 = scmp.eq.s32.totalorder %s47, 0
      %p115 = por %p113, %p114
      %p116 = scmp.ne.s32.totalorder %s104, %s105
      %p117 = scmp.eq.s32.totalorder %s48, 1
      %p118 = por %p116, %p117
      %p120 = scmp.ne.s32.totalorder %s105, %s119
      %p121 = scmp.eq.s32.totalorder %s48, 0
      %p122 = por %p120, %p121
      %s124 = sadd.s32 %s123, 1
      %p127 = scmp.eq.s32.totalorder %s42, 1
      %p128 = scmp.ne.s32.totalorder %s123, %s125
      %p129 = scmp.eq.s32.totalorder %s42, 0
      %p130 = por %p128, %p129
      %p131 = scmp.ne.s32.totalorder %s123, %s125
      %p132 = scmp.eq.s32.totalorder %s47, 1
      %p133 = por %p131, %p132
      %p134 = scmp.ne.s32.totalorder %s125, %s126
      %p135 = scmp.eq.s32.totalorder %s47, 0
      %p136 = por %p134, %p135
      %p137 = scmp.ne.s32.totalorder %s125, %s126
      %p138 = scmp.eq.s32.totalorder %s48, 1
      %p139 = por %p137, %p138
      %p141 = scmp.ne.s32.totalorder %s126, %s140
      %p142 = scmp.eq.s32.totalorder %s48, 0
      %p143 = por %p141, %p142
      %s145 = sadd.s32 %s144, 1
      %p148 = scmp.eq.s32.totalorder %s42, 1
      %p149 = scmp.ne.s32.totalorder %s144, %s146
      %p150 = scmp.eq.s32.totalorder %s42, 0
      %p151 = por %p149, %p150
      %p152 = scmp.ne.s32.totalorder %s144, %s146
      %p153 = scmp.eq.s32.totalorder %s47, 1
      %p154 = por %p152, %p153
      %p155 = scmp.ne.s32.totalorder %s146, %s147
      %p156 = scmp.eq.s32.totalorder %s47, 0
      %p157 = por %p155, %p156
      %p158 = scmp.ne.s32.totalorder %s146, %s147
      %p159 = scmp.eq.s32.totalorder %s48, 1
      %p160 = por %p158, %p159
      %p162 = scmp.ne.s32.totalorder %s147, %s161
      %p163 = scmp.eq.s32.totalorder %s48, 0
      %p164 = por %p162, %p163
      %s166 = sadd.s32 %s165, 1
      %p169 = scmp.eq.s32.totalorder %s42, 1
      %p170 = scmp.ne.s32.totalorder %s165, %s167
      %p171 = scmp.eq.s32.totalorder %s42, 0
      %p172 = por %p170, %p171
      %p173 = scmp.ne.s32.totalorder %s165, %s167
      %p174 = scmp.eq.s32.totalorder %s47, 1
      %p175 = por %p173, %p174
      %p176 = scmp.ne.s32.totalorder %s167, %s168
      %p177 = scmp.eq.s32.totalorder %s47, 0
      %p178 = por %p176, %p177
      %p179 = scmp.ne.s32.totalorder %s167, %s168
      %p180 = scmp.eq.s32.totalorder %s48, 1
      %p181 = por %p179, %p180
      %p183 = scmp.ne.s32.totalorder %s168, %s182
      %p184 = scmp.eq.s32.totalorder %s48, 0
      %p185 = por %p183, %p184
      %s187 = sadd.s32 %s186, 1
      %p190 = scmp.eq.s32.totalorder %s42, 1
      %p191 = scmp.ne.s32.totalorder %s186, %s188
      %p192 = scmp.eq.s32.totalorder %s42, 0
      %p193 = por %p191, %p192
      %p194 = scmp.ne.s32.totalorder %s186, %s188
      %p195 = scmp.eq.s32.totalorder %s47, 1
      %p196 = por %p194, %p195
      %p197 = scmp.ne.s32.totalorder %s188, %s189
      %p198 = scmp.eq.s32.totalorder %s47, 0
      %p199 = por %p197, %p198
      %p200 = scmp.ne.s32.totalorder %s188, %s189
      %p201 = scmp.eq.s32.totalorder %s48, 1
      %p202 = por %p200, %p201
      %p204 = scmp.ne.s32.totalorder %s189, %s203
      %p205 = scmp.eq.s32.totalorder %s48, 0
      %p206 = por %p204, %p205
      %s208 = sadd.s32 %s207, 1
      %p211 = scmp.eq.s32.totalorder %s42, 1
      %p212 = scmp.ne.s32.totalorder %s207, %s209
      %p213 = scmp.eq.s32.totalorder %s42, 0
      %p214 = por %p212, %p213
      %p215 = scmp.ne.s32.totalorder %s207, %s209
      %p216 = scmp.eq.s32.totalorder %s47, 1
      %p217 = por %p215, %p216
      %p218 = scmp.ne.s32.totalorder %s209, %s210
      %p219 = scmp.eq.s32.totalorder %s47, 0
      %p220 = por %p218, %p219
      %p221 = scmp.ne.s32.totalorder %s209, %s210
      %p222 = scmp.eq.s32.totalorder %s48, 1
      %p223 = por %p221, %p222
      %p225 = scmp.ne.s32.totalorder %s210, %s224
      %p226 = scmp.eq.s32.totalorder %s48, 0
      %p227 = por %p225, %p226
      %s229 = sadd.s32 %s228, 1
      %p232 = scmp.eq.s32.totalorder %s42, 1
      %p233 = scmp.ne.s32.totalorder %s228, %s230
      %p234 = scmp.eq.s32.totalorder %s42, 0
      %p235 = por %p233, %p234
      %p236 = scmp.ne.s32.totalorder %s228, %s230
      %p237 = scmp.eq.s32.totalorder %s47, 1
      %p238 = por %p236, %p237
      %p239 = scmp.ne.s32.totalorder %s230, %s231
      %p240 = scmp.eq.s32.totalorder %s47, 0
      %p241 = por %p239, %p240
      %p242 = scmp.ne.s32.totalorder %s230, %s231
      %p243 = scmp.eq.s32.totalorder %s48, 1
      %p244 = por %p242, %p243
      %p246 = scmp.ne.s32.totalorder %s231, %s245
      %p247 = scmp.eq.s32.totalorder %s48, 0
      %p248 = por %p246, %p247
      %s250 = sadd.s32 %s249, 1
      %p253 = scmp.eq.s32.totalorder %s42, 1
      %p254 = scmp.ne.s32.totalorder %s249, %s251
      %p255 = scmp.eq.s32.totalorder %s42, 0
      %p256 = por %p254, %p255
      %p257 = scmp.ne.s32.totalorder %s249, %s251
      %p258 = scmp.eq.s32.totalorder %s47, 1
      %p259 = por %p257, %p258
      %p260 = scmp.ne.s32.totalorder %s251, %s252
      %p261 = scmp.eq.s32.totalorder %s47, 0
      %p262 = por %p260, %p261
      %p263 = scmp.ne.s32.totalorder %s251, %s252
      %p264 = scmp.eq.s32.totalorder %s48, 1
      %p265 = por %p263, %p264
      %p267 = scmp.ne.s32.totalorder %s252, %s266
      %p268 = scmp.eq.s32.totalorder %s48, 0
      %p269 = por %p267, %p268
      %s270 = ssub.s32 %s42, %s49
      %p271 = scmp.eq.s32.totalorder %s270, 0
      %s273 = sadd.s32 %s272, 1
      %s274 = scalar_select %p271, %s272, %s273
      %p277 = pneg %p271
      %p278 = scmp.eq.s32.totalorder %s42, 1
      %p279 = por %p277, %p278
      %p280 = scmp.ne.s32.totalorder %s272, %s275
      %p281 = scmp.eq.s32.totalorder %s42, 0
      %p282 = por %p280, %p281
      %p283 = scmp.ne.s32.totalorder %s272, %s275
      %p284 = scmp.eq.s32.totalorder %s47, 1
      %p285 = por %p283, %p284
      %p286 = scmp.ne.s32.totalorder %s275, %s276
      %p287 = scmp.eq.s32.totalorder %s47, 0
      %p288 = por %p286, %p287
      %p289 = scmp.ne.s32.totalorder %s275, %s276
      %p290 = scmp.eq.s32.totalorder %s48, 1
      %p291 = por %p289, %p290
      %p293 = scmp.ne.s32.totalorder %s276, %s292
      %p294 = scmp.eq.s32.totalorder %s48, 0
      %p295 = por %p293, %p294
      %s297 = sadd.s32 %s296, 1
      %p300 = scmp.eq.s32.totalorder %s42, 1
      %p301 = scmp.ne.s32.totalorder %s296, %s298
      %p302 = scmp.eq.s32.totalorder %s42, 0
      %p303 = por %p301, %p302
      %p304 = scmp.ne.s32.totalorder %s296, %s298
      %p305 = scmp.eq.s32.totalorder %s47, 1
      %p306 = por %p304, %p305
      %p307 = scmp.ne.s32.totalorder %s298, %s299
      %p308 = scmp.eq.s32.totalorder %s47, 0
      %p309 = por %p307, %p308
      %p310 = scmp.ne.s32.totalorder %s298, %s299
      %p311 = scmp.eq.s32.totalorder %s48, 1
      %p312 = por %p310, %p311
      %p314 = scmp.ne.s32.totalorder %s299, %s313
      %p315 = scmp.eq.s32.totalorder %s48, 0
      %p316 = por %p314, %p315
      %s318 = sadd.s32 %s317, 1
      %p321 = scmp.eq.s32.totalorder %s42, 1
      %p322 = scmp.ne.s32.totalorder %s317, %s319
      %p323 = scmp.eq.s32.totalorder %s42, 0
      %p324 = por %p322, %p323
      %p325 = scmp.ne.s32.totalorder %s317, %s319
      %p326 = scmp.eq.s32.totalorder %s47, 1
      %p327 = por %p325, %p326
      %p328 = scmp.ne.s32.totalorder %s319, %s320
      %p329 = scmp.eq.s32.totalorder %s47, 0
      %p330 = por %p328, %p329
      %p331 = scmp.ne.s32.totalorder %s319, %s320
      %p332 = scmp.eq.s32.totalorder %s48, 1
      %p333 = por %p331, %p332
      %p335 = scmp.ne.s32.totalorder %s320, %s334
      %p336 = scmp.eq.s32.totalorder %s48, 0
      %p337 = por %p335, %p336
      %s339 = sadd.s32 %s338, 1
      %p342 = scmp.eq.s32.totalorder %s42, 1
      %p343 = scmp.ne.s32.totalorder %s338, %s340
      %p344 = scmp.eq.s32.totalorder %s42, 0
      %p345 = por %p343, %p344
      %p346 = scmp.ne.s32.totalorder %s338, %s340
      %p347 = scmp.eq.s32.totalorder %s47, 1
      %p348 = por %p346, %p347
      %p349 = scmp.ne.s32.totalorder %s340, %s341
      %p350 = scmp.eq.s32.totalorder %s47, 0
      %p351 = por %p349, %p350
      %p352 = scmp.ne.s32.totalorder %s340, %s341
      %p353 = scmp.eq.s32.totalorder %s48, 1
      %p354 = por %p352, %p353
      %p356 = scmp.ne.s32.totalorder %s341, %s355
      %p357 = scmp.eq.s32.totalorder %s48, 0
      %p358 = por %p356, %p357
      %s360 = sadd.s32 %s359, 1
      %p363 = scmp.eq.s32.totalorder %s42, 1
      %p364 = scmp.ne.s32.totalorder %s359, %s361
      %p365 = scmp.eq.s32.totalorder %s42, 0
      %p366 = por %p364, %p365
      %p367 = scmp.ne.s32.totalorder %s359, %s361
      %p368 = scmp.eq.s32.totalorder %s47, 1
      %p369 = por %p367, %p368
      %p370 = scmp.ne.s32.totalorder %s361, %s362
      %p371 = scmp.eq.s32.totalorder %s47, 0
      %p372 = por %p370, %p371
      %p373 = scmp.ne.s32.totalorder %s361, %s362
      %p374 = scmp.eq.s32.totalorder %s48, 1
      %p375 = por %p373, %p374
      %p377 = scmp.ne.s32.totalorder %s362, %s376
      %p378 = scmp.eq.s32.totalorder %s48, 0
      %p379 = por %p377, %p378
      %s381 = sadd.s32 %s380, 1
      %p384 = scmp.eq.s32.totalorder %s42, 1
      %p385 = scmp.ne.s32.totalorder %s380, %s382
      %p386 = scmp.eq.s32.totalorder %s42, 0
      %p387 = por %p385, %p386
      %p388 = scmp.ne.s32.totalorder %s380, %s382
      %p389 = scmp.eq.s32.totalorder %s47, 1
      %p390 = por %p388, %p389
      %p391 = scmp.ne.s32.totalorder %s382, %s383
      %p392 = scmp.eq.s32.totalorder %s47, 0
      %p393 = por %p391, %p392
      %p394 = scmp.ne.s32.totalorder %s382, %s383
      %p395 = scmp.eq.s32.totalorder %s48, 1
      %p396 = por %p394, %p395
      %p398 = scmp.ne.s32.totalorder %s383, %s397
      %p399 = scmp.eq.s32.totalorder %s48, 0
      %p400 = por %p398, %p399
      %s402 = sadd.s32 %s401, 1
      %p405 = scmp.eq.s32.totalorder %s42, 1
      %p406 = scmp.ne.s32.totalorder %s401, %s403
      %p407 = scmp.eq.s32.totalorder %s42, 0
      %p408 = por %p406, %p407
      %p409 = scmp.ne.s32.totalorder %s401, %s403
      %p410 = scmp.eq.s32.totalorder %s47, 1
      %p411 = por %p409, %p410
      %p412 = scmp.ne.s32.totalorder %s403, %s404
      %p413 = scmp.eq.s32.totalorder %s47, 0
      %p414 = por %p412, %p413
      %p415 = scmp.ne.s32.totalorder %s403, %s404
      %p416 = scmp.eq.s32.totalorder %s48, 1
      %p417 = por %p415, %p416
      %p419 = scmp.ne.s32.totalorder %s404, %s418
      %p420 = scmp.eq.s32.totalorder %s48, 0
      %p421 = por %p419, %p420
      %s423 = sadd.s32 %s422, 1
      %p426 = scmp.eq.s32.totalorder %s42, 1
      %p427 = scmp.ne.s32.totalorder %s422, %s424
      %p428 = scmp.eq.s32.totalorder %s42, 0
      %p429 = por %p427, %p428
      %p430 = scmp.ne.s32.totalorder %s422, %s424
      %p431 = scmp.eq.s32.totalorder %s47, 1
      %p432 = por %p430, %p431
      %p433 = scmp.ne.s32.totalorder %s424, %s425
      %p434 = scmp.eq.s32.totalorder %s47, 0
      %p435 = por %p433, %p434
      %p436 = scmp.ne.s32.totalorder %s424, %s425
      %p437 = scmp.eq.s32.totalorder %s48, 1
      %p438 = por %p436, %p437
      %p440 = scmp.ne.s32.totalorder %s425, %s439
      %p441 = scmp.eq.s32.totalorder %s48, 0
      %p442 = por %p440, %p441
      %s444 = sadd.s32 %s443, 1
      %p447 = scmp.eq.s32.totalorder %s42, 1
      %p448 = scmp.ne.s32.totalorder %s443, %s445
      %p449 = scmp.eq.s32.totalorder %s42, 0
      %p450 = por %p448, %p449
      %p451 = scmp.ne.s32.totalorder %s443, %s445
      %p452 = scmp.eq.s32.totalorder %s47, 1
      %p453 = por %p451, %p452
      %p454 = scmp.ne.s32.totalorder %s445, %s446
      %p455 = scmp.eq.s32.totalorder %s47, 0
      %p456 = por %p454, %p455
      %p457 = scmp.ne.s32.totalorder %s445, %s446
      %p458 = scmp.eq.s32.totalorder %s48, 1
      %p459 = por %p457, %p458
      %p461 = scmp.ne.s32.totalorder %s446, %s460
      %p462 = scmp.eq.s32.totalorder %s48, 0
      %p463 = por %p461, %p462
      %s464 = ssub.s32 %s42, %s49
      %p465 = scmp.eq.s32.totalorder %s464, 0
      %s467 = sadd.s32 %s466, 1
      %s468 = scalar_select %p465, %s466, %s467
      %p471 = pneg %p465
      %p472 = scmp.eq.s32.totalorder %s42, 1
      %p473 = por %p471, %p472
      %p474 = scmp.ne.s32.totalorder %s466, %s469
      %p475 = scmp.eq.s32.totalorder %s42, 0
      %p476 = por %p474, %p475
      %p477 = scmp.ne.s32.totalorder %s466, %s469
      %p478 = scmp.eq.s32.totalorder %s47, 1
      %p479 = por %p477, %p478
      %p480 = scmp.ne.s32.totalorder %s469, %s470
      %p481 = scmp.eq.s32.totalorder %s47, 0
      %p482 = por %p480, %p481
      %p483 = scmp.ne.s32.totalorder %s469, %s470
      %p484 = scmp.eq.s32.totalorder %s48, 1
      %p485 = por %p483, %p484
      %p487 = scmp.ne.s32.totalorder %s470, %s486
      %p488 = scmp.eq.s32.totalorder %s48, 0
      %p489 = por %p487, %p488
      %s490 = ssub.s32 %s42, %s49
      %p491 = scmp.eq.s32.totalorder %s490, 0
      %s493 = sadd.s32 %s492, 1
      %s494 = scalar_select %p491, %s492, %s493
      %p497 = pneg %p491
      %p498 = scmp.eq.s32.totalorder %s42, 1
      %p499 = por %p497, %p498
      %p500 = scmp.ne.s32.totalorder %s492, %s495
      %p501 = scmp.eq.s32.totalorder %s42, 0
      %p502 = por %p500, %p501
      %p503 = scmp.ne.s32.totalorder %s492, %s495
      %p504 = scmp.eq.s32.totalorder %s47, 1
      %p505 = por %p503, %p504
      %p506 = scmp.ne.s32.totalorder %s495, %s496
      %p507 = scmp.eq.s32.totalorder %s47, 0
      %p508 = por %p506, %p507
      %p509 = scmp.ne.s32.totalorder %s495, %s496
      %p510 = scmp.eq.s32.totalorder %s48, 1
      %p511 = por %p509, %p510
      %p513 = scmp.ne.s32.totalorder %s496, %s512
      %p514 = scmp.eq.s32.totalorder %s48, 0
      %p515 = por %p513, %p514
      %s516 = ssub.s32 %s42, %s49
      %p517 = scmp.eq.s32.totalorder %s516, 0
      %s519 = sadd.s32 %s518, 1
      %s520 = scalar_select %p517, %s518, %s519
      %p523 = pneg %p517
      %p524 = scmp.eq.s32.totalorder %s42, 1
      %p525 = por %p523, %p524
      %p526 = scmp.ne.s32.totalorder %s518, %s521
      %p527 = scmp.eq.s32.totalorder %s42, 0
      %p528 = por %p526, %p527
      %p529 = scmp.ne.s32.totalorder %s518, %s521
      %p530 = scmp.eq.s32.totalorder %s47, 1
      %p531 = por %p529, %p530
      %p532 = scmp.ne.s32.totalorder %s521, %s522
      %p533 = scmp.eq.s32.totalorder %s47, 0
      %p534 = por %p532, %p533
      %p535 = scmp.ne.s32.totalorder %s521, %s522
      %p536 = scmp.eq.s32.totalorder %s48, 1
      %p537 = por %p535, %p536
      %p539 = scmp.ne.s32.totalorder %s522, %s538
      %p540 = scmp.eq.s32.totalorder %s48, 0
      %p541 = por %p539, %p540
      %p542 = scmp.le.s32.totalorder 1, %s42
      %p543 = scmp.lt.s32.totalorder %s42, 3
      %p544 = pnand %p542, %p543
      %p545 = pneg %p544
      // Predicated region
      $region9: #{tpu_custom_call.1} parent=5 // pred_check
        _
      $region10: #{tpu_custom_call.1} parent=5 // pred_check_branch
        %547 = sbr.rel (%p544) target = $region12
      $region11: #{tpu_custom_call.1} parent=5 // pred_region
        %s548 = ssub.s32 %s42, 1
        // Predicated region
        $region13: #{tpu_custom_call.1} parent=11 // pred_check
          %p549 = pneg %p115
        $region14: #{tpu_custom_call.1} parent=11 // pred_check_branch
          %551 = sbr.rel (%p549) target = $region16
        $region15: #{tpu_custom_call.1} parent=11 // pred_region
          _
        $region16: #{tpu_custom_call.1} parent=11 // pred_fallthru
          _
        // Predicated region
        $region17: #{tpu_custom_call.1} parent=11 // pred_check
          %p552 = pneg %p136
        $region18: #{tpu_custom_call.1} parent=11 // pred_check_branch
          %554 = sbr.rel (%p552) target = $region20
        $region19: #{tpu_custom_call.1} parent=11 // pred_region
          _
        $region20: #{tpu_custom_call.1} parent=11 // pred_fallthru
          _
        // Predicated region
        $region21: #{tpu_custom_call.1} parent=11 // pred_check
          %p555 = pneg %p157
        $region22: #{tpu_custom_call.1} parent=11 // pred_check_branch
          %557 = sbr.rel (%p555) target = $region24
        $region23: #{tpu_custom_call.1} parent=11 // pred_region
          %s559 = ssub.s32 512, 512
          %560 = vsyncadd [#allocation6], %s559
          %s561 = sshll.u32 [#allocation7], 4
          %s562 = int_to_ptr.vmem [resolvable:$true] %s561
          %567 = dma.hbm_to_vmem [thread:$0]  %s4, 512, %s562, [#allocation6], 128, 128, 8
        $region24: #{tpu_custom_call.1} parent=11 // pred_fallthru
          _
        // Predicated region
        $region25: #{tpu_custom_call.1} parent=11 // pred_check
          %p568 = pneg %p178
        $region26: #{tpu_custom_call.1} parent=11 // pred_check_branch
          %570 = sbr.rel (%p568) target = $region28
        $region27: #{tpu_custom_call.1} parent=11 // pred_region
          %s572 = ssub.s32 512, 512
          %573 = vsyncadd [#allocation9], %s572
          %s574 = sshll.u32 [#allocation8], 4
          %s575 = int_to_ptr.vmem [resolvable:$true] %s574
          %580 = dma.hbm_to_vmem [thread:$0]  %s5, 512, %s575, [#allocation9], 128, 128, 8
        $region28: #{tpu_custom_call.1} parent=11 // pred_fallthru
          _
        // Predicated region
        $region29: #{tpu_custom_call.1} parent=11 // pred_check
          %p581 = pneg %p199
        $region30: #{tpu_custom_call.1} parent=11 // pred_check_branch
          %583 = sbr.rel (%p581) target = $region32
        $region31: #{tpu_custom_call.1} parent=11 // pred_region
          %s585 = ssub.s32 512, 512
          %586 = vsyncadd [#allocation9], %s585
          %s587 = sshll.u32 [#allocation10], 4
          %s588 = int_to_ptr.vmem [resolvable:$true] %s587
          %593 = dma.hbm_to_vmem [thread:$0]  %s6, 512, %s588, [#allocation9], 128, 128, 8
        $region32: #{tpu_custom_call.1} parent=11 // pred_fallthru
          _
        // Predicated region
        $region33: #{tpu_custom_call.1} parent=11 // pred_check
          %p594 = pneg %p220
        $region34: #{tpu_custom_call.1} parent=11 // pred_check_branch
          %596 = sbr.rel (%p594) target = $region36
        $region35: #{tpu_custom_call.1} parent=11 // pred_region
          _
        $region36: #{tpu_custom_call.1} parent=11 // pred_fallthru
          _
        // Predicated region
        $region37: #{tpu_custom_call.1} parent=11 // pred_check
          %p597 = pneg %p241
        $region38: #{tpu_custom_call.1} parent=11 // pred_check_branch
          %599 = sbr.rel (%p597) target = $region40
        $region39: #{tpu_custom_call.1} parent=11 // pred_region
          _
        $region40: #{tpu_custom_call.1} parent=11 // pred_fallthru
          _
        // Predicated region
        $region41: #{tpu_custom_call.1} parent=11 // pred_check
          %p600 = pneg %p262
        $region42: #{tpu_custom_call.1} parent=11 // pred_check_branch
          %602 = sbr.rel (%p600) target = $region44
        $region43: #{tpu_custom_call.1} parent=11 // pred_region
          _
        $region44: #{tpu_custom_call.1} parent=11 // pred_fallthru
          _
        // Predicated region
        $region45: #{tpu_custom_call.1} parent=11 // pred_check
          %p603 = pneg %p309
        $region46: #{tpu_custom_call.1} parent=11 // pred_check_branch
          %605 = sbr.rel (%p603) target = $region48
        $region47: #{tpu_custom_call.1} parent=11 // pred_region
          _
        $region48: #{tpu_custom_call.1} parent=11 // pred_fallthru
          _
        // Predicated region
        $region49: #{tpu_custom_call.1} parent=11 // pred_check
          %p606 = pneg %p330
        $region50: #{tpu_custom_call.1} parent=11 // pred_check_branch
          %608 = sbr.rel (%p606) target = $region52
        $region51: #{tpu_custom_call.1} parent=11 // pred_region
          _
        $region52: #{tpu_custom_call.1} parent=11 // pred_fallthru
          _
        // Predicated region
        $region53: #{tpu_custom_call.1} parent=11 // pred_check
          %p609 = pneg %p351
        $region54: #{tpu_custom_call.1} parent=11 // pred_check_branch
          %611 = sbr.rel (%p609) target = $region56
        $region55: #{tpu_custom_call.1} parent=11 // pred_region
          _
        $region56: #{tpu_custom_call.1} parent=11 // pred_fallthru
          _
        // Predicated region
        $region57: #{tpu_custom_call.1} parent=11 // pred_check
          %p612 = pneg %p372
        $region58: #{tpu_custom_call.1} parent=11 // pred_check_branch
          %614 = sbr.rel (%p612) target = $region60
        $region59: #{tpu_custom_call.1} parent=11 // pred_region
          _
        $region60: #{tpu_custom_call.1} parent=11 // pred_fallthru
          _
        // Predicated region
        $region61: #{tpu_custom_call.1} parent=11 // pred_check
          %p615 = pneg %p393
        $region62: #{tpu_custom_call.1} parent=11 // pred_check_branch
          %617 = sbr.rel (%p615) target = $region64
        $region63: #{tpu_custom_call.1} parent=11 // pred_region
          %s619 = ssub.s32 512, 512
          %620 = vsyncadd [#allocation12], %s619
          %s621 = sshll.u32 [#allocation11], 4
          %s622 = int_to_ptr.vmem [resolvable:$true] %s621
          %627 = dma.hbm_to_vmem [thread:$0]  %s15, 512, %s622, [#allocation12], 128, 128, 8
        $region64: #{tpu_custom_call.1} parent=11 // pred_fallthru
          _
        // Predicated region
        $region65: #{tpu_custom_call.1} parent=11 // pred_check
          %p628 = pneg %p414
        $region66: #{tpu_custom_call.1} parent=11 // pred_check_branch
          %630 = sbr.rel (%p628) target = $region68
        $region67: #{tpu_custom_call.1} parent=11 // pred_region
          _
        $region68: #{tpu_custom_call.1} parent=11 // pred_fallthru
          _
        // Predicated region
        $region69: #{tpu_custom_call.1} parent=11 // pred_check
          %p631 = pneg %p435
        $region70: #{tpu_custom_call.1} parent=11 // pred_check_branch
          %633 = sbr.rel (%p631) target = $region72
        $region71: #{tpu_custom_call.1} parent=11 // pred_region
          _
        $region72: #{tpu_custom_call.1} parent=11 // pred_fallthru
          _
        // Predicated region
        $region73: #{tpu_custom_call.1} parent=11 // pred_check
          %p634 = pneg %p456
        $region74: #{tpu_custom_call.1} parent=11 // pred_check_branch
          %636 = sbr.rel (%p634) target = $region76
        $region75: #{tpu_custom_call.1} parent=11 // pred_region
          _
        $region76: #{tpu_custom_call.1} parent=11 // pred_fallthru
          _
      $region12: #{tpu_custom_call.1} parent=5 // pred_fallthru
        _
      %p637 = scmp.lt.s32.totalorder %s42, 2
      // Predicated region
      $region77: #{tpu_custom_call.1} parent=5 // pred_check
        %p638 = pneg %p637
      $region78: #{tpu_custom_call.1} parent=5 // pred_check_branch
        %640 = sbr.rel (%p638) target = $region80
      $region79: #{tpu_custom_call.1} parent=5 // pred_region
        // Predicated region
        $region81: #{tpu_custom_call.1} parent=79 // pred_check
          %p641 = pneg %p62
        $region82: #{tpu_custom_call.1} parent=79 // pred_check_branch
          %643 = sbr.rel (%p641) target = $region84
        $region83: #{tpu_custom_call.1} parent=79 // pred_region
          %s644 = sand.u32 %s52, 1
          %s645 = scalar_lea.sflag [#allocation3], %s644
          %s646 = sand.u32 %s52, 1
          %s647 = smul.addr %s646, 16
          %s648 = scalar_lea.vmem [#allocation2], %s647
          %s649 = smul.u32 2, %s42
          %s650 = ssub.s32 3, %s649
          %p651 = scmp.lt.s32.totalorder %s650, 2
          %s652 = scalar_select %p651, %s650, 2
          %s653 = smul.u32 128, %s652
          %s655 = ssub.s32 256, %s653
          %656 = vsyncadd %s645, %s655
          %p657 = scmp.ne.s32.totalorder 0, %s653
          %s658 = smul.addr %s649, 128
          %s659 = scalar_lea.hbm %s0, %s658
          %s660 = smul.u32 8, %s652
          %s661 = sshll.u32 %s648, 4
          %s662 = int_to_ptr.vmem [resolvable:$true] %s661
          %s663 = sshll.u32 %s660, 4
          %667 = dma.hbm_to_vmem [thread:$0]  (%p657), %s659, %s663, %s662, %s645, 128, 128, 8
        $region84: #{tpu_custom_call.1} parent=79 // pred_fallthru
          _
        // Predicated region
        $region85: #{tpu_custom_call.1} parent=79 // pred_check
          %p668 = pneg %p88
        $region86: #{tpu_custom_call.1} parent=79 // pred_check_branch
          %670 = sbr.rel (%p668) target = $region88
        $region87: #{tpu_custom_call.1} parent=79 // pred_region
          %s671 = sand.u32 %s42, 1
          %s672 = scalar_lea.sflag [#allocation6], %s671
          %s673 = sand.u32 %s78, 1
          %s674 = smul.addr %s673, 16
          %s675 = scalar_lea.vmem [#allocation5], %s674
          %s676 = smul.u32 2, %s42
          %s677 = ssub.s32 3, %s676
          %p678 = scmp.lt.s32.totalorder %s677, 2
          %s679 = scalar_select %p678, %s677, 2
          %s680 = smul.u32 128, %s679
          %s682 = ssub.s32 256, %s680
          %683 = vsyncadd %s672, %s682
          %p684 = scmp.ne.s32.totalorder 0, %s680
          %s685 = smul.addr %s676, 128
          %s686 = scalar_lea.hbm %s1, %s685
          %s687 = smul.u32 8, %s679
          %s688 = sshll.u32 %s675, 4
          %s689 = int_to_ptr.vmem [resolvable:$true] %s688
          %s690 = sshll.u32 %s687, 4
          %694 = dma.hbm_to_vmem [thread:$0]  (%p684), %s686, %s690, %s689, %s672, 128, 128, 8
        $region88: #{tpu_custom_call.1} parent=79 // pred_fallthru
          _
        // Predicated region
        $region89: #{tpu_custom_call.1} parent=79 // pred_check
          %p695 = pneg %p282
        $region90: #{tpu_custom_call.1} parent=79 // pred_check_branch
          %697 = sbr.rel (%p695) target = $region92
        $region91: #{tpu_custom_call.1} parent=79 // pred_region
          %s698 = smul.u32 2, %s42
          %s699 = ssub.s32 3, %s698
          %p700 = scmp.lt.s32.totalorder %s699, 2
          %s701 = scalar_select %p700, %s699, 2
          %s702 = smul.u32 128, %s701
          %s703 = smul.u32 %s702, 2
          %p704 = scmp.lt.s32.totalorder %s698, 2
          %s705 = scalar_select %p704, %s698, 2
          %s706 = smul.addr %s705, 2
          %s707 = smul.addr %s706, 8
          %s708 = scalar_lea.vmem %s10, %s707
          %s709 = smul.u32 2, %s42
          %s710 = ssub.s32 3, %s709
          %p711 = scmp.lt.s32.totalorder %s710, 2
          %s712 = scalar_select %p711, %s710, 2
          %s713 = smul.u32 128, %s712
          %s714 = smul.u32 %s713, 2
        $region92: #{tpu_custom_call.1} parent=79 // pred_fallthru
          _
      $region80: #{tpu_custom_call.1} parent=5 // pred_fallthru
        _
      %p715 = scmp.le.s32.totalorder 1, %s42
      %p716 = scmp.lt.s32.totalorder %s42, 3
      %p717 = pnand %p715, %p716
      %p718 = pneg %p717
      // Predicated region
      $region93: #{tpu_custom_call.1} parent=5 // pred_check
        _
      $region94: #{tpu_custom_call.1} parent=5 // pred_check_branch
        %720 = sbr.rel (%p717) target = $region96
      $region95: #{tpu_custom_call.1} parent=5 // pred_region
        %s721 = ssub.s32 %s42, 1
        %s722 = sand.u32 %s55, 1
        %s723 = scalar_lea.sflag [#allocation3], %s722
        %s724 = sand.u32 %s55, 1
        %s725 = smul.addr %s724, 16
        %s726 = scalar_lea.vmem [#allocation2], %s725
        // Predicated region
        $region97: #{tpu_custom_call.1} parent=95 // pred_check
          %p727 = pneg %p68
        $region98: #{tpu_custom_call.1} parent=95 // pred_check_branch
          %729 = sbr.rel (%p727) target = $region100
        $region99: #{tpu_custom_call.1} parent=95 // pred_region
          %730 = dma.done %s723, 256
        $region100: #{tpu_custom_call.1} parent=95 // pred_fallthru
          _
        %s731 = sand.u32 %s47, 1
        %s732 = scalar_lea.sflag [#allocation6], %s731
        %s733 = sand.u32 %s81, 1
        %s734 = smul.addr %s733, 16
        %s735 = scalar_lea.vmem [#allocation5], %s734
        // Predicated region
        $region101: #{tpu_custom_call.1} parent=95 // pred_check
          %p736 = pneg %p94
        $region102: #{tpu_custom_call.1} parent=95 // pred_check_branch
          %738 = sbr.rel (%p736) target = $region104
        $region103: #{tpu_custom_call.1} parent=95 // pred_region
          %739 = dma.done %s732, 256
        $region104: #{tpu_custom_call.1} parent=95 // pred_fallthru
          _
        // Predicated region
        $region105: #{tpu_custom_call.1} parent=95 // pred_check
          %p740 = pneg %p157
        $region106: #{tpu_custom_call.1} parent=95 // pred_check_branch
          %742 = sbr.rel (%p740) target = $region108
        $region107: #{tpu_custom_call.1} parent=95 // pred_region
          %743 = dma.done [#allocation6], 512
        $region108: #{tpu_custom_call.1} parent=95 // pred_fallthru
          _
        // Predicated region
        $region109: #{tpu_custom_call.1} parent=95 // pred_check
          %p744 = pneg %p178
        $region110: #{tpu_custom_call.1} parent=95 // pred_check_branch
          %746 = sbr.rel (%p744) target = $region112
        $region111: #{tpu_custom_call.1} parent=95 // pred_region
          %747 = dma.done [#allocation9], 512
        $region112: #{tpu_custom_call.1} parent=95 // pred_fallthru
          _
        // Predicated region
        $region113: #{tpu_custom_call.1} parent=95 // pred_check
          %p748 = pneg %p199
        $region114: #{tpu_custom_call.1} parent=95 // pred_check_branch
          %750 = sbr.rel (%p748) target = $region116
        $region115: #{tpu_custom_call.1} parent=95 // pred_region
          %751 = dma.done [#allocation9], 512
        $region116: #{tpu_custom_call.1} parent=95 // pred_fallthru
          _
        // Predicated region
        $region117: #{tpu_custom_call.1} parent=95 // pred_check
          %p752 = pneg %p393
        $region118: #{tpu_custom_call.1} parent=95 // pred_check_branch
          %754 = sbr.rel (%p752) target = $region120
        $region119: #{tpu_custom_call.1} parent=95 // pred_region
          %755 = dma.done [#allocation12], 512
        $region120: #{tpu_custom_call.1} parent=95 // pred_fallthru
          _
        %s756 = sand.u32 %s55, 1
        %s757 = scalar_lea.sflag [#allocation3], %s756
        %s758 = sand.u32 %s55, 1
        %s759 = smul.addr %s758, 16
        %s760 = scalar_lea.vmem [#allocation2], %s759
        %p761 = pneg %p68
        %p762 = pneg %p65
        %s763 = sand.u32 %s47, 1
        %s764 = scalar_lea.sflag [#allocation6], %s763
        %s765 = sand.u32 %s81, 1
        %s766 = smul.addr %s765, 16
        %s767 = scalar_lea.vmem [#allocation5], %s766
        %p768 = pneg %p94
        %p769 = pneg %p91
        %p770 = pneg %p115
        %p771 = pneg %p112
        %p772 = pneg %p136
        %p773 = pneg %p133
        %p774 = pneg %p157
        %p775 = pneg %p154
        %p776 = pneg %p178
        %p777 = pneg %p175
        %p778 = pneg %p199
        %p779 = pneg %p196
        %p780 = pneg %p220
        %p781 = pneg %p217
        %p782 = pneg %p241
        %p783 = pneg %p238
        %p784 = pneg %p262
        %p785 = pneg %p259
        %s786 = smul.u32 2, %s47
        %s787 = ssub.s32 3, %s786
        %p788 = scmp.lt.s32.totalorder %s787, 2
        %s789 = scalar_select %p788, %s787, 2
        %s790 = smul.u32 128, %s789
        %s791 = smul.u32 %s790, 2
        %p792 = scmp.lt.s32.totalorder %s786, 2
        %s793 = scalar_select %p792, %s786, 2
        %s794 = smul.addr %s793, 2
        %s795 = smul.addr %s794, 8
        %s796 = scalar_lea.vmem %s10, %s795
        %p797 = pneg %p288
        %p798 = pneg %p285
        %p799 = pneg %p309
        %p800 = pneg %p306
        %p801 = pneg %p330
        %p802 = pneg %p327
        %p803 = pneg %p351
        %p804 = pneg %p348
        %p805 = pneg %p372
        %p806 = pneg %p369
        %p807 = pneg %p393
        %p808 = pneg %p390
        %p809 = pneg %p414
        %p810 = pneg %p411
        %p811 = pneg %p435
        %p812 = pneg %p432
        %p813 = pneg %p456
        %p814 = pneg %p453
        %p815 = pneg %p482
        %p816 = pneg %p479
        %s817 = sand.u32 %s469, 1
        %s818 = scalar_lea.sflag [#allocation4], %s817
        %s819 = sand.u32 %s469, 1
        %s820 = smul.addr %s819, 16
        %s821 = scalar_lea.vmem [#allocation13], %s820
        %p822 = pneg %p508
        %p823 = pneg %p505
        %s824 = sand.u32 %s47, 1
        %s825 = scalar_lea.sflag [#allocation15], %s824
        %s826 = sand.u32 %s495, 1
        %s827 = smul.addr %s826, 16
        %s828 = scalar_lea.vmem [#allocation14], %s827
        %p829 = pneg %p534
        %p830 = pneg %p531
        %s831 = sand.u32 %s47, 1
        %s832 = scalar_lea.sflag [#allocation15], %s831
        %s833 = sand.u32 %s521, 1
        %s834 = smul.addr %s833, 32
        %s835 = scalar_lea.vmem [#allocation16], %s834
        %s836 = smul.u32 2, %s47
        %s837 = ssub.s32 3, %s836
        %p838 = scmp.lt.s32.totalorder %s837, 2
        %s839 = scalar_select %p838, %s837, 2
        %s840 = smul.u32 128, %s839
        %s841 = smul.u32 2, %s47
        %s842 = ssub.s32 3, %s841
        %p843 = scmp.lt.s32.totalorder %s842, 2
        %s844 = scalar_select %p843, %s842, 2
        %s845 = smul.u32 128, %s844
        %s846 = smul.u32 2, %s47
        %s847 = ssub.s32 3, %s846
        %p848 = scmp.lt.s32.totalorder %s847, 2
        %s849 = scalar_select %p848, %s847, 2
        %s850 = smul.u32 128, %s849
        %s851 = smul.u32 %s850, 2
        %p852 = scmp.lt.s32.totalorder %s846, 2
        %s853 = scalar_select %p852, %s846, 2
        %s854 = smul.addr %s853, 2
        %s855 = smul.addr %s854, 8
        %s856 = scalar_lea.vmem %s10, %s855
        %s857 = smul.u32 2, %s47
        %s858 = ssub.s32 3, %s857
        %p859 = scmp.lt.s32.totalorder %s858, 2
        %s860 = scalar_select %p859, %s858, 2
        %s861 = smul.u32 128, %s860
        %s862 = smul.u32 %s861, 2
        %s863 = smul.u32 2, %s47
        %s864 = ssub.s32 3, %s863
        %p865 = scmp.lt.s32.totalorder %s864, 2
        %s866 = scalar_select %p865, %s864, 2
        %s867 = smul.u32 128, %s866
        %s868 = smul.u32 2, %s47
        %s869 = ssub.s32 3, %s868
        %p870 = scmp.lt.s32.totalorder %s869, 2
        %s871 = scalar_select %p870, %s869, 2
        %s872 = smul.u32 128, %s871
        %s873 = smul.u32 2, %s47
        %s874 = ssub.s32 3, %s873
        %p875 = scmp.lt.s32.totalorder %s874, 2
        %s876 = scalar_select %p875, %s874, 2
        %s877 = smul.u32 128, %s876
        %s878 = smul.u32 %s877, 2
        %v879 = vld [vmem:[%s726] sm:$0xff]
        %v880 = vld [vmem:[%s726 + $0x8] sm:$0xff]
        %v881 = vld [vmem:[%s735] sm:$0xff]
        %v882 = vld [vmem:[%s735 + $0x8] sm:$0xff]
        %v883 = vld [vmem:[%s2] sm:$0xff]
        %v884 = vld [vmem:[%s2 + $0x8] sm:$0xff]
        %v885 = vld [vmem:[%s2 + $0x10] sm:$0xff]
        %v886 = vld [vmem:[%s2 + $0x18] sm:$0xff]
        %v887 = vld [vmem:[%s2 + $0x20] sm:$0xff]
        %v888 = vld [vmem:[%s2 + $0x28] sm:$0xff]
        %v889 = vld [vmem:[%s2 + $0x30] sm:$0xff]
        %v890 = vld [vmem:[%s2 + $0x38] sm:$0xff]
        %v891 = vld [vmem:[%s2 + $0x40] sm:$0xff]
        %v892 = vld [vmem:[%s2 + $0x48] sm:$0xff]
        %v893 = vld [vmem:[%s2 + $0x50] sm:$0xff]
        %v894 = vld [vmem:[%s2 + $0x58] sm:$0xff]
        %vm895 = vcmask 785408
        %v897 = vsel %vm895, %v881, 0
        %v900 = vsel %vm895, %v882, 0
        %902 = vmatprep.subr.mxu0 0.0
        %903 = vmatpush1.msra.mxu0 %v883
        %904 = vmatprep.subr.mxu0 0.0
        %905 = vmatpush1.msra.mxu0 %v884
        %906 = vmatprep.subr.mxu0 0.0
        %907 = vmatpush1.msra.mxu0 %v885
        %908 = vmatprep.subr.mxu0 0.0
        %909 = vmatpush1.msra.mxu0 %v886
        %910 = vmatprep.subr.mxu0 0.0
        %911 = vmatpush1.msra.mxu0 %v887
        %912 = vmatprep.subr.mxu0 0.0
        %913 = vmatpush1.msra.mxu0 %v888
        %914 = vmatprep.subr.mxu0 0.0
        %915 = vmatpush1.msra.mxu0 %v889
        %916 = vmatprep.subr.mxu0 0.0
        %917 = vmatpush1.msra.mxu0 %v890
        %918 = vmatprep.subr.mxu0 0.0
        %919 = vmatpush1.msra.mxu0 %v891
        %920 = vmatprep.subr.mxu0 0.0
        %921 = vmatpush1.msra.mxu0 %v892
        %922 = vmatprep.subr.mxu0 0.0
        %923 = vmatpush1.msra.mxu0 %v893
        %924 = vmatprep.subr.mxu0 0.0
        %925 = vmatpush1.msra.mxu0 %v894
        %926 = vmatprep.subr.mxu0 0.0
        %927 = vmatpush1.msra.mxu0 0.0
        %928 = vmatprep.subr.mxu0 0.0
        %929 = vmatpush1.msra.mxu0 0.0
        %930 = vmatprep.subr.mxu0 0.0
        %931 = vmatpush1.msra.mxu0 0.0
        %932 = vmatprep.subr.mxu0 0.0
        %933 = vmatpush1.msra.mxu0 0.0
        %934 = vmatprep.subr.mxu0 0.0
        %935 = vmatpush1.msra.mxu0 0.0
        %936 = vmatprep.subr.mxu0 0.0
        %937 = vmatpush1.msra.mxu0 0.0
        %938 = vmatprep.subr.mxu0 0.0
        %939 = vmatpush1.msra.mxu0 0.0
        %940 = vmatprep.subr.mxu0 0.0
        %941 = vmatpush1.msra.mxu0 0.0
        %942 = vmatprep.subr.mxu0 0.0
        %943 = vmatpush1.msra.mxu0 0.0
        %944 = vmatprep.subr.mxu0 0.0
        %945 = vmatpush1.msra.mxu0 0.0
        %946 = vmatprep.subr.mxu0 0.0
        %947 = vmatpush1.msra.mxu0 0.0
        %948 = vmatprep.subr.mxu0 0.0
        %949 = vmatpush1.msra.mxu0 0.0
        %950 = vmatprep.subr.mxu0 0.0
        %951 = vmatpush1.msra.mxu0 0.0
        %952 = vmatprep.subr.mxu0 0.0
        %953 = vmatpush1.msra.mxu0 0.0
        %954 = vmatprep.subr.mxu0 0.0
        %955 = vmatpush1.msra.mxu0 0.0
        %956 = vmatprep.subr.mxu0 0.0
        %957 = vmatpush1.msra.mxu0 0.0
        %958 = vmatprep.subr.mxu0 0.0
        %959 = vmatpush1.msra.mxu0 0.0
        %960 = vmatprep.subr.mxu0 0.0
        %961 = vmatpush1.msra.mxu0 0.0
        %962 = vmatprep.subr.mxu0 0.0
        %963 = vmatpush1.msra.mxu0 0.0
        %964 = vmatprep.subr.mxu0 0.0
        %965 = vmatpush1.msra.mxu0 0.0
        %966 = vmatprep.mubr.f32.mxu0 0.0
        %967 = vmatmul.mubr.f32.gmra.mrb[0].mxu0 %v897
        %v968 = vpop.f32.mrb[0].mxu0
        %v969 = vadd.f32 0.0, %v968
        %v970 = vpop.f32.mrb[0].mxu0
        %971 = vmatprep.mubr.f32.mxu0 0.0
        %972 = vmatmul.mubr.f32.gmra.mrb[0].mxu0 %v900
        %v973 = vpop.f32.mrb[0].mxu0
        %v974 = vadd.f32 0.0, %v973
        %v975 = vpop.f32.mrb[0].mxu0
        %976 = vdwg.mxu0
        %v977 = vmul.f32 %v969, %v969
        %v978 = vmul.f32 %v974, %v974
        %v979 = vld [vmem:[%s3] sm:$0xff]
        %v980 = vld [vmem:[%s3 + $0x8] sm:$0xff]
        %v981 = vld [vmem:[%s3 + $0x10] sm:$0xff]
        %v982 = vld [vmem:[%s3 + $0x18] sm:$0xff]
        %v983 = vld [vmem:[%s3 + $0x20] sm:$0xff]
        %v984 = vld [vmem:[%s3 + $0x28] sm:$0xff]
        %v985 = vld [vmem:[%s3 + $0x30] sm:$0xff]
        %v986 = vld [vmem:[%s3 + $0x38] sm:$0xff]
        %v987 = vld [vmem:[%s3 + $0x40] sm:$0xff]
        %v988 = vld [vmem:[%s3 + $0x48] sm:$0xff]
        %v989 = vld [vmem:[%s3 + $0x50] sm:$0xff]
        %v990 = vld [vmem:[%s3 + $0x58] sm:$0xff]
        %v992 = vsel %vm895, %v977, 0
        %v995 = vsel %vm895, %v978, 0
        %997 = vmatprep.subr.mxu0 0.0
        %998 = vmatpush1.msra.mxu0 %v979
        %999 = vmatprep.subr.mxu0 0.0
        %1000 = vmatpush1.msra.mxu0 %v980
        %1001 = vmatprep.subr.mxu0 0.0
        %1002 = vmatpush1.msra.mxu0 %v981
        %1003 = vmatprep.subr.mxu0 0.0
        %1004 = vmatpush1.msra.mxu0 %v982
        %1005 = vmatprep.subr.mxu0 0.0
        %1006 = vmatpush1.msra.mxu0 %v983
        %1007 = vmatprep.subr.mxu0 0.0
        %1008 = vmatpush1.msra.mxu0 %v984
        %1009 = vmatprep.subr.mxu0 0.0
        %1010 = vmatpush1.msra.mxu0 %v985
        %1011 = vmatprep.subr.mxu0 0.0
        %1012 = vmatpush1.msra.mxu0 %v986
        %1013 = vmatprep.subr.mxu0 0.0
        %1014 = vmatpush1.msra.mxu0 %v987
        %1015 = vmatprep.subr.mxu0 0.0
        %1016 = vmatpush1.msra.mxu0 %v988
        %1017 = vmatprep.subr.mxu0 0.0
        %1018 = vmatpush1.msra.mxu0 %v989
        %1019 = vmatprep.subr.mxu0 0.0
        %1020 = vmatpush1.msra.mxu0 %v990
        %1021 = vmatprep.subr.mxu0 0.0
        %1022 = vmatpush1.msra.mxu0 0.0
        %1023 = vmatprep.subr.mxu0 0.0
        %1024 = vmatpush1.msra.mxu0 0.0
        %1025 = vmatprep.subr.mxu0 0.0
        %1026 = vmatpush1.msra.mxu0 0.0
        %1027 = vmatprep.subr.mxu0 0.0
        %1028 = vmatpush1.msra.mxu0 0.0
        %1029 = vmatprep.subr.mxu0 0.0
        %1030 = vmatpush1.msra.mxu0 0.0
        %1031 = vmatprep.subr.mxu0 0.0
        %1032 = vmatpush1.msra.mxu0 0.0
        %1033 = vmatprep.subr.mxu0 0.0
        %1034 = vmatpush1.msra.mxu0 0.0
        %1035 = vmatprep.subr.mxu0 0.0
        %1036 = vmatpush1.msra.mxu0 0.0
        %1037 = vmatprep.subr.mxu0 0.0
        %1038 = vmatpush1.msra.mxu0 0.0
        %1039 = vmatprep.subr.mxu0 0.0
        %1040 = vmatpush1.msra.mxu0 0.0
        %1041 = vmatprep.subr.mxu0 0.0
        %1042 = vmatpush1.msra.mxu0 0.0
        %1043 = vmatprep.subr.mxu0 0.0
        %1044 = vmatpush1.msra.mxu0 0.0
        %1045 = vmatprep.subr.mxu0 0.0
        %1046 = vmatpush1.msra.mxu0 0.0
        %1047 = vmatprep.subr.mxu0 0.0
        %1048 = vmatpush1.msra.mxu0 0.0
        %1049 = vmatprep.subr.mxu0 0.0
        %1050 = vmatpush1.msra.mxu0 0.0
        %1051 = vmatprep.subr.mxu0 0.0
        %1052 = vmatpush1.msra.mxu0 0.0
        %1053 = vmatprep.subr.mxu0 0.0
        %1054 = vmatpush1.msra.mxu0 0.0
        %1055 = vmatprep.subr.mxu0 0.0
        %1056 = vmatpush1.msra.mxu0 0.0
        %1057 = vmatprep.subr.mxu0 0.0
        %1058 = vmatpush1.msra.mxu0 0.0
        %1059 = vmatprep.subr.mxu0 0.0
        %1060 = vmatpush1.msra.mxu0 0.0
        %1061 = vmatprep.mubr.f32.mxu0 0.0
        %1062 = vmatmul.mubr.f32.gmra.mrb[0].mxu0 %v992
        %v1063 = vpop.f32.mrb[0].mxu0
        %v1064 = vadd.f32 0.0, %v1063
        %v1065 = vpop.f32.mrb[0].mxu0
        %1066 = vmatprep.mubr.f32.mxu0 0.0
        %1067 = vmatmul.mubr.f32.gmra.mrb[0].mxu0 %v995
        %v1068 = vpop.f32.mrb[0].mxu0
        %v1069 = vadd.f32 0.0, %v1068
        %v1070 = vpop.f32.mrb[0].mxu0
        %1071 = vdwg.mxu0
        %v1072 = vrsqrt.pop %v1064
        %v1073 = vmul.f32 %v1064, %v1072
        %vm1074 = vcmp.eq.f32.partialorder %v1064, inf
        %v1075 = vsel %vm1074, %v1064, %v1073
        %vm1076 = vcmp.eq.f32.partialorder %v1064, 0.0
        %v1077 = vand.u32 %v1064, 2147483648
        %v1078 = vsel %vm1076, %v1077, %v1075
        %v1079 = vrsqrt.pop %v1069
        %v1080 = vmul.f32 %v1069, %v1079
        %vm1081 = vcmp.eq.f32.partialorder %v1069, inf
        %v1082 = vsel %vm1081, %v1069, %v1080
        %vm1083 = vcmp.eq.f32.partialorder %v1069, 0.0
        %v1084 = vand.u32 %v1069, 2147483648
        %v1085 = vsel %vm1083, %v1084, %v1082
        %v1086 = vld [vmem:[#allocation8] sm:$0xff]
        %v1087 = vld [vmem:[#allocation8 + $0x8] sm:$0xff]
        %v1088 = vld [vmem:[#allocation8 + $0x10] sm:$0xff]
        %v1089 = vld [vmem:[#allocation8 + $0x18] sm:$0xff]
        %v1090 = vld [vmem:[#allocation10] sm:$0xff]
        %v1091 = vld [vmem:[#allocation10 + $0x8] sm:$0xff]
        %v1092 = vld [vmem:[#allocation10 + $0x10] sm:$0xff]
        %v1093 = vld [vmem:[#allocation10 + $0x18] sm:$0xff]
        %vm1094 = vcmask 261120
        %v1096 = vsel %vm1094, %v1078, 0
        %v1099 = vsel %vm1094, %v1085, 0
        %1101 = vmatprep.subr.mxu0 0.0
        %1102 = vmatpush1.msra.mxu0 %v1090
        %1103 = vmatprep.subr.mxu0 0.0
        %1104 = vmatpush1.msra.mxu0 %v1091
        %1105 = vmatprep.subr.mxu0 0.0
        %1106 = vmatpush1.msra.mxu0 %v1092
        %1107 = vmatprep.subr.mxu0 0.0
        %1108 = vmatpush1.msra.mxu0 %v1093
        %1109 = vmatprep.subr.mxu0 0.0
        %1110 = vmatpush1.msra.mxu0 0.0
        %1111 = vmatprep.subr.mxu0 0.0
        %1112 = vmatpush1.msra.mxu0 0.0
        %1113 = vmatprep.subr.mxu0 0.0
        %1114 = vmatpush1.msra.mxu0 0.0
        %1115 = vmatprep.subr.mxu0 0.0
        %1116 = vmatpush1.msra.mxu0 0.0
        %1117 = vmatprep.subr.mxu0 0.0
        %1118 = vmatpush1.msra.mxu0 0.0
        %1119 = vmatprep.subr.mxu0 0.0
        %1120 = vmatpush1.msra.mxu0 0.0
        %1121 = vmatprep.subr.mxu0 0.0
        %1122 = vmatpush1.msra.mxu0 0.0
        %1123 = vmatprep.subr.mxu0 0.0
        %1124 = vmatpush1.msra.mxu0 0.0
        %1125 = vmatprep.subr.mxu0 0.0
        %1126 = vmatpush1.msra.mxu0 0.0
        %1127 = vmatprep.subr.mxu0 0.0
        %1128 = vmatpush1.msra.mxu0 0.0
        %1129 = vmatprep.subr.mxu0 0.0
        %1130 = vmatpush1.msra.mxu0 0.0
        %1131 = vmatprep.subr.mxu0 0.0
        %1132 = vmatpush1.msra.mxu0 0.0
        %1133 = vmatprep.subr.mxu0 0.0
        %1134 = vmatpush1.msra.mxu0 0.0
        %1135 = vmatprep.subr.mxu0 0.0
        %1136 = vmatpush1.msra.mxu0 0.0
        %1137 = vmatprep.subr.mxu0 0.0
        %1138 = vmatpush1.msra.mxu0 0.0
        %1139 = vmatprep.subr.mxu0 0.0
        %1140 = vmatpush1.msra.mxu0 0.0
        %1141 = vmatprep.subr.mxu0 0.0
        %1142 = vmatpush1.msra.mxu0 0.0
        %1143 = vmatprep.subr.mxu0 0.0
        %1144 = vmatpush1.msra.mxu0 0.0
        %1145 = vmatprep.subr.mxu0 0.0
        %1146 = vmatpush1.msra.mxu0 0.0
        %1147 = vmatprep.subr.mxu0 0.0
        %1148 = vmatpush1.msra.mxu0 0.0
        %1149 = vmatprep.subr.mxu0 0.0
        %1150 = vmatpush1.msra.mxu0 0.0
        %1151 = vmatprep.subr.mxu0 0.0
        %1152 = vmatpush1.msra.mxu0 0.0
        %1153 = vmatprep.subr.mxu0 0.0
        %1154 = vmatpush1.msra.mxu0 0.0
        %1155 = vmatprep.subr.mxu0 0.0
        %1156 = vmatpush1.msra.mxu0 0.0
        %1157 = vmatprep.subr.mxu0 0.0
        %1158 = vmatpush1.msra.mxu0 0.0
        %1159 = vmatprep.subr.mxu0 0.0
        %1160 = vmatpush1.msra.mxu0 0.0
        %1161 = vmatprep.subr.mxu0 0.0
        %1162 = vmatpush1.msra.mxu0 0.0
        %1163 = vmatprep.subr.mxu0 0.0
        %1164 = vmatpush1.msra.mxu0 0.0
        %1165 = vmatprep.mubr.f32.mxu0 0.0
        %1166 = vmatmul.mubr.f32.gmra.mrb[0].mxu0 %v1096
        %v1167 = vpop.f32.mrb[0].mxu0
        %v1168 = vadd.f32 0.0, %v1167
        %v1169 = vpop.f32.mrb[0].mxu0
        %1170 = vmatprep.mubr.f32.mxu0 0.0
        %1171 = vmatmul.mubr.f32.gmra.mrb[0].mxu0 %v1099
        %v1172 = vpop.f32.mrb[0].mxu0
        %v1173 = vadd.f32 0.0, %v1172
        %v1174 = vpop.f32.mrb[0].mxu0
        %1175 = vdwg.mxu0
        %v1177 = vsel %vm1094, %v879, 0
        %v1180 = vsel %vm1094, %v880, 0
        %1182 = vmatprep.subr.mxu0 0.0
        %1183 = vmatpush1.msra.mxu0 %v1086
        %1184 = vmatprep.subr.mxu0 0.0
        %1185 = vmatpush1.msra.mxu0 %v1087
        %1186 = vmatprep.subr.mxu0 0.0
        %1187 = vmatpush1.msra.mxu0 %v1088
        %1188 = vmatprep.subr.mxu0 0.0
        %1189 = vmatpush1.msra.mxu0 %v1089
        %1190 = vmatprep.subr.mxu0 0.0
        %1191 = vmatpush1.msra.mxu0 0.0
        %1192 = vmatprep.subr.mxu0 0.0
        %1193 = vmatpush1.msra.mxu0 0.0
        %1194 = vmatprep.subr.mxu0 0.0
        %1195 = vmatpush1.msra.mxu0 0.0
        %1196 = vmatprep.subr.mxu0 0.0
        %1197 = vmatpush1.msra.mxu0 0.0
        %1198 = vmatprep.subr.mxu0 0.0
        %1199 = vmatpush1.msra.mxu0 0.0
        %1200 = vmatprep.subr.mxu0 0.0
        %1201 = vmatpush1.msra.mxu0 0.0
        %1202 = vmatprep.subr.mxu0 0.0
        %1203 = vmatpush1.msra.mxu0 0.0
        %1204 = vmatprep.subr.mxu0 0.0
        %1205 = vmatpush1.msra.mxu0 0.0
        %1206 = vmatprep.subr.mxu0 0.0
        %1207 = vmatpush1.msra.mxu0 0.0
        %1208 = vmatprep.subr.mxu0 0.0
        %1209 = vmatpush1.msra.mxu0 0.0
        %1210 = vmatprep.subr.mxu0 0.0
        %1211 = vmatpush1.msra.mxu0 0.0
        %1212 = vmatprep.subr.mxu0 0.0
        %1213 = vmatpush1.msra.mxu0 0.0
        %1214 = vmatprep.subr.mxu0 0.0
        %1215 = vmatpush1.msra.mxu0 0.0
        %1216 = vmatprep.subr.mxu0 0.0
        %1217 = vmatpush1.msra.mxu0 0.0
        %1218 = vmatprep.subr.mxu0 0.0
        %1219 = vmatpush1.msra.mxu0 0.0
        %1220 = vmatprep.subr.mxu0 0.0
        %1221 = vmatpush1.msra.mxu0 0.0
        %1222 = vmatprep.subr.mxu0 0.0
        %1223 = vmatpush1.msra.mxu0 0.0
        %1224 = vmatprep.subr.mxu0 0.0
        %1225 = vmatpush1.msra.mxu0 0.0
        %1226 = vmatprep.subr.mxu0 0.0
        %1227 = vmatpush1.msra.mxu0 0.0
        %1228 = vmatprep.subr.mxu0 0.0
        %1229 = vmatpush1.msra.mxu0 0.0
        %1230 = vmatprep.subr.mxu0 0.0
        %1231 = vmatpush1.msra.mxu0 0.0
        %1232 = vmatprep.subr.mxu0 0.0
        %1233 = vmatpush1.msra.mxu0 0.0
        %1234 = vmatprep.subr.mxu0 0.0
        %1235 = vmatpush1.msra.mxu0 0.0
        %1236 = vmatprep.subr.mxu0 0.0
        %1237 = vmatpush1.msra.mxu0 0.0
        %1238 = vmatprep.subr.mxu0 0.0
        %1239 = vmatpush1.msra.mxu0 0.0
        %1240 = vmatprep.subr.mxu0 0.0
        %1241 = vmatpush1.msra.mxu0 0.0
        %1242 = vmatprep.subr.mxu0 0.0
        %1243 = vmatpush1.msra.mxu0 0.0
        %1244 = vmatprep.subr.mxu0 0.0
        %1245 = vmatpush1.msra.mxu0 0.0
        %1246 = vmatprep.mubr.f32.mxu0 0.0
        %1247 = vmatmul.mubr.f32.gmra.mrb[0].mxu0 %v1177
        %v1248 = vpop.f32.mrb[0].mxu0
        %v1249 = vadd.f32 %v1168, %v1248
        %v1250 = vpop.f32.mrb[0].mxu0
        %1251 = vmatprep.mubr.f32.mxu0 0.0
        %1252 = vmatmul.mubr.f32.gmra.mrb[0].mxu0 %v1180
        %v1253 = vpop.f32.mrb[0].mxu0
        %v1254 = vadd.f32 %v1173, %v1253
        %v1255 = vpop.f32.mrb[0].mxu0
        %1256 = vdwg.mxu0
        %v1257 = vld [vmem:[%s7] sm:$0x1]
        %v1259 = vlaneseq
        %v1260 = vshrl.u32 %v1259, 7
        %v1261 = vsub.s32 0, %v1260
        %v1262 = vrot.slane %v1257, %v1261
        %v1264 = vadd.f32 %v1249, %v1262
        %v1265 = vadd.f32 %v1254, %v1262
        %v1266 = vxor.u32 %v1264, 2147483648
        %v1267 = vxor.u32 %v1265, 2147483648
        %v1268 = vmul.f32 %v1266, 1.442695
        %v1269 = vpow.pop %v1268
        %v1270 = vmul.f32 %v1267, 1.442695
        %v1271 = vpow.pop %v1270
        %v1272 = vadd.f32 %v1269, 1.0
        %v1273 = vadd.f32 %v1271, 1.0
        %v1274 = vrcp.pop %v1272
        %v1275 = vmul.f32 1.0, %v1274
        %v1276 = vrcp.pop %v1273
        %v1277 = vmul.f32 1.0, %v1276
        %v1278 = vmul.f32 %v1264, %v1275
        %v1279 = vmul.f32 %v1265, %v1277
        %v1280 = vld [vmem:[%s8] sm:$0xff]
        %v1281 = vld [vmem:[%s8 + $0x8] sm:$0xff]
        %v1282 = vld [vmem:[%s8 + $0x10] sm:$0xff]
        %v1283 = vld [vmem:[%s8 + $0x18] sm:$0xff]
        %v1284 = vld [vmem:[%s8 + $0x20] sm:$0xff]
        %v1285 = vld [vmem:[%s8 + $0x28] sm:$0xff]
        %v1286 = vld [vmem:[%s8 + $0x30] sm:$0xff]
        %v1287 = vld [vmem:[%s8 + $0x38] sm:$0xff]
        %v1288 = vld [vmem:[%s8 + $0x40] sm:$0xff]
        %v1289 = vld [vmem:[%s8 + $0x48] sm:$0xff]
        %v1290 = vld [vmem:[%s8 + $0x50] sm:$0xff]
        %v1291 = vld [vmem:[%s8 + $0x58] sm:$0xff]
        %v1292 = vld [vmem:[%s8 + $0x60] sm:$0xff]
        %v1293 = vld [vmem:[%s8 + $0x68] sm:$0xff]
        %v1294 = vld [vmem:[%s8 + $0x70] sm:$0xff]
        %v1295 = vld [vmem:[%s8 + $0x78] sm:$0xff]
        %v1296 = vld [vmem:[%s9] sm:$0x1]
        %v1298 = vlaneseq
        %v1299 = vshrl.u32 %v1298, 7
        %v1300 = vsub.s32 0, %v1299
        %v1301 = vrot.slane %v1296, %v1300
        %1303 = vmatprep.subr.mxu0 0.0
        %1304 = vmatpush1.msra.mxu0 %v1280
        %1305 = vmatprep.subr.mxu0 0.0
        %1306 = vmatpush1.msra.mxu0 %v1281
        %1307 = vmatprep.subr.mxu0 0.0
        %1308 = vmatpush1.msra.mxu0 %v1282
        %1309 = vmatprep.subr.mxu0 0.0
        %1310 = vmatpush1.msra.mxu0 %v1283
        %1311 = vmatprep.subr.mxu0 0.0
        %1312 = vmatpush1.msra.mxu0 %v1284
        %1313 = vmatprep.subr.mxu0 0.0
        %1314 = vmatpush1.msra.mxu0 %v1285
        %1315 = vmatprep.subr.mxu0 0.0
        %1316 = vmatpush1.msra.mxu0 %v1286
        %1317 = vmatprep.subr.mxu0 0.0
        %1318 = vmatpush1.msra.mxu0 %v1287
        %1319 = vmatprep.subr.mxu0 0.0
        %1320 = vmatpush1.msra.mxu0 %v1288
        %1321 = vmatprep.subr.mxu0 0.0
        %1322 = vmatpush1.msra.mxu0 %v1289
        %1323 = vmatprep.subr.mxu0 0.0
        %1324 = vmatpush1.msra.mxu0 %v1290
        %1325 = vmatprep.subr.mxu0 0.0
        %1326 = vmatpush1.msra.mxu0 %v1291
        %1327 = vmatprep.subr.mxu0 0.0
        %1328 = vmatpush1.msra.mxu0 %v1292
        %1329 = vmatprep.subr.mxu0 0.0
        %1330 = vmatpush1.msra.mxu0 %v1293
        %1331 = vmatprep.subr.mxu0 0.0
        %1332 = vmatpush1.msra.mxu0 %v1294
        %1333 = vmatprep.subr.mxu0 0.0
        %1334 = vmatpush1.msra.mxu0 %v1295
        %1335 = vmatprep.subr.mxu0 0.0
        %1336 = vmatpush1.msra.mxu0 0.0
        %1337 = vmatprep.subr.mxu0 0.0
        %1338 = vmatpush1.msra.mxu0 0.0
        %1339 = vmatprep.subr.mxu0 0.0
        %1340 = vmatpush1.msra.mxu0 0.0
        %1341 = vmatprep.subr.mxu0 0.0
        %1342 = vmatpush1.msra.mxu0 0.0
        %1343 = vmatprep.subr.mxu0 0.0
        %1344 = vmatpush1.msra.mxu0 0.0
        %1345 = vmatprep.subr.mxu0 0.0
        %1346 = vmatpush1.msra.mxu0 0.0
        %1347 = vmatprep.subr.mxu0 0.0
        %1348 = vmatpush1.msra.mxu0 0.0
        %1349 = vmatprep.subr.mxu0 0.0
        %1350 = vmatpush1.msra.mxu0 0.0
        %1351 = vmatprep.subr.mxu0 0.0
        %1352 = vmatpush1.msra.mxu0 0.0
        %1353 = vmatprep.subr.mxu0 0.0
        %1354 = vmatpush1.msra.mxu0 0.0
        %1355 = vmatprep.subr.mxu0 0.0
        %1356 = vmatpush1.msra.mxu0 0.0
        %1357 = vmatprep.subr.mxu0 0.0
        %1358 = vmatpush1.msra.mxu0 0.0
        %1359 = vmatprep.subr.mxu0 0.0
        %1360 = vmatpush1.msra.mxu0 0.0
        %1361 = vmatprep.subr.mxu0 0.0
        %1362 = vmatpush1.msra.mxu0 0.0
        %1363 = vmatprep.subr.mxu0 0.0
        %1364 = vmatpush1.msra.mxu0 0.0
        %1365 = vmatprep.subr.mxu0 0.0
        %1366 = vmatpush1.msra.mxu0 0.0
        %1367 = vmatprep.mubr.f32.mxu0 0.0
        %1368 = vmatmul.mubr.f32.gmra.mrb[0].mxu0 %v1278
        %v1369 = vpop.f32.mrb[0].mxu0
        %v1370 = vadd.f32 %v1301, %v1369
        %v1371 = vpop.f32.mrb[0].mxu0
        %1372 = vmatprep.mubr.f32.mxu0 0.0
        %1373 = vmatmul.mubr.f32.gmra.mrb[0].mxu0 %v1279
        %v1374 = vpop.f32.mrb[0].mxu0
        %v1375 = vadd.f32 %v1301, %v1374
        %v1376 = vpop.f32.mrb[0].mxu0
        %1377 = vdwg.mxu0
        %v1378 = vadd.f32 %v1370, 0.0
        %v1379 = vadd.f32 %v1375, 0.0
        %v1380 = vld [vmem:[#allocation7] sm:$0xff]
        %v1381 = vld [vmem:[#allocation7 + $0x8] sm:$0xff]
        %v1382 = vld [vmem:[#allocation7 + $0x10] sm:$0xff]
        %v1383 = vld [vmem:[#allocation7 + $0x18] sm:$0xff]
        %1386 = vrot.lane.b32.xlu0 %v1370, 96
        %v1387 = vpop.permute.xlu0 %1386
        %1388 = vrot.lane.b32.xlu0 %v1375, 96
        %v1389 = vpop.permute.xlu0 %1388
        %v1390 = vsel %vm1094, %v1387, 0
        %v1392 = vsel %vm1094, %v1389, 0
        %1394 = vmatprep.subr.mxu0 0.0
        %1395 = vmatpush1.msra.mxu0 %v1380
        %1396 = vmatprep.subr.mxu0 0.0
        %1397 = vmatpush1.msra.mxu0 %v1381
        %1398 = vmatprep.subr.mxu0 0.0
        %1399 = vmatpush1.msra.mxu0 %v1382
        %1400 = vmatprep.subr.mxu0 0.0
        %1401 = vmatpush1.msra.mxu0 %v1383
        %1402 = vmatprep.subr.mxu0 0.0
        %1403 = vmatpush1.msra.mxu0 0.0
        %1404 = vmatprep.subr.mxu0 0.0
        %1405 = vmatpush1.msra.mxu0 0.0
        %1406 = vmatprep.subr.mxu0 0.0
        %1407 = vmatpush1.msra.mxu0 0.0
        %1408 = vmatprep.subr.mxu0 0.0
        %1409 = vmatpush1.msra.mxu0 0.0
        %1410 = vmatprep.subr.mxu0 0.0
        %1411 = vmatpush1.msra.mxu0 0.0
        %1412 = vmatprep.subr.mxu0 0.0
        %1413 = vmatpush1.msra.mxu0 0.0
        %1414 = vmatprep.subr.mxu0 0.0
        %1415 = vmatpush1.msra.mxu0 0.0
        %1416 = vmatprep.subr.mxu0 0.0
        %1417 = vmatpush1.msra.mxu0 0.0
        %1418 = vmatprep.subr.mxu0 0.0
        %1419 = vmatpush1.msra.mxu0 0.0
        %1420 = vmatprep.subr.mxu0 0.0
        %1421 = vmatpush1.msra.mxu0 0.0
        %1422 = vmatprep.subr.mxu0 0.0
        %1423 = vmatpush1.msra.mxu0 0.0
        %1424 = vmatprep.subr.mxu0 0.0
        %1425 = vmatpush1.msra.mxu0 0.0
        %1426 = vmatprep.subr.mxu0 0.0
        %1427 = vmatpush1.msra.mxu0 0.0
        %1428 = vmatprep.subr.mxu0 0.0
        %1429 = vmatpush1.msra.mxu0 0.0
        %1430 = vmatprep.subr.mxu0 0.0
        %1431 = vmatpush1.msra.mxu0 0.0
        %1432 = vmatprep.subr.mxu0 0.0
        %1433 = vmatpush1.msra.mxu0 0.0
        %1434 = vmatprep.subr.mxu0 0.0
        %1435 = vmatpush1.msra.mxu0 0.0
        %1436 = vmatprep.subr.mxu0 0.0
        %1437 = vmatpush1.msra.mxu0 0.0
        %1438 = vmatprep.subr.mxu0 0.0
        %1439 = vmatpush1.msra.mxu0 0.0
        %1440 = vmatprep.subr.mxu0 0.0
        %1441 = vmatpush1.msra.mxu0 0.0
        %1442 = vmatprep.subr.mxu0 0.0
        %1443 = vmatpush1.msra.mxu0 0.0
        %1444 = vmatprep.subr.mxu0 0.0
        %1445 = vmatpush1.msra.mxu0 0.0
        %1446 = vmatprep.subr.mxu0 0.0
        %1447 = vmatpush1.msra.mxu0 0.0
        %1448 = vmatprep.subr.mxu0 0.0
        %1449 = vmatpush1.msra.mxu0 0.0
        %1450 = vmatprep.subr.mxu0 0.0
        %1451 = vmatpush1.msra.mxu0 0.0
        %1452 = vmatprep.subr.mxu0 0.0
        %1453 = vmatpush1.msra.mxu0 0.0
        %1454 = vmatprep.subr.mxu0 0.0
        %1455 = vmatpush1.msra.mxu0 0.0
        %1456 = vmatprep.subr.mxu0 0.0
        %1457 = vmatpush1.msra.mxu0 0.0
        %1458 = vmatprep.mubr.f32.mxu0 0.0
        %1459 = vmatmul.mubr.f32.gmra.mrb[0].mxu0 %v1390
        %v1460 = vpop.f32.mrb[0].mxu0
        %v1461 = vadd.f32 0.0, %v1460
        %v1462 = vpop.f32.mrb[0].mxu0
        %1463 = vmatprep.mubr.f32.mxu0 0.0
        %1464 = vmatmul.mubr.f32.gmra.mrb[0].mxu0 %v1392
        %v1465 = vpop.f32.mrb[0].mxu0
        %v1466 = vadd.f32 0.0, %v1465
        %v1467 = vpop.f32.mrb[0].mxu0
        %1468 = vdwg.mxu0
        %v1469 = vmul.f32 %v969, %v1461
        %v1470 = vmul.f32 %v974, %v1466
        %1471 = vst.msk [vmem:[%s828] sm:$0xff] %vm895, %v1469
        %1472 = vst.msk [vmem:[%s828 + $0x8] sm:$0xff] %vm895, %v1470
        %v1473 = vld [vmem:[%s856] sm:$0xff]
        %v1474 = vld [vmem:[%s856 + $0x8] sm:$0xff]
        %v1475 = vld [vmem:[%s856 + $0x10] sm:$0xff]
        %v1476 = vld [vmem:[%s856 + $0x18] sm:$0xff]
        %v1477 = vld [vmem:[%s11] sm:$0xff]
        %v1478 = vld [vmem:[%s11 + $0x8] sm:$0xff]
        %v1479 = vld [vmem:[%s11 + $0x10] sm:$0xff]
        %v1480 = vld [vmem:[%s11 + $0x18] sm:$0xff]
        %v1481 = vld [vmem:[%s11 + $0x20] sm:$0xff]
        %v1482 = vld [vmem:[%s11 + $0x28] sm:$0xff]
        %v1483 = vld [vmem:[%s11 + $0x30] sm:$0xff]
        %v1484 = vld [vmem:[%s11 + $0x38] sm:$0xff]
        %v1485 = vld [vmem:[%s11 + $0x40] sm:$0xff]
        %v1486 = vld [vmem:[%s11 + $0x48] sm:$0xff]
        %v1487 = vld [vmem:[%s11 + $0x50] sm:$0xff]
        %v1488 = vld [vmem:[%s11 + $0x58] sm:$0xff]
        %v1489 = vld [vmem:[%s11 + $0x60] sm:$0xff]
        %v1490 = vld [vmem:[%s11 + $0x68] sm:$0xff]
        %v1491 = vld [vmem:[%s11 + $0x70] sm:$0xff]
        %v1492 = vld [vmem:[%s11 + $0x78] sm:$0xff]
        %v1493 = vld [vmem:[%s11 + $0x80] sm:$0xff]
        %v1494 = vld [vmem:[%s11 + $0x88] sm:$0xff]
        %v1495 = vld [vmem:[%s11 + $0x90] sm:$0xff]
        %v1496 = vld [vmem:[%s11 + $0x98] sm:$0xff]
        %v1497 = vld [vmem:[%s11 + $0xa0] sm:$0xff]
        %v1498 = vld [vmem:[%s11 + $0xa8] sm:$0xff]
        %v1499 = vld [vmem:[%s11 + $0xb0] sm:$0xff]
        %v1500 = vld [vmem:[%s11 + $0xb8] sm:$0xff]
        %v1501 = vld [vmem:[%s11 + $0xc0] sm:$0xff]
        %v1502 = vld [vmem:[%s11 + $0xc8] sm:$0xff]
        %v1503 = vld [vmem:[%s11 + $0xd0] sm:$0xff]
        %v1504 = vld [vmem:[%s11 + $0xd8] sm:$0xff]
        %v1505 = vld [vmem:[%s11 + $0xe0] sm:$0xff]
        %v1506 = vld [vmem:[%s11 + $0xe8] sm:$0xff]
        %v1507 = vld [vmem:[%s11 + $0xf0] sm:$0xff]
        %v1508 = vld [vmem:[%s11 + $0xf8] sm:$0xff]
        %v1509 = vld [vmem:[%s11 + $0x100] sm:$0xff]
        %v1510 = vld [vmem:[%s11 + $0x108] sm:$0xff]
        %v1511 = vld [vmem:[%s11 + $0x110] sm:$0xff]
        %v1512 = vld [vmem:[%s11 + $0x118] sm:$0xff]
        %v1513 = vld [vmem:[%s11 + $0x120] sm:$0xff]
        %v1514 = vld [vmem:[%s11 + $0x128] sm:$0xff]
        %v1515 = vld [vmem:[%s11 + $0x130] sm:$0xff]
        %v1516 = vld [vmem:[%s11 + $0x138] sm:$0xff]
        %v1518 = vsel %vm1094, %v1474, 0
        %v1521 = vsel %vm1094, %v1476, 0
        %1523 = vmatprep.subr.mxu0 %v1478
        %1524 = vmatpush1.msra.mxu0 %v1477
        %1525 = vmatprep.subr.mxu0 %v1480
        %1526 = vmatpush1.msra.mxu0 %v1479
        %1527 = vmatprep.subr.mxu0 %v1482
        %1528 = vmatpush1.msra.mxu0 %v1481
        %1529 = vmatprep.subr.mxu0 %v1484
        %1530 = vmatpush1.msra.mxu0 %v1483
        %1531 = vmatprep.subr.mxu0 %v1486
        %1532 = vmatpush1.msra.mxu0 %v1485
        %1533 = vmatprep.subr.mxu0 %v1488
        %1534 = vmatpush1.msra.mxu0 %v1487
        %1535 = vmatprep.subr.mxu0 %v1490
        %1536 = vmatpush1.msra.mxu0 %v1489
        %1537 = vmatprep.subr.mxu0 %v1492
        %1538 = vmatpush1.msra.mxu0 %v1491
        %1539 = vmatprep.subr.mxu0 %v1494
        %1540 = vmatpush1.msra.mxu0 %v1493
        %1541 = vmatprep.subr.mxu0 %v1496
        %1542 = vmatpush1.msra.mxu0 %v1495
        %1543 = vmatprep.subr.mxu0 %v1498
        %1544 = vmatpush1.msra.mxu0 %v1497
        %1545 = vmatprep.subr.mxu0 %v1500
        %1546 = vmatpush1.msra.mxu0 %v1499
        %1547 = vmatprep.subr.mxu0 %v1502
        %1548 = vmatpush1.msra.mxu0 %v1501
        %1549 = vmatprep.subr.mxu0 %v1504
        %1550 = vmatpush1.msra.mxu0 %v1503
        %1551 = vmatprep.subr.mxu0 %v1506
        %1552 = vmatpush1.msra.mxu0 %v1505
        %1553 = vmatprep.subr.mxu0 %v1508
        %1554 = vmatpush1.msra.mxu0 %v1507
        %1555 = vmatprep.subr.mxu0 %v1510
        %1556 = vmatpush1.msra.mxu0 %v1509
        %1557 = vmatprep.subr.mxu0 %v1512
        %1558 = vmatpush1.msra.mxu0 %v1511
        %1559 = vmatprep.subr.mxu0 %v1514
        %1560 = vmatpush1.msra.mxu0 %v1513
        %1561 = vmatprep.subr.mxu0 %v1516
        %1562 = vmatpush1.msra.mxu0 %v1515
        %1563 = vmatprep.subr.mxu0 0.0
        %1564 = vmatpush1.msra.mxu0 0.0
        %1565 = vmatprep.subr.mxu0 0.0
        %1566 = vmatpush1.msra.mxu0 0.0
        %1567 = vmatprep.subr.mxu0 0.0
        %1568 = vmatpush1.msra.mxu0 0.0
        %1569 = vmatprep.subr.mxu0 0.0
        %1570 = vmatpush1.msra.mxu0 0.0
        %1571 = vmatprep.subr.mxu0 0.0
        %1572 = vmatpush1.msra.mxu0 0.0
        %1573 = vmatprep.subr.mxu0 0.0
        %1574 = vmatpush1.msra.mxu0 0.0
        %1575 = vmatprep.subr.mxu0 0.0
        %1576 = vmatpush1.msra.mxu0 0.0
        %1577 = vmatprep.subr.mxu0 0.0
        %1578 = vmatpush1.msra.mxu0 0.0
        %1579 = vmatprep.subr.mxu0 0.0
        %1580 = vmatpush1.msra.mxu0 0.0
        %1581 = vmatprep.subr.mxu0 0.0
        %1582 = vmatpush1.msra.mxu0 0.0
        %1583 = vmatprep.subr.mxu0 0.0
        %1584 = vmatpush1.msra.mxu0 0.0
        %1585 = vmatprep.subr.mxu0 0.0
        %1586 = vmatpush1.msra.mxu0 0.0
        %1587 = vmatprep.mubr.f32.mxu0 %v1518
        %1588 = vmatmul.mubr.f32.gmra.mrb[0].mxu0 %v1473
        %v1589 = vpop.f32.mrb[0].mxu0
        %v1590 = vadd.f32 0.0, %v1589
        %v1591 = vpop.f32.mrb[0].mxu0
        %v1592 = vadd.f32 0.0, %v1591
        %1593 = vmatprep.mubr.f32.mxu0 %v1521
        %1594 = vmatmul.mubr.f32.gmra.mrb[0].mxu0 %v1475
        %v1595 = vpop.f32.mrb[0].mxu0
        %v1596 = vadd.f32 0.0, %v1595
        %v1597 = vpop.f32.mrb[0].mxu0
        %v1598 = vadd.f32 0.0, %v1597
        %1599 = vdwg.mxu0
        %v1600 = vmul.f32 %v1590, %v1590
        %v1601 = vmul.f32 %v1592, %v1592
        %v1602 = vmul.f32 %v1596, %v1596
        %v1603 = vmul.f32 %v1598, %v1598
        %v1604 = vld [vmem:[%s12] sm:$0xff]
        %v1605 = vld [vmem:[%s12 + $0x8] sm:$0xff]
        %v1606 = vld [vmem:[%s12 + $0x10] sm:$0xff]
        %v1607 = vld [vmem:[%s12 + $0x18] sm:$0xff]
        %v1608 = vld [vmem:[%s12 + $0x20] sm:$0xff]
        %v1609 = vld [vmem:[%s12 + $0x28] sm:$0xff]
        %v1610 = vld [vmem:[%s12 + $0x30] sm:$0xff]
        %v1611 = vld [vmem:[%s12 + $0x38] sm:$0xff]
        %v1612 = vld [vmem:[%s12 + $0x40] sm:$0xff]
        %v1613 = vld [vmem:[%s12 + $0x48] sm:$0xff]
        %v1614 = vld [vmem:[%s12 + $0x50] sm:$0xff]
        %v1615 = vld [vmem:[%s12 + $0x58] sm:$0xff]
        %v1616 = vld [vmem:[%s12 + $0x60] sm:$0xff]
        %v1617 = vld [vmem:[%s12 + $0x68] sm:$0xff]
        %v1618 = vld [vmem:[%s12 + $0x70] sm:$0xff]
        %v1619 = vld [vmem:[%s12 + $0x78] sm:$0xff]
        %v1620 = vld [vmem:[%s12 + $0x80] sm:$0xff]
        %v1621 = vld [vmem:[%s12 + $0x88] sm:$0xff]
        %v1622 = vld [vmem:[%s12 + $0x90] sm:$0xff]
        %v1623 = vld [vmem:[%s12 + $0x98] sm:$0xff]
        %v1625 = vsel %vm1094, %v1601, 0
        %v1628 = vsel %vm1094, %v1603, 0
        %1630 = vmatprep.subr.mxu0 0.0
        %1631 = vmatpush1.msra.mxu0 %v1604
        %1632 = vmatprep.subr.mxu0 0.0
        %1633 = vmatpush1.msra.mxu0 %v1605
        %1634 = vmatprep.subr.mxu0 0.0
        %1635 = vmatpush1.msra.mxu0 %v1606
        %1636 = vmatprep.subr.mxu0 0.0
        %1637 = vmatpush1.msra.mxu0 %v1607
        %1638 = vmatprep.subr.mxu0 0.0
        %1639 = vmatpush1.msra.mxu0 %v1608
        %1640 = vmatprep.subr.mxu0 0.0
        %1641 = vmatpush1.msra.mxu0 %v1609
        %1642 = vmatprep.subr.mxu0 0.0
        %1643 = vmatpush1.msra.mxu0 %v1610
        %1644 = vmatprep.subr.mxu0 0.0
        %1645 = vmatpush1.msra.mxu0 %v1611
        %1646 = vmatprep.subr.mxu0 0.0
        %1647 = vmatpush1.msra.mxu0 %v1612
        %1648 = vmatprep.subr.mxu0 0.0
        %1649 = vmatpush1.msra.mxu0 %v1613
        %1650 = vmatprep.subr.mxu0 0.0
        %1651 = vmatpush1.msra.mxu0 %v1614
        %1652 = vmatprep.subr.mxu0 0.0
        %1653 = vmatpush1.msra.mxu0 %v1615
        %1654 = vmatprep.subr.mxu0 0.0
        %1655 = vmatpush1.msra.mxu0 %v1616
        %1656 = vmatprep.subr.mxu0 0.0
        %1657 = vmatpush1.msra.mxu0 %v1617
        %1658 = vmatprep.subr.mxu0 0.0
        %1659 = vmatpush1.msra.mxu0 %v1618
        %1660 = vmatprep.subr.mxu0 0.0
        %1661 = vmatpush1.msra.mxu0 %v1619
        %1662 = vmatprep.subr.mxu0 0.0
        %1663 = vmatpush1.msra.mxu0 %v1620
        %1664 = vmatprep.subr.mxu0 0.0
        %1665 = vmatpush1.msra.mxu0 %v1621
        %1666 = vmatprep.subr.mxu0 0.0
        %1667 = vmatpush1.msra.mxu0 %v1622
        %1668 = vmatprep.subr.mxu0 0.0
        %1669 = vmatpush1.msra.mxu0 %v1623
        %1670 = vmatprep.subr.mxu0 0.0
        %1671 = vmatpush1.msra.mxu0 0.0
        %1672 = vmatprep.subr.mxu0 0.0
        %1673 = vmatpush1.msra.mxu0 0.0
        %1674 = vmatprep.subr.mxu0 0.0
        %1675 = vmatpush1.msra.mxu0 0.0
        %1676 = vmatprep.subr.mxu0 0.0
        %1677 = vmatpush1.msra.mxu0 0.0
        %1678 = vmatprep.subr.mxu0 0.0
        %1679 = vmatpush1.msra.mxu0 0.0
        %1680 = vmatprep.subr.mxu0 0.0
        %1681 = vmatpush1.msra.mxu0 0.0
        %1682 = vmatprep.subr.mxu0 0.0
        %1683 = vmatpush1.msra.mxu0 0.0
        %1684 = vmatprep.subr.mxu0 0.0
        %1685 = vmatpush1.msra.mxu0 0.0
        %1686 = vmatprep.subr.mxu0 0.0
        %1687 = vmatpush1.msra.mxu0 0.0
        %1688 = vmatprep.subr.mxu0 0.0
        %1689 = vmatpush1.msra.mxu0 0.0
        %1690 = vmatprep.subr.mxu0 0.0
        %1691 = vmatpush1.msra.mxu0 0.0
        %1692 = vmatprep.subr.mxu0 0.0
        %1693 = vmatpush1.msra.mxu0 0.0
        %1694 = vmatprep.mubr.f32.mxu0 %v1625
        %1695 = vmatmul.mubr.f32.gmra.mrb[0].mxu0 %v1600
        %v1696 = vpop.f32.mrb[0].mxu0
        %v1697 = vadd.f32 0.0, %v1696
        %v1698 = vpop.f32.mrb[0].mxu0
        %1699 = vmatprep.mubr.f32.mxu0 %v1628
        %1700 = vmatmul.mubr.f32.gmra.mrb[0].mxu0 %v1602
        %v1701 = vpop.f32.mrb[0].mxu0
        %v1702 = vadd.f32 0.0, %v1701
        %v1703 = vpop.f32.mrb[0].mxu0
        %1704 = vdwg.mxu0
        %v1705 = vrsqrt.pop %v1697
        %v1706 = vmul.f32 %v1697, %v1705
        %vm1707 = vcmp.eq.f32.partialorder %v1697, inf
        %v1708 = vsel %vm1707, %v1697, %v1706
        %vm1709 = vcmp.eq.f32.partialorder %v1697, 0.0
        %v1710 = vand.u32 %v1697, 2147483648
        %v1711 = vsel %vm1709, %v1710, %v1708
        %v1712 = vrsqrt.pop %v1702
        %v1713 = vmul.f32 %v1702, %v1712
        %vm1714 = vcmp.eq.f32.partialorder %v1702, inf
        %v1715 = vsel %vm1714, %v1702, %v1713
        %vm1716 = vcmp.eq.f32.partialorder %v1702, 0.0
        %v1717 = vand.u32 %v1702, 2147483648
        %v1718 = vsel %vm1716, %v1717, %v1715
        %v1719 = vld [vmem:[%s14] sm:$0xff]
        %v1720 = vld [vmem:[%s14 + $0x8] sm:$0xff]
        %v1721 = vld [vmem:[%s14 + $0x10] sm:$0xff]
        %v1722 = vld [vmem:[%s14 + $0x18] sm:$0xff]
        %v1723 = vld [vmem:[#allocation11] sm:$0xff]
        %v1724 = vld [vmem:[#allocation11 + $0x8] sm:$0xff]
        %v1725 = vld [vmem:[#allocation11 + $0x10] sm:$0xff]
        %v1726 = vld [vmem:[#allocation11 + $0x18] sm:$0xff]
        %v1728 = vsel %vm1094, %v1711, 0
        %v1731 = vsel %vm1094, %v1718, 0
        %1733 = vmatprep.subr.mxu0 0.0
        %1734 = vmatpush1.msra.mxu0 %v1723
        %1735 = vmatprep.subr.mxu0 0.0
        %1736 = vmatpush1.msra.mxu0 %v1724
        %1737 = vmatprep.subr.mxu0 0.0
        %1738 = vmatpush1.msra.mxu0 %v1725
        %1739 = vmatprep.subr.mxu0 0.0
        %1740 = vmatpush1.msra.mxu0 %v1726
        %1741 = vmatprep.subr.mxu0 0.0
        %1742 = vmatpush1.msra.mxu0 0.0
        %1743 = vmatprep.subr.mxu0 0.0
        %1744 = vmatpush1.msra.mxu0 0.0
        %1745 = vmatprep.subr.mxu0 0.0
        %1746 = vmatpush1.msra.mxu0 0.0
        %1747 = vmatprep.subr.mxu0 0.0
        %1748 = vmatpush1.msra.mxu0 0.0
        %1749 = vmatprep.subr.mxu0 0.0
        %1750 = vmatpush1.msra.mxu0 0.0
        %1751 = vmatprep.subr.mxu0 0.0
        %1752 = vmatpush1.msra.mxu0 0.0
        %1753 = vmatprep.subr.mxu0 0.0
        %1754 = vmatpush1.msra.mxu0 0.0
        %1755 = vmatprep.subr.mxu0 0.0
        %1756 = vmatpush1.msra.mxu0 0.0
        %1757 = vmatprep.subr.mxu0 0.0
        %1758 = vmatpush1.msra.mxu0 0.0
        %1759 = vmatprep.subr.mxu0 0.0
        %1760 = vmatpush1.msra.mxu0 0.0
        %1761 = vmatprep.subr.mxu0 0.0
        %1762 = vmatpush1.msra.mxu0 0.0
        %1763 = vmatprep.subr.mxu0 0.0
        %1764 = vmatpush1.msra.mxu0 0.0
        %1765 = vmatprep.subr.mxu0 0.0
        %1766 = vmatpush1.msra.mxu0 0.0
        %1767 = vmatprep.subr.mxu0 0.0
        %1768 = vmatpush1.msra.mxu0 0.0
        %1769 = vmatprep.subr.mxu0 0.0
        %1770 = vmatpush1.msra.mxu0 0.0
        %1771 = vmatprep.subr.mxu0 0.0
        %1772 = vmatpush1.msra.mxu0 0.0
        %1773 = vmatprep.subr.mxu0 0.0
        %1774 = vmatpush1.msra.mxu0 0.0
        %1775 = vmatprep.subr.mxu0 0.0
        %1776 = vmatpush1.msra.mxu0 0.0
        %1777 = vmatprep.subr.mxu0 0.0
        %1778 = vmatpush1.msra.mxu0 0.0
        %1779 = vmatprep.subr.mxu0 0.0
        %1780 = vmatpush1.msra.mxu0 0.0
        %1781 = vmatprep.subr.mxu0 0.0
        %1782 = vmatpush1.msra.mxu0 0.0
        %1783 = vmatprep.subr.mxu0 0.0
        %1784 = vmatpush1.msra.mxu0 0.0
        %1785 = vmatprep.subr.mxu0 0.0
        %1786 = vmatpush1.msra.mxu0 0.0
        %1787 = vmatprep.subr.mxu0 0.0
        %1788 = vmatpush1.msra.mxu0 0.0
        %1789 = vmatprep.subr.mxu0 0.0
        %1790 = vmatpush1.msra.mxu0 0.0
        %1791 = vmatprep.subr.mxu0 0.0
        %1792 = vmatpush1.msra.mxu0 0.0
        %1793 = vmatprep.subr.mxu0 0.0
        %1794 = vmatpush1.msra.mxu0 0.0
        %1795 = vmatprep.subr.mxu0 0.0
        %1796 = vmatpush1.msra.mxu0 0.0
        %1797 = vmatprep.mubr.f32.mxu0 0.0
        %1798 = vmatmul.mubr.f32.gmra.mrb[0].mxu0 %v1728
        %v1799 = vpop.f32.mrb[0].mxu0
        %v1800 = vadd.f32 0.0, %v1799
        %v1801 = vpop.f32.mrb[0].mxu0
        %1802 = vmatprep.mubr.f32.mxu0 0.0
        %1803 = vmatmul.mubr.f32.gmra.mrb[0].mxu0 %v1731
        %v1804 = vpop.f32.mrb[0].mxu0
        %v1805 = vadd.f32 0.0, %v1804
        %v1806 = vpop.f32.mrb[0].mxu0
        %1807 = vdwg.mxu0
        %1808 = vmatprep.subr.mxu0 0.0
        %1809 = vmatpush1.msra.mxu0 %v1719
        %1810 = vmatprep.subr.mxu0 0.0
        %1811 = vmatpush1.msra.mxu0 %v1720
        %1812 = vmatprep.subr.mxu0 0.0
        %1813 = vmatpush1.msra.mxu0 %v1721
        %1814 = vmatprep.subr.mxu0 0.0
        %1815 = vmatpush1.msra.mxu0 %v1722
        %1816 = vmatprep.subr.mxu0 0.0
        %1817 = vmatpush1.msra.mxu0 0.0
        %1818 = vmatprep.subr.mxu0 0.0
        %1819 = vmatpush1.msra.mxu0 0.0
        %1820 = vmatprep.subr.mxu0 0.0
        %1821 = vmatpush1.msra.mxu0 0.0
        %1822 = vmatprep.subr.mxu0 0.0
        %1823 = vmatpush1.msra.mxu0 0.0
        %1824 = vmatprep.subr.mxu0 0.0
        %1825 = vmatpush1.msra.mxu0 0.0
        %1826 = vmatprep.subr.mxu0 0.0
        %1827 = vmatpush1.msra.mxu0 0.0
        %1828 = vmatprep.subr.mxu0 0.0
        %1829 = vmatpush1.msra.mxu0 0.0
        %1830 = vmatprep.subr.mxu0 0.0
        %1831 = vmatpush1.msra.mxu0 0.0
        %1832 = vmatprep.subr.mxu0 0.0
        %1833 = vmatpush1.msra.mxu0 0.0
        %1834 = vmatprep.subr.mxu0 0.0
        %1835 = vmatpush1.msra.mxu0 0.0
        %1836 = vmatprep.subr.mxu0 0.0
        %1837 = vmatpush1.msra.mxu0 0.0
        %1838 = vmatprep.subr.mxu0 0.0
        %1839 = vmatpush1.msra.mxu0 0.0
        %1840 = vmatprep.subr.mxu0 0.0
        %1841 = vmatpush1.msra.mxu0 0.0
        %1842 = vmatprep.subr.mxu0 0.0
        %1843 = vmatpush1.msra.mxu0 0.0
        %1844 = vmatprep.subr.mxu0 0.0
        %1845 = vmatpush1.msra.mxu0 0.0
        %1846 = vmatprep.subr.mxu0 0.0
        %1847 = vmatpush1.msra.mxu0 0.0
        %1848 = vmatprep.subr.mxu0 0.0
        %1849 = vmatpush1.msra.mxu0 0.0
        %1850 = vmatprep.subr.mxu0 0.0
        %1851 = vmatpush1.msra.mxu0 0.0
        %1852 = vmatprep.subr.mxu0 0.0
        %1853 = vmatpush1.msra.mxu0 0.0
        %1854 = vmatprep.subr.mxu0 0.0
        %1855 = vmatpush1.msra.mxu0 0.0
        %1856 = vmatprep.subr.mxu0 0.0
        %1857 = vmatpush1.msra.mxu0 0.0
        %1858 = vmatprep.subr.mxu0 0.0
        %1859 = vmatpush1.msra.mxu0 0.0
        %1860 = vmatprep.subr.mxu0 0.0
        %1861 = vmatpush1.msra.mxu0 0.0
        %1862 = vmatprep.subr.mxu0 0.0
        %1863 = vmatpush1.msra.mxu0 0.0
        %1864 = vmatprep.subr.mxu0 0.0
        %1865 = vmatpush1.msra.mxu0 0.0
        %1866 = vmatprep.subr.mxu0 0.0
        %1867 = vmatpush1.msra.mxu0 0.0
        %1868 = vmatprep.subr.mxu0 0.0
        %1869 = vmatpush1.msra.mxu0 0.0
        %1870 = vmatprep.subr.mxu0 0.0
        %1871 = vmatpush1.msra.mxu0 0.0
        %1872 = vmatprep.mubr.f32.mxu0 0.0
        %1873 = vmatmul.mubr.f32.gmra.mrb[0].mxu0 %v1177
        %v1874 = vpop.f32.mrb[0].mxu0
        %v1875 = vadd.f32 %v1800, %v1874
        %v1876 = vpop.f32.mrb[0].mxu0
        %1877 = vmatprep.mubr.f32.mxu0 0.0
        %1878 = vmatmul.mubr.f32.gmra.mrb[0].mxu0 %v1180
        %v1879 = vpop.f32.mrb[0].mxu0
        %v1880 = vadd.f32 %v1805, %v1879
        %v1881 = vpop.f32.mrb[0].mxu0
        %1882 = vdwg.mxu0
        %v1883 = vld [vmem:[%s16] sm:$0x1]
        %v1885 = vlaneseq
        %v1886 = vshrl.u32 %v1885, 7
        %v1887 = vsub.s32 0, %v1886
        %v1888 = vrot.slane %v1883, %v1887
        %v1890 = vadd.f32 %v1875, %v1888
        %v1891 = vadd.f32 %v1880, %v1888
        %v1892 = vxor.u32 %v1890, 2147483648
        %v1893 = vxor.u32 %v1891, 2147483648
        %v1894 = vmul.f32 %v1892, 1.442695
        %v1895 = vpow.pop %v1894
        %v1896 = vmul.f32 %v1893, 1.442695
        %v1897 = vpow.pop %v1896
        %v1898 = vadd.f32 %v1895, 1.0
        %v1899 = vadd.f32 %v1897, 1.0
        %v1900 = vrcp.pop %v1898
        %v1901 = vmul.f32 1.0, %v1900
        %v1902 = vrcp.pop %v1899
        %v1903 = vmul.f32 1.0, %v1902
        %v1904 = vmul.f32 %v1890, %v1901
        %v1905 = vmul.f32 %v1891, %v1903
        %v1906 = vld [vmem:[%s17] sm:$0xff]
        %v1907 = vld [vmem:[%s17 + $0x8] sm:$0xff]
        %v1908 = vld [vmem:[%s17 + $0x10] sm:$0xff]
        %v1909 = vld [vmem:[%s17 + $0x18] sm:$0xff]
        %v1910 = vld [vmem:[%s17 + $0x20] sm:$0xff]
        %v1911 = vld [vmem:[%s17 + $0x28] sm:$0xff]
        %v1912 = vld [vmem:[%s17 + $0x30] sm:$0xff]
        %v1913 = vld [vmem:[%s17 + $0x38] sm:$0xff]
        %v1914 = vld [vmem:[%s17 + $0x40] sm:$0xff]
        %v1915 = vld [vmem:[%s17 + $0x48] sm:$0xff]
        %v1916 = vld [vmem:[%s17 + $0x50] sm:$0xff]
        %v1917 = vld [vmem:[%s17 + $0x58] sm:$0xff]
        %v1918 = vld [vmem:[%s17 + $0x60] sm:$0xff]
        %v1919 = vld [vmem:[%s17 + $0x68] sm:$0xff]
        %v1920 = vld [vmem:[%s17 + $0x70] sm:$0xff]
        %v1921 = vld [vmem:[%s17 + $0x78] sm:$0xff]
        %v1922 = vld [vmem:[%s18] sm:$0x1]
        %v1924 = vlaneseq
        %v1925 = vshrl.u32 %v1924, 7
        %v1926 = vsub.s32 0, %v1925
        %v1927 = vrot.slane %v1922, %v1926
        %1929 = vmatprep.subr.mxu0 0.0
        %1930 = vmatpush1.msra.mxu0 %v1906
        %1931 = vmatprep.subr.mxu0 0.0
        %1932 = vmatpush1.msra.mxu0 %v1907
        %1933 = vmatprep.subr.mxu0 0.0
        %1934 = vmatpush1.msra.mxu0 %v1908
        %1935 = vmatprep.subr.mxu0 0.0
        %1936 = vmatpush1.msra.mxu0 %v1909
        %1937 = vmatprep.subr.mxu0 0.0
        %1938 = vmatpush1.msra.mxu0 %v1910
        %1939 = vmatprep.subr.mxu0 0.0
        %1940 = vmatpush1.msra.mxu0 %v1911
        %1941 = vmatprep.subr.mxu0 0.0
        %1942 = vmatpush1.msra.mxu0 %v1912
        %1943 = vmatprep.subr.mxu0 0.0
        %1944 = vmatpush1.msra.mxu0 %v1913
        %1945 = vmatprep.subr.mxu0 0.0
        %1946 = vmatpush1.msra.mxu0 %v1914
        %1947 = vmatprep.subr.mxu0 0.0
        %1948 = vmatpush1.msra.mxu0 %v1915
        %1949 = vmatprep.subr.mxu0 0.0
        %1950 = vmatpush1.msra.mxu0 %v1916
        %1951 = vmatprep.subr.mxu0 0.0
        %1952 = vmatpush1.msra.mxu0 %v1917
        %1953 = vmatprep.subr.mxu0 0.0
        %1954 = vmatpush1.msra.mxu0 %v1918
        %1955 = vmatprep.subr.mxu0 0.0
        %1956 = vmatpush1.msra.mxu0 %v1919
        %1957 = vmatprep.subr.mxu0 0.0
        %1958 = vmatpush1.msra.mxu0 %v1920
        %1959 = vmatprep.subr.mxu0 0.0
        %1960 = vmatpush1.msra.mxu0 %v1921
        %1961 = vmatprep.subr.mxu0 0.0
        %1962 = vmatpush1.msra.mxu0 0.0
        %1963 = vmatprep.subr.mxu0 0.0
        %1964 = vmatpush1.msra.mxu0 0.0
        %1965 = vmatprep.subr.mxu0 0.0
        %1966 = vmatpush1.msra.mxu0 0.0
        %1967 = vmatprep.subr.mxu0 0.0
        %1968 = vmatpush1.msra.mxu0 0.0
        %1969 = vmatprep.subr.mxu0 0.0
        %1970 = vmatpush1.msra.mxu0 0.0
        %1971 = vmatprep.subr.mxu0 0.0
        %1972 = vmatpush1.msra.mxu0 0.0
        %1973 = vmatprep.subr.mxu0 0.0
        %1974 = vmatpush1.msra.mxu0 0.0
        %1975 = vmatprep.subr.mxu0 0.0
        %1976 = vmatpush1.msra.mxu0 0.0
        %1977 = vmatprep.subr.mxu0 0.0
        %1978 = vmatpush1.msra.mxu0 0.0
        %1979 = vmatprep.subr.mxu0 0.0
        %1980 = vmatpush1.msra.mxu0 0.0
        %1981 = vmatprep.subr.mxu0 0.0
        %1982 = vmatpush1.msra.mxu0 0.0
        %1983 = vmatprep.subr.mxu0 0.0
        %1984 = vmatpush1.msra.mxu0 0.0
        %1985 = vmatprep.subr.mxu0 0.0
        %1986 = vmatpush1.msra.mxu0 0.0
        %1987 = vmatprep.subr.mxu0 0.0
        %1988 = vmatpush1.msra.mxu0 0.0
        %1989 = vmatprep.subr.mxu0 0.0
        %1990 = vmatpush1.msra.mxu0 0.0
        %1991 = vmatprep.subr.mxu0 0.0
        %1992 = vmatpush1.msra.mxu0 0.0
        %1993 = vmatprep.mubr.f32.mxu0 0.0
        %1994 = vmatmul.mubr.f32.gmra.mrb[0].mxu0 %v1904
        %v1995 = vpop.f32.mrb[0].mxu0
        %v1996 = vadd.f32 %v1927, %v1995
        %v1997 = vpop.f32.mrb[0].mxu0
        %1998 = vmatprep.mubr.f32.mxu0 0.0
        %1999 = vmatmul.mubr.f32.gmra.mrb[0].mxu0 %v1905
        %v2000 = vpop.f32.mrb[0].mxu0
        %v2001 = vadd.f32 %v1927, %v2000
        %v2002 = vpop.f32.mrb[0].mxu0
        %2003 = vdwg.mxu0
        %v2004 = vadd.f32 %v1378, %v1996
        %v2005 = vadd.f32 %v1379, %v2001
        %v2006 = vld [vmem:[%s13] sm:$0xff]
        %v2007 = vld [vmem:[%s13 + $0x8] sm:$0xff]
        %v2008 = vld [vmem:[%s13 + $0x10] sm:$0xff]
        %v2009 = vld [vmem:[%s13 + $0x18] sm:$0xff]
        %v2010 = vld [vmem:[%s13 + $0x20] sm:$0xff]
        %v2011 = vld [vmem:[%s13 + $0x28] sm:$0xff]
        %v2012 = vld [vmem:[%s13 + $0x30] sm:$0xff]
        %v2013 = vld [vmem:[%s13 + $0x38] sm:$0xff]
        %2016 = vrot.lane.b32.xlu0 %v1996, 96
        %v2017 = vpop.permute.xlu0 %2016
        %2018 = vrot.lane.b32.xlu0 %v2001, 96
        %v2019 = vpop.permute.xlu0 %2018
        %v2020 = vsel %vm1094, %v2017, 0
        %v2022 = vsel %vm1094, %v2019, 0
        %2024 = vmatprep.subr.mxu0 %v2007
        %2025 = vmatpush1.msra.mxu0 %v2006
        %2026 = vmatprep.subr.mxu0 %v2009
        %2027 = vmatpush1.msra.mxu0 %v2008
        %2028 = vmatprep.subr.mxu0 %v2011
        %2029 = vmatpush1.msra.mxu0 %v2010
        %2030 = vmatprep.subr.mxu0 %v2013
        %2031 = vmatpush1.msra.mxu0 %v2012
        %2032 = vmatprep.subr.mxu0 0.0
        %2033 = vmatpush1.msra.mxu0 0.0
        %2034 = vmatprep.subr.mxu0 0.0
        %2035 = vmatpush1.msra.mxu0 0.0
        %2036 = vmatprep.subr.mxu0 0.0
        %2037 = vmatpush1.msra.mxu0 0.0
        %2038 = vmatprep.subr.mxu0 0.0
        %2039 = vmatpush1.msra.mxu0 0.0
        %2040 = vmatprep.subr.mxu0 0.0
        %2041 = vmatpush1.msra.mxu0 0.0
        %2042 = vmatprep.subr.mxu0 0.0
        %2043 = vmatpush1.msra.mxu0 0.0
        %2044 = vmatprep.subr.mxu0 0.0
        %2045 = vmatpush1.msra.mxu0 0.0
        %2046 = vmatprep.subr.mxu0 0.0
        %2047 = vmatpush1.msra.mxu0 0.0
        %2048 = vmatprep.subr.mxu0 0.0
        %2049 = vmatpush1.msra.mxu0 0.0
        %2050 = vmatprep.subr.mxu0 0.0
        %2051 = vmatpush1.msra.mxu0 0.0
        %2052 = vmatprep.subr.mxu0 0.0
        %2053 = vmatpush1.msra.mxu0 0.0
        %2054 = vmatprep.subr.mxu0 0.0
        %2055 = vmatpush1.msra.mxu0 0.0
        %2056 = vmatprep.subr.mxu0 0.0
        %2057 = vmatpush1.msra.mxu0 0.0
        %2058 = vmatprep.subr.mxu0 0.0
        %2059 = vmatpush1.msra.mxu0 0.0
        %2060 = vmatprep.subr.mxu0 0.0
        %2061 = vmatpush1.msra.mxu0 0.0
        %2062 = vmatprep.subr.mxu0 0.0
        %2063 = vmatpush1.msra.mxu0 0.0
        %2064 = vmatprep.subr.mxu0 0.0
        %2065 = vmatpush1.msra.mxu0 0.0
        %2066 = vmatprep.subr.mxu0 0.0
        %2067 = vmatpush1.msra.mxu0 0.0
        %2068 = vmatprep.subr.mxu0 0.0
        %2069 = vmatpush1.msra.mxu0 0.0
        %2070 = vmatprep.subr.mxu0 0.0
        %2071 = vmatpush1.msra.mxu0 0.0
        %2072 = vmatprep.subr.mxu0 0.0
        %2073 = vmatpush1.msra.mxu0 0.0
        %2074 = vmatprep.subr.mxu0 0.0
        %2075 = vmatpush1.msra.mxu0 0.0
        %2076 = vmatprep.subr.mxu0 0.0
        %2077 = vmatpush1.msra.mxu0 0.0
        %2078 = vmatprep.subr.mxu0 0.0
        %2079 = vmatpush1.msra.mxu0 0.0
        %2080 = vmatprep.subr.mxu0 0.0
        %2081 = vmatpush1.msra.mxu0 0.0
        %2082 = vmatprep.subr.mxu0 0.0
        %2083 = vmatpush1.msra.mxu0 0.0
        %2084 = vmatprep.subr.mxu0 0.0
        %2085 = vmatpush1.msra.mxu0 0.0
        %2086 = vmatprep.subr.mxu0 0.0
        %2087 = vmatpush1.msra.mxu0 0.0
        %2088 = vmatprep.mubr.f32.mxu0 0.0
        %2089 = vmatmul.mubr.f32.gmra.mrb[0].mxu0 %v2020
        %v2090 = vpop.f32.mrb[0].mxu0
        %v2091 = vadd.f32 0.0, %v2090
        %v2092 = vpop.f32.mrb[0].mxu0
        %v2093 = vadd.f32 0.0, %v2092
        %2094 = vmatprep.mubr.f32.mxu0 0.0
        %2095 = vmatmul.mubr.f32.gmra.mrb[0].mxu0 %v2022
        %v2096 = vpop.f32.mrb[0].mxu0
        %v2097 = vadd.f32 0.0, %v2096
        %v2098 = vpop.f32.mrb[0].mxu0
        %v2099 = vadd.f32 0.0, %v2098
        %2100 = vdwg.mxu0
        %v2101 = vmul.f32 %v1590, %v2091
        %v2102 = vmul.f32 %v1592, %v2093
        %v2103 = vmul.f32 %v1596, %v2097
        %v2104 = vmul.f32 %v1598, %v2099
        %2105 = vst [vmem:[%s835] sm:$0xff] %v2101
        %2106 = vst.msk [vmem:[%s835 + $0x8] sm:$0xff] %vm1094, %v2102
        %2107 = vst [vmem:[%s835 + $0x10] sm:$0xff] %v2103
        %2108 = vst.msk [vmem:[%s835 + $0x18] sm:$0xff] %vm1094, %v2104
        %2109 = vst.msk [vmem:[%s821] sm:$0xff] %vm1094, %v2004
        %2110 = vst.msk [vmem:[%s821 + $0x8] sm:$0xff] %vm1094, %v2005
        %s2111 = sand.u32 %s469, 1
        %s2112 = scalar_lea.sflag [#allocation4], %s2111
        %s2113 = sand.u32 %s469, 1
        %s2114 = smul.addr %s2113, 16
        %s2115 = scalar_lea.vmem [#allocation13], %s2114
        %s2116 = sand.u32 %s47, 1
        %s2117 = scalar_lea.sflag [#allocation15], %s2116
        %s2118 = sand.u32 %s495, 1
        %s2119 = smul.addr %s2118, 16
        %s2120 = scalar_lea.vmem [#allocation14], %s2119
        %s2121 = sand.u32 %s47, 1
        %s2122 = scalar_lea.sflag [#allocation15], %s2121
        %s2123 = sand.u32 %s521, 1
        %s2124 = smul.addr %s2123, 32
        %s2125 = scalar_lea.vmem [#allocation16], %s2124
        // Predicated region
        $region121: #{tpu_custom_call.1} parent=95 // pred_check
          %p2126 = pneg %p479
        $region122: #{tpu_custom_call.1} parent=95 // pred_check_branch
          %2128 = sbr.rel (%p2126) target = $region124
        $region123: #{tpu_custom_call.1} parent=95 // pred_region
          %s2129 = smul.u32 2, %s47
          %s2130 = ssub.s32 3, %s2129
          %p2131 = scmp.lt.s32.totalorder %s2130, 2
          %s2132 = scalar_select %p2131, %s2130, 2
          %s2133 = smul.u32 128, %s2132
          %s2135 = ssub.s32 256, %s2133
          %2136 = vsyncadd %s2112, %s2135
          %p2137 = scmp.ne.s32.totalorder 0, %s2133
          %s2138 = smul.addr %s2129, 128
          %s2139 = scalar_lea.hbm %s19, %s2138
          %s2140 = smul.u32 8, %s2132
          %s2141 = sshll.u32 %s2115, 4
          %s2142 = int_to_ptr.vmem [resolvable:$true] %s2141
          %s2143 = sshll.u32 %s2140, 4
          %2147 = dma.vmem_to_hbm [thread:$0]  (%p2137), %s2142, %s2143, %s2139, %s2112, 128, 128, 8
        $region124: #{tpu_custom_call.1} parent=95 // pred_fallthru
          _
        // Predicated region
        $region125: #{tpu_custom_call.1} parent=95 // pred_check
          %p2148 = pneg %p505
        $region126: #{tpu_custom_call.1} parent=95 // pred_check_branch
          %2150 = sbr.rel (%p2148) target = $region128
        $region127: #{tpu_custom_call.1} parent=95 // pred_region
          %s2151 = smul.u32 2, %s47
          %s2152 = ssub.s32 3, %s2151
          %p2153 = scmp.lt.s32.totalorder %s2152, 2
          %s2154 = scalar_select %p2153, %s2152, 2
          %s2155 = smul.u32 128, %s2154
          %s2157 = ssub.s32 256, %s2155
          %2158 = vsyncadd %s2117, %s2157
          %p2159 = scmp.ne.s32.totalorder 0, %s2155
          %s2160 = smul.addr %s2151, 128
          %s2161 = scalar_lea.hbm %s20, %s2160
          %s2162 = smul.u32 8, %s2154
          %s2163 = sshll.u32 %s2120, 4
          %s2164 = int_to_ptr.vmem [resolvable:$true] %s2163
          %s2165 = sshll.u32 %s2162, 4
          %2169 = dma.vmem_to_hbm [thread:$0]  (%p2159), %s2164, %s2165, %s2161, %s2117, 128, 128, 8
        $region128: #{tpu_custom_call.1} parent=95 // pred_fallthru
          _
        // Predicated region
        $region129: #{tpu_custom_call.1} parent=95 // pred_check
          %p2170 = pneg %p531
        $region130: #{tpu_custom_call.1} parent=95 // pred_check_branch
          %2172 = sbr.rel (%p2170) target = $region132
        $region131: #{tpu_custom_call.1} parent=95 // pred_region
          %s2173 = smul.u32 2, %s47
          %s2174 = ssub.s32 3, %s2173
          %p2175 = scmp.lt.s32.totalorder %s2174, 2
          %s2176 = scalar_select %p2175, %s2174, 2
          %s2177 = smul.u32 128, %s2176
          %s2178 = smul.u32 %s2177, 2
          %s2180 = ssub.s32 512, %s2178
          %2181 = vsyncadd %s2122, %s2180
          %p2182 = scmp.ne.s32.totalorder 0, %s2178
          %s2183 = smul.addr %s2173, 2
          %s2184 = smul.addr %s2183, 128
          %s2185 = scalar_lea.hbm %s21, %s2184
          %s2186 = smul.u32 16, %s2176
          %s2187 = sshll.u32 %s2125, 4
          %s2188 = int_to_ptr.vmem [resolvable:$true] %s2187
          %s2189 = sshll.u32 %s2186, 4
          %2193 = dma.vmem_to_hbm [thread:$0]  (%p2182), %s2188, %s2189, %s2185, %s2122, 256, 256, 16
        $region132: #{tpu_custom_call.1} parent=95 // pred_fallthru
          _
      $region96: #{tpu_custom_call.1} parent=5 // pred_fallthru
        _
      %p2194 = scmp.le.s32.totalorder 2, %s42
      // Predicated region
      $region133: #{tpu_custom_call.1} parent=5 // pred_check
        %p2195 = pneg %p2194
      $region134: #{tpu_custom_call.1} parent=5 // pred_check_branch
        %2197 = sbr.rel (%p2195) target = $region136
      $region135: #{tpu_custom_call.1} parent=5 // pred_region
        %s2198 = ssub.s32 %s42, 2
        // Predicated region
        $region137: #{tpu_custom_call.1} parent=135 // pred_check
          %p2199 = pneg %p485
        $region138: #{tpu_custom_call.1} parent=135 // pred_check_branch
          %2201 = sbr.rel (%p2199) target = $region140
        $region139: #{tpu_custom_call.1} parent=135 // pred_region
          %s2202 = sand.u32 %s470, 1
          %s2203 = scalar_lea.sflag [#allocation4], %s2202
          %s2204 = sand.u32 %s470, 1
          %s2205 = smul.addr %s2204, 16
          %s2206 = scalar_lea.vmem [#allocation13], %s2205
          %2207 = dma.done %s2203, 256
        $region140: #{tpu_custom_call.1} parent=135 // pred_fallthru
          _
        // Predicated region
        $region141: #{tpu_custom_call.1} parent=135 // pred_check
          %p2208 = pneg %p511
        $region142: #{tpu_custom_call.1} parent=135 // pred_check_branch
          %2210 = sbr.rel (%p2208) target = $region144
        $region143: #{tpu_custom_call.1} parent=135 // pred_region
          %s2211 = sand.u32 %s48, 1
          %s2212 = scalar_lea.sflag [#allocation15], %s2211
          %s2213 = sand.u32 %s496, 1
          %s2214 = smul.addr %s2213, 16
          %s2215 = scalar_lea.vmem [#allocation14], %s2214
          %2216 = dma.done %s2212, 256
        $region144: #{tpu_custom_call.1} parent=135 // pred_fallthru
          _
        // Predicated region
        $region145: #{tpu_custom_call.1} parent=135 // pred_check
          %p2217 = pneg %p537
        $region146: #{tpu_custom_call.1} parent=135 // pred_check_branch
          %2219 = sbr.rel (%p2217) target = $region148
        $region147: #{tpu_custom_call.1} parent=135 // pred_region
          %s2220 = sand.u32 %s48, 1
          %s2221 = scalar_lea.sflag [#allocation15], %s2220
          %s2222 = sand.u32 %s522, 1
          %s2223 = smul.addr %s2222, 32
          %s2224 = scalar_lea.vmem [#allocation16], %s2223
          %2225 = dma.done %s2221, 512
        $region148: #{tpu_custom_call.1} parent=135 // pred_fallthru
          _
      $region136: #{tpu_custom_call.1} parent=5 // pred_fallthru
        _
    $region6: #{tpu_custom_call.1} parent=1 // loop_footer
      %s46 = sadd.s32 1, %s42
    $region7: #{tpu_custom_call.1} parent=1 // loop_footer_branch
      %41 = sbr.rel target = $region3
    $region8: #{tpu_custom_call.1} parent=1 // loop_exit
      _
    %2226 = vsyncpa [#allocation3], 1
    %s2227 = scalar_lea.sflag [#allocation3], 1
    %2228 = vsyncpa %s2227, 1
    %2229 = vsyncpa [#allocation6], 1
    %s2230 = scalar_lea.sflag [#allocation6], 1
    %2231 = vsyncpa %s2230, 1
    %2232 = vsyncpa [#allocation9], 1
    %2233 = vsyncpa [#allocation12], 1
    %2234 = vsyncpa [#allocation4], 1
    %s2235 = scalar_lea.sflag [#allocation4], 1
    %2236 = vsyncpa %s2235, 1
    %2237 = vsyncpa [#allocation15], 1
    %s2238 = scalar_lea.sflag [#allocation15], 1
    %2239 = vsyncpa %s2238, 1

</llo_original>
